<compile_context>
chip_gen: v7x
topology: tpu7x:2x2x1
jax: 0.10.0
libtpu: 0.0.40
codegen_flags: <defaults>
</compile_context>

<pallas_src>
import functools

import jax
import jax.numpy as jnp
from jax.experimental import pallas as pl
from jax.experimental.pallas import tpu as pltpu


def _nonlocal_kernel(x_ref, wqkv_ref, ww_ref, o_ref, *, n_seq, ic):
    """One grid step: all (batch, hq) quadrant groups for the wq slice(s) of
    this block.

    x_ref/o_ref: (B*H, WQB, W1, CP) f32, rows ordered (b, hq, h) | wq | w | c.
    wqkv_ref:    (CP, 3*L) bf16 fused theta/phi/g 1x1 convs; biases folded via
                 the constant-1 channel at row C; column 2L+ic is the bias
                 carrier for the output projection.
    ww_ref:      (L, CP) bf16 output 1x1 conv; row `ic` holds its bias.
    """
    bh, wqb, w1, cp = x_ref.shape
    kq = wqkv_ref.shape[1]
    lane = kq // 3
    rows = bh * w1
    groups = rows // n_seq

    for wq in range(wqb):      # static unroll: 1 (wq on the grid) or 2 (1-TC chips)
        # fused theta/phi/g projection: ONE lane-dense MXU matmul, biases included.
        x_bf = x_ref[:, wq:wq + 1, :, :].reshape(rows, cp).astype(jnp.bfloat16)
        proj = jnp.dot(x_bf, wqkv_ref[...],
                       preferred_element_type=jnp.float32)            # (rows, 3L) f32
        proj = proj.reshape(groups, n_seq, kq)
        # 128-aligned slices are free views; cast to bf16 immediately so the
        # f32 projection dies before the attention math.
        theta = proj[:, :, 0 * lane:1 * lane].astype(jnp.bfloat16)    # (g, n, L)
        phi   = proj[:, :, 1 * lane:2 * lane].astype(jnp.bfloat16)
        gval  = proj[:, :, 2 * lane:3 * lane].astype(jnp.bfloat16)    # lane `ic` == 1

        # embedded-gaussian affinity; contraction on the last dims so the
        # transpose folds into the MXU (zero pad lanes contribute nothing).
        f = jnp.einsum('gnk,gmk->gnm', theta, phi,
                       preferred_element_type=jnp.float32)            # (g, n, n)

        # max-stabilised softmax with deferred normalisation.
        f = f - jnp.max(f, axis=-1, keepdims=True)
        e = jnp.exp(f).astype(jnp.bfloat16)

        # aggregate with the unnormalised weights; lane `ic` of the result is
        # sum(e) (gval lane ic == 1), i.e. the softmax denominator for free.
        y = jnp.einsum('gnm,gmk->gnk', e, gval,
                       preferred_element_type=jnp.float32)            # (g, n, L)
        y = y * pl.reciprocal(y[:, :, ic:ic + 1], approx=True)        # lane ic -> ~1

        # output projection (row `ic` of ww carries its bias) + f32 residual;
        # x is re-read from VMEM at point of use to keep live ranges short.
        wy = jnp.dot(y.reshape(rows, lane).astype(jnp.bfloat16), ww_ref[...],
                     preferred_element_type=jnp.float32)              # (rows, CP)
        res = x_ref[:, wq:wq + 1, :, :].reshape(rows, cp)
        o_ref[:, wq:wq + 1, :, :] = (
            (wy + res).reshape(bh, 1, w1, cp).astype(o_ref.dtype))


def _num_wq_grid_blocks():
    """2 parallel grid steps (one per TensorCore) on 2-TC chips (v7x); else 1."""
    try:
        kind = jax.devices()[0].device_kind.lower()
    except Exception:
        return 1
    return 2 if "7" in kind else 1


def prepare_nonlocal_params(params):
    """Fuse the four 1x1 convs (+ all biases) into two lane-padded MXU weights."""
    C, IC = params["w_theta"].shape
    CP = ((C + 1 + 127) // 128) * 128        # +1: constant-1 bias-carrier channel
    L = ((IC + 1 + 127) // 128) * 128        # +1: bias-carrier lane for W
    wq = jnp.zeros((CP, 3 * L), jnp.float32)
    wq = wq.at[:C, 0 * L:0 * L + IC].set(params["w_theta"])
    wq = wq.at[C, 0 * L:0 * L + IC].set(params["b_theta"])
    wq = wq.at[:C, 1 * L:1 * L + IC].set(params["w_phi"])
    wq = wq.at[C, 1 * L:1 * L + IC].set(params["b_phi"])
    wq = wq.at[:C, 2 * L:2 * L + IC].set(params["w_g"])
    wq = wq.at[C, 2 * L:2 * L + IC].set(params["b_g"])
    wq = wq.at[C, 2 * L + IC].set(1.0)       # -> g lane IC == 1 (carries b_w)
    ww = jnp.zeros((L, CP), jnp.float32)
    ww = ww.at[:IC, :C].set(params["w_w"])
    ww = ww.at[IC, :C].set(params["b_w"])
    return wq.astype(jnp.bfloat16), ww.astype(jnp.bfloat16), IC


def nonlocal_rl(x, w_qkv, w_w, *, ic):
    """NonlocalRL forward: non-local attention on each of the 4 quadrants.
    x: (B, C, H, W) float32 (NCHW, like PyTorch). Returns the same shape."""
    B, C, H, W = x.shape
    H1, W1 = H // 2, W // 2
    N = H1 * W1
    CP = w_qkv.shape[0]
    KQ = w_qkv.shape[1]
    L = w_w.shape[0]
    assert C + 1 <= CP and ic + 1 <= L and H % 2 == 0 and W % 2 == 0

    # single NCHW->NHWC permute; the channel pad (constant-1 bias carrier at
    # index C) fuses with it, and the quadrant-layout reshape is free.
    xt = jnp.transpose(x, (0, 2, 3, 1))                               # (B,H,W,C)
    xpad = jnp.concatenate(
        [xt,
         jnp.ones(xt.shape[:-1] + (1,), xt.dtype),
         jnp.zeros(xt.shape[:-1] + (CP - C - 1,), xt.dtype)], axis=-1)
    x4 = xpad.reshape(B * H, 2, W1, CP)        # rows (b, hq, h) | wq | w | c

    num_blocks = _num_wq_grid_blocks()
    wqb = 2 // num_blocks

    # VMEM sanity: v7x default scoped VMEM ~32 MiB (64 MiB physical); v5e/v6e 128 MiB.
    groups, rows = 2 * B, 2 * B * N
    vmem_est = (4 * (B * H) * wqb * W1 * CP * 4      # double-buffered x / out blocks
                + rows * KQ * 4                      # f32 qkv projection
                + groups * N * N * 4                 # dense affinity
                + 4 * rows * L * 2)                  # bf16 theta/phi/g/y temporaries
    assert vmem_est < 24 * 2 ** 20, (
        "TODO(synk): key-tile the affinity with an online softmax (flash-style) "
        "or move the (batch, hq) groups onto the grid for large H, W")

    out4 = pl.pallas_call(
        functools.partial(_nonlocal_kernel, n_seq=N, ic=ic),
        out_shape=jax.ShapeDtypeStruct(x4.shape, x.dtype),
        grid_spec=pltpu.PrefetchScalarGridSpec(
            num_scalar_prefetch=0,
            grid=(num_blocks,),
            in_specs=[
                pl.BlockSpec((B * H, wqb, W1, CP), lambda i: (0, i, 0, 0)),  # x slab
                pl.BlockSpec((CP, KQ), lambda i: (0, 0)),   # fused qkv weight (+biases)
                pl.BlockSpec((L, CP), lambda i: (0, 0)),    # output proj (+bias row)
            ],
            out_specs=pl.BlockSpec((B * H, wqb, W1, CP), lambda i: (0, i, 0, 0)),
        ),
        compiler_params=pltpu.CompilerParams(
            dimension_semantics=("parallel",)),
    )(x4, w_qkv, w_w)

    # inverse: free reshape, drop channel pad, NHWC->NCHW (slice+transpose fuse).
    out = out4.reshape(B, H, W, CP)[:, :, :, :C]
    return jnp.transpose(out, (0, 3, 1, 2))


def init_params(key, C, IC):
    ks = jax.random.split(key, 8)
    s = 0.05
    return dict(
        w_theta=s * jax.random.normal(ks[0], (C, IC), jnp.float32),  # 1x1 conv (Cin, Cout)
        b_theta=s * jax.random.normal(ks[1], (IC,), jnp.float32),
        w_phi=s * jax.random.normal(ks[2], (C, IC), jnp.float32),
        b_phi=s * jax.random.normal(ks[3], (IC,), jnp.float32),
        w_g=s * jax.random.normal(ks[4], (C, IC), jnp.float32),
        b_g=s * jax.random.normal(ks[5], (IC,), jnp.float32),
        # Original module zero-initialises W (identity block); use non-zero
        # values so the computation is exercised (documented deviation).
        w_w=s * jax.random.normal(ks[6], (IC, C), jnp.float32),
        b_w=s * jax.random.normal(ks[7], (C,), jnp.float32),
    )


def _reference(x, params):
    """Pure-JAX f32 reference mirroring the PyTorch forward (independent stitch)."""
    hp = jax.lax.Precision.HIGHEST
    B, C, H, W = x.shape
    H1, W1 = H // 2, W // 2
    N = H1 * W1

    def block(xq):  # xq: (N, C)
        theta = jnp.dot(xq, params["w_theta"], precision=hp) + params["b_theta"]
        phi = jnp.dot(xq, params["w_phi"], precision=hp) + params["b_phi"]
        g = jnp.dot(xq, params["w_g"], precision=hp) + params["b_g"]
        f = jnp.dot(theta, phi.T, precision=hp)
        p = jax.nn.softmax(f, axis=-1)
        y = jnp.dot(p, g, precision=hp)
        wy = jnp.dot(y, params["w_w"], precision=hp) + params["b_w"]
        return wy + xq

    quads = jnp.stack([x[:, :, :H1, :W1], x[:, :, H1:, :W1],
                       x[:, :, :H1, W1:], x[:, :, H1:, W1:]], axis=0)
    xq = quads.reshape(4 * B, C, N).transpose(0, 2, 1)
    out = jax.vmap(block)(xq)
    out = out.transpose(0, 2, 1).reshape(4, B, C, H1, W1)
    top = jnp.concatenate([out[0], out[2]], axis=3)   # lu | ru
    bot = jnp.concatenate([out[1], out[3]], axis=3)   # ld | rd
    return jnp.concatenate([top, bot], axis=2)


if __name__ == "__main__":
    B, C, H, W = 2, 64, 16, 16     # in_feat=64 (module default), 16x16 spatial
    IC = 32                        # inter_feat=32 (NONLocalBlock2D default)

    key = jax.random.PRNGKey(0)
    kx, kp = jax.random.split(key)
    x = jax.random.normal(kx, (B, C, H, W), jnp.float32)
    params = init_params(kp, C, IC)

    w_qkv, w_w, ic = prepare_nonlocal_params(params)
    fwd = jax.jit(functools.partial(nonlocal_rl, ic=ic))
    out = jax.block_until_ready(fwd(x, w_qkv, w_w))
    assert out.shape == (B, C, H, W) and out.dtype == x.dtype

    ref = _reference(x, params)
    assert jnp.allclose(out, ref, rtol=2e-2, atol=2e-2), "mismatch vs reference"

    print("KERNEL_OK")
</pallas_src>

<mosaic_0001>
module attributes {stable_mosaic.version = 11 : i64} {
  func.func @_nonlocal_kernel(%arg0: i32, %arg1: memref<32x2x8x128xf32, #tpu.memory_space<vmem>>, %arg2: memref<128x384xbf16, #tpu.memory_space<vmem>>, %arg3: memref<128x128xbf16, #tpu.memory_space<vmem>>, %arg4: memref<32x2x8x128xf32, #tpu.memory_space<vmem>>) attributes {dimension_semantics = [#tpu.dimension_semantics<parallel>], iteration_bounds = array<i64: 1>, scalar_prefetch = 0 : i64, scratch_operands = 0 : i64, tpu.core_type = #tpu.core_type<tc>, window_params = [{transform_indices = @transform_0, window_bounds = array<i64: 32, 2, 8, 128>}, {pipeline_mode = #tpu.pipeline_mode<synchronous>, transform_indices = @transform_1, window_bounds = array<i64: 128, 384>}, {pipeline_mode = #tpu.pipeline_mode<synchronous>, transform_indices = @transform_2, window_bounds = array<i64: 128, 128>}, {transform_indices = @transform_3, window_bounds = array<i64: 32, 2, 8, 128>}]} {
    %c0 = arith.constant 0 : index
    %c0_0 = arith.constant 0 : index
    %c0_1 = arith.constant 0 : index
    %c0_2 = arith.constant 0 : index
    %0 = vector.load %arg1[%c0, %c0_0, %c0_1, %c0_2] : memref<32x2x8x128xf32, #tpu.memory_space<vmem>>, vector<32x1x8x128xf32>
    %1 = vector.shape_cast %0 : vector<32x1x8x128xf32> to vector<256x128xf32>
    %2 = arith.truncf %1 : vector<256x128xf32> to vector<256x128xbf16>
    %c0_3 = arith.constant 0 : index
    %c0_4 = arith.constant 0 : index
    %3 = vector.load %arg2[%c0_3, %c0_4] : memref<128x384xbf16, #tpu.memory_space<vmem>>, vector<128x384xbf16>
    %cst = arith.constant dense<0.000000e+00> : vector<256x384xf32>
    %4 = tpu.matmul %2, %3, %cst {dimension_numbers = #tpu.dot_dimension_numbers<[1], [0], [0], [1], [0, 0, 1, 1], [], []>} : vector<256x128xbf16>, vector<128x384xbf16>, vector<256x384xf32> -> vector<256x384xf32>
    %5 = vector.shape_cast %4 : vector<256x384xf32> to vector<4x64x384xf32>
    %6 = vector.extract_strided_slice %5 {offsets = [0, 0, 0], sizes = [4, 64, 128], strides = [1, 1, 1]} : vector<4x64x384xf32> to vector<4x64x128xf32>
    %7 = arith.truncf %6 : vector<4x64x128xf32> to vector<4x64x128xbf16>
    %8 = vector.extract_strided_slice %5 {offsets = [0, 0, 128], sizes = [4, 64, 128], strides = [1, 1, 1]} : vector<4x64x384xf32> to vector<4x64x128xf32>
    %9 = arith.truncf %8 : vector<4x64x128xf32> to vector<4x64x128xbf16>
    %10 = vector.extract_strided_slice %5 {offsets = [0, 0, 256], sizes = [4, 64, 128], strides = [1, 1, 1]} : vector<4x64x384xf32> to vector<4x64x128xf32>
    %11 = arith.truncf %10 : vector<4x64x128xf32> to vector<4x64x128xbf16>
    "tpu.trace_start"() <{level = 10 : i32, message = "gnk,gmk->gnm"}> : () -> ()
    %cst_5 = arith.constant dense<0.000000e+00> : vector<4x64x64xf32>
    %12 = tpu.matmul %7, %9, %cst_5 {dimension_numbers = #tpu.dot_dimension_numbers<[2], [2], [1], [1], [0, 0, 0, 1, 1, 1], [0], [0]>} : vector<4x64x128xbf16>, vector<4x64x128xbf16>, vector<4x64x64xf32> -> vector<4x64x64xf32>
    "tpu.trace_stop"() : () -> ()
    %cst_6 = arith.constant dense<0xFF800000> : vector<4x64xf32>
    %13 = vector.multi_reduction <maximumf>, %12, %cst_6 [2] : vector<4x64x64xf32> to vector<4x64xf32>
    %14 = vector.shape_cast %13 : vector<4x64xf32> to vector<4x64x1xf32>
    %15 = vector.broadcast %14 : vector<4x64x1xf32> to vector<4x64x64xf32>
    %16 = arith.subf %12, %15 : vector<4x64x64xf32>
    %17 = math.exp %16 : vector<4x64x64xf32>
    %18 = arith.truncf %17 : vector<4x64x64xf32> to vector<4x64x64xbf16>
    "tpu.trace_start"() <{level = 10 : i32, message = "gnm,gmk->gnk"}> : () -> ()
    %cst_7 = arith.constant dense<0.000000e+00> : vector<4x64x128xf32>
    %19 = tpu.matmul %18, %11, %cst_7 {dimension_numbers = #tpu.dot_dimension_numbers<[2], [1], [1], [2], [0, 0, 0, 1, 1, 2], [0], [0]>} : vector<4x64x64xbf16>, vector<4x64x128xbf16>, vector<4x64x128xf32> -> vector<4x64x128xf32>
    "tpu.trace_stop"() : () -> ()
    %20 = vector.extract_strided_slice %19 {offsets = [0, 0, 32], sizes = [4, 64, 1], strides = [1, 1, 1]} : vector<4x64x128xf32> to vector<4x64x1xf32>
    %21 = tpu.reciprocal %20 {approx = true} : vector<4x64x1xf32> -> vector<4x64x1xf32>
    %22 = vector.broadcast %21 : vector<4x64x1xf32> to vector<4x64x128xf32>
    %23 = arith.mulf %19, %22 : vector<4x64x128xf32>
    %24 = vector.shape_cast %23 : vector<4x64x128xf32> to vector<256x128xf32>
    %25 = arith.truncf %24 : vector<256x128xf32> to vector<256x128xbf16>
    %c0_8 = arith.constant 0 : index
    %c0_9 = arith.constant 0 : index
    %26 = vector.load %arg3[%c0_8, %c0_9] : memref<128x128xbf16, #tpu.memory_space<vmem>>, vector<128x128xbf16>
    %cst_10 = arith.constant dense<0.000000e+00> : vector<256x128xf32>
    %27 = tpu.matmul %25, %26, %cst_10 {dimension_numbers = #tpu.dot_dimension_numbers<[1], [0], [0], [1], [0, 0, 1, 1], [], []>} : vector<256x128xbf16>, vector<128x128xbf16>, vector<256x128xf32> -> vector<256x128xf32>
    %c0_11 = arith.constant 0 : index
    %c0_12 = arith.constant 0 : index
    %c0_13 = arith.constant 0 : index
    %c0_14 = arith.constant 0 : index
    %28 = vector.load %arg1[%c0_11, %c0_12, %c0_13, %c0_14] : memref<32x2x8x128xf32, #tpu.memory_space<vmem>>, vector<32x1x8x128xf32>
    %29 = vector.shape_cast %28 : vector<32x1x8x128xf32> to vector<256x128xf32>
    %30 = arith.addf %27, %29 : vector<256x128xf32>
    %31 = vector.shape_cast %30 : vector<256x128xf32> to vector<32x1x8x128xf32>
    %c0_15 = arith.constant 0 : index
    %c0_16 = arith.constant 0 : index
    %c0_17 = arith.constant 0 : index
    %c0_18 = arith.constant 0 : index
    %32 = vector.load %arg4[%c0_15, %c0_16, %c0_17, %c0_18] : memref<32x2x8x128xf32, #tpu.memory_space<vmem>>, vector<32x1x8x128xf32>
    tpu.vector_store %arg4[%c0_15, %c0_16, %c0_17, %c0_18], %31 {strides = array<i32>} : memref<32x2x8x128xf32, #tpu.memory_space<vmem>>, vector<32x1x8x128xf32>,
    %c0_19 = arith.constant 0 : index
    %c1 = arith.constant 1 : index
    %c0_20 = arith.constant 0 : index
    %c0_21 = arith.constant 0 : index
    %33 = vector.load %arg1[%c0_19, %c1, %c0_20, %c0_21] : memref<32x2x8x128xf32, #tpu.memory_space<vmem>>, vector<32x1x8x128xf32>
    %34 = vector.shape_cast %33 : vector<32x1x8x128xf32> to vector<256x128xf32>
    %35 = arith.truncf %34 : vector<256x128xf32> to vector<256x128xbf16>
    %c0_22 = arith.constant 0 : index
    %c0_23 = arith.constant 0 : index
    %36 = vector.load %arg2[%c0_22, %c0_23] : memref<128x384xbf16, #tpu.memory_space<vmem>>, vector<128x384xbf16>
    %cst_24 = arith.constant dense<0.000000e+00> : vector<256x384xf32>
    %37 = tpu.matmul %35, %36, %cst_24 {dimension_numbers = #tpu.dot_dimension_numbers<[1], [0], [0], [1], [0, 0, 1, 1], [], []>} : vector<256x128xbf16>, vector<128x384xbf16>, vector<256x384xf32> -> vector<256x384xf32>
    %38 = vector.shape_cast %37 : vector<256x384xf32> to vector<4x64x384xf32>
    %39 = vector.extract_strided_slice %38 {offsets = [0, 0, 0], sizes = [4, 64, 128], strides = [1, 1, 1]} : vector<4x64x384xf32> to vector<4x64x128xf32>
    %40 = arith.truncf %39 : vector<4x64x128xf32> to vector<4x64x128xbf16>
    %41 = vector.extract_strided_slice %38 {offsets = [0, 0, 128], sizes = [4, 64, 128], strides = [1, 1, 1]} : vector<4x64x384xf32> to vector<4x64x128xf32>
    %42 = arith.truncf %41 : vector<4x64x128xf32> to vector<4x64x128xbf16>
    %43 = vector.extract_strided_slice %38 {offsets = [0, 0, 256], sizes = [4, 64, 128], strides = [1, 1, 1]} : vector<4x64x384xf32> to vector<4x64x128xf32>
    %44 = arith.truncf %43 : vector<4x64x128xf32> to vector<4x64x128xbf16>
    "tpu.trace_start"() <{level = 10 : i32, message = "gnk,gmk->gnm"}> : () -> ()
    %cst_25 = arith.constant dense<0.000000e+00> : vector<4x64x64xf32>
    %45 = tpu.matmul %40, %42, %cst_25 {dimension_numbers = #tpu.dot_dimension_numbers<[2], [2], [1], [1], [0, 0, 0, 1, 1, 1], [0], [0]>} : vector<4x64x128xbf16>, vector<4x64x128xbf16>, vector<4x64x64xf32> -> vector<4x64x64xf32>
    "tpu.trace_stop"() : () -> ()
    %cst_26 = arith.constant dense<0xFF800000> : vector<4x64xf32>
    %46 = vector.multi_reduction <maximumf>, %45, %cst_26 [2] : vector<4x64x64xf32> to vector<4x64xf32>
    %47 = vector.shape_cast %46 : vector<4x64xf32> to vector<4x64x1xf32>
    %48 = vector.broadcast %47 : vector<4x64x1xf32> to vector<4x64x64xf32>
    %49 = arith.subf %45, %48 : vector<4x64x64xf32>
    %50 = math.exp %49 : vector<4x64x64xf32>
    %51 = arith.truncf %50 : vector<4x64x64xf32> to vector<4x64x64xbf16>
    "tpu.trace_start"() <{level = 10 : i32, message = "gnm,gmk->gnk"}> : () -> ()
    %cst_27 = arith.constant dense<0.000000e+00> : vector<4x64x128xf32>
    %52 = tpu.matmul %51, %44, %cst_27 {dimension_numbers = #tpu.dot_dimension_numbers<[2], [1], [1], [2], [0, 0, 0, 1, 1, 2], [0], [0]>} : vector<4x64x64xbf16>, vector<4x64x128xbf16>, vector<4x64x128xf32> -> vector<4x64x128xf32>
    "tpu.trace_stop"() : () -> ()
    %53 = vector.extract_strided_slice %52 {offsets = [0, 0, 32], sizes = [4, 64, 1], strides = [1, 1, 1]} : vector<4x64x128xf32> to vector<4x64x1xf32>
    %54 = tpu.reciprocal %53 {approx = true} : vector<4x64x1xf32> -> vector<4x64x1xf32>
    %55 = vector.broadcast %54 : vector<4x64x1xf32> to vector<4x64x128xf32>
    %56 = arith.mulf %52, %55 : vector<4x64x128xf32>
    %57 = vector.shape_cast %56 : vector<4x64x128xf32> to vector<256x128xf32>
    %58 = arith.truncf %57 : vector<256x128xf32> to vector<256x128xbf16>
    %c0_28 = arith.constant 0 : index
    %c0_29 = arith.constant 0 : index
    %59 = vector.load %arg3[%c0_28, %c0_29] : memref<128x128xbf16, #tpu.memory_space<vmem>>, vector<128x128xbf16>
    %cst_30 = arith.constant dense<0.000000e+00> : vector<256x128xf32>
    %60 = tpu.matmul %58, %59, %cst_30 {dimension_numbers = #tpu.dot_dimension_numbers<[1], [0], [0], [1], [0, 0, 1, 1], [], []>} : vector<256x128xbf16>, vector<128x128xbf16>, vector<256x128xf32> -> vector<256x128xf32>
    %c0_31 = arith.constant 0 : index
    %c1_32 = arith.constant 1 : index
    %c0_33 = arith.constant 0 : index
    %c0_34 = arith.constant 0 : index
    %61 = vector.load %arg1[%c0_31, %c1_32, %c0_33, %c0_34] : memref<32x2x8x128xf32, #tpu.memory_space<vmem>>, vector<32x1x8x128xf32>
    %62 = vector.shape_cast %61 : vector<32x1x8x128xf32> to vector<256x128xf32>
    %63 = arith.addf %60, %62 : vector<256x128xf32>
    %64 = vector.shape_cast %63 : vector<256x128xf32> to vector<32x1x8x128xf32>
    %c0_35 = arith.constant 0 : index
    %c1_36 = arith.constant 1 : index
    %c0_37 = arith.constant 0 : index
    %c0_38 = arith.constant 0 : index
    %65 = vector.load %arg4[%c0_35, %c1_36, %c0_37, %c0_38] : memref<32x2x8x128xf32, #tpu.memory_space<vmem>>, vector<32x1x8x128xf32>
    tpu.vector_store %arg4[%c0_35, %c1_36, %c0_37, %c0_38], %64 {strides = array<i32>} : memref<32x2x8x128xf32, #tpu.memory_space<vmem>>, vector<32x1x8x128xf32>,
    return
  }
  func.func @transform_0(%arg0: i32) -> (i32, i32, i32, i32) {
    %c0_i32 = arith.constant 0 : i32
    %c0_i32_0 = arith.constant 0 : i32
    %c0_i32_1 = arith.constant 0 : i32
    %c0_i32_2 = arith.constant 0 : i32
    return %c0_i32, %arg0, %c0_i32_0, %c0_i32_1 : i32, i32, i32, i32
  }
  func.func @transform_1(%arg0: i32) -> (i32, i32) {
    %c0_i32 = arith.constant 0 : i32
    %c0_i32_0 = arith.constant 0 : i32
    %c0_i32_1 = arith.constant 0 : i32
    return %c0_i32, %c0_i32_0 : i32, i32
  }
  func.func @transform_2(%arg0: i32) -> (i32, i32) {
    %c0_i32 = arith.constant 0 : i32
    %c0_i32_0 = arith.constant 0 : i32
    %c0_i32_1 = arith.constant 0 : i32
    return %c0_i32, %c0_i32_0 : i32, i32
  }
  func.func @transform_3(%arg0: i32) -> (i32, i32, i32, i32) {
    %c0_i32 = arith.constant 0 : i32
    %c0_i32_0 = arith.constant 0 : i32
    %c0_i32_1 = arith.constant 0 : i32
    %c0_i32_2 = arith.constant 0 : i32
    return %c0_i32, %arg0, %c0_i32_0, %c0_i32_1 : i32, i32, i32, i32
  }
}

</mosaic_0001>

<llo_original>
// kernel: nonlocal_rl.1
$region0: #{nonlocal_rl.1}
  #allocation0 [shape = 'u32[]', space=smem, size = 0x4, offset = 0x4, fixed_abs, tag = 'smem constant byte address 0x4 - core index']
  #allocation1 [shape = 'u32[144,128]{1,0:T(1,128)}', space=vmem, size = 0x12000, scoped, tag = 'internal scratch']
  %s0 = inlined_call_operand.vmem [shape: f32[32,2,8,128], index: 0, kind: input, shape index: {}]
  %s1 = inlined_call_operand.vmem [shape: bf16[128,384], index: 1, kind: input, shape index: {}]
  %s2 = inlined_call_operand.vmem [shape: bf16[128,128], index: 2, kind: input, shape index: {}]
  %s3 = inlined_call_operand.vmem [shape: f32[32,2,8,128], index: 3, kind: output, shape index: {}]
  %s4 = sld [smem:[#allocation0]]
  $region22: #{nonlocal_rl.1} parent=0
    _
  %s6 = ssub.s32 1, %s4
  %s7 = scalar_select 0, %s6, %s4
  // Predicated region
  $region2: #{nonlocal_rl.1} parent=0 // pred_check
    _
  $region3: #{nonlocal_rl.1} parent=0 // pred_check_branch
    %9 = sbr.rel (0) target = $region5
  $region4: #{nonlocal_rl.1} parent=0 // pred_region
    _
  $region5: #{nonlocal_rl.1} parent=0 // pred_fallthru
    _
  // Predicated region
  $region6: #{nonlocal_rl.1} parent=0 // pred_check
    _
  $region7: #{nonlocal_rl.1} parent=0 // pred_check_branch
    %11 = sbr.rel (0) target = $region9
  $region8: #{nonlocal_rl.1} parent=0 // pred_region
    _
  $region9: #{nonlocal_rl.1} parent=0 // pred_fallthru
    _
  // Predicated region
  $region10: #{nonlocal_rl.1} parent=0 // pred_check
    _
  $region11: #{nonlocal_rl.1} parent=0 // pred_check_branch
    %13 = sbr.rel (0) target = $region13
  $region12: #{nonlocal_rl.1} parent=0 // pred_region
    _
  $region13: #{nonlocal_rl.1} parent=0 // pred_fallthru
    _
  %v15 = vld [vmem:[%s0] sm:$0xff]
  %v16 = vld [vmem:[%s0 + $0x10] sm:$0xff]
  %v17 = vld [vmem:[%s0 + $0x20] sm:$0xff]
  %v18 = vld [vmem:[%s0 + $0x30] sm:$0xff]
  %v19 = vld [vmem:[%s0 + $0x40] sm:$0xff]
  %v20 = vld [vmem:[%s0 + $0x50] sm:$0xff]
  %v21 = vld [vmem:[%s0 + $0x60] sm:$0xff]
  %v22 = vld [vmem:[%s0 + $0x70] sm:$0xff]
  %v23 = vld [vmem:[%s0 + $0x80] sm:$0xff]
  %v24 = vld [vmem:[%s0 + $0x90] sm:$0xff]
  %v25 = vld [vmem:[%s0 + $0xa0] sm:$0xff]
  %v26 = vld [vmem:[%s0 + $0xb0] sm:$0xff]
  %v27 = vld [vmem:[%s0 + $0xc0] sm:$0xff]
  %v28 = vld [vmem:[%s0 + $0xd0] sm:$0xff]
  %v29 = vld [vmem:[%s0 + $0xe0] sm:$0xff]
  %v30 = vld [vmem:[%s0 + $0xf0] sm:$0xff]
  %v31 = vld [vmem:[%s0 + $0x100] sm:$0xff]
  %v32 = vld [vmem:[%s0 + $0x110] sm:$0xff]
  %v33 = vld [vmem:[%s0 + $0x120] sm:$0xff]
  %v34 = vld [vmem:[%s0 + $0x130] sm:$0xff]
  %v35 = vld [vmem:[%s0 + $0x140] sm:$0xff]
  %v36 = vld [vmem:[%s0 + $0x150] sm:$0xff]
  %v37 = vld [vmem:[%s0 + $0x160] sm:$0xff]
  %v38 = vld [vmem:[%s0 + $0x170] sm:$0xff]
  %v39 = vld [vmem:[%s0 + $0x180] sm:$0xff]
  %v40 = vld [vmem:[%s0 + $0x190] sm:$0xff]
  %v41 = vld [vmem:[%s0 + $0x1a0] sm:$0xff]
  %v42 = vld [vmem:[%s0 + $0x1b0] sm:$0xff]
  %v43 = vld [vmem:[%s0 + $0x1c0] sm:$0xff]
  %v44 = vld [vmem:[%s0 + $0x1d0] sm:$0xff]
  %v45 = vld [vmem:[%s0 + $0x1e0] sm:$0xff]
  %v46 = vld [vmem:[%s0 + $0x1f0] sm:$0xff]
  %v47 = vpack.c.bf16 %v16, %v15
  %v48 = vpack.c.bf16 %v18, %v17
  %v49 = vpack.c.bf16 %v20, %v19
  %v50 = vpack.c.bf16 %v22, %v21
  %v51 = vpack.c.bf16 %v24, %v23
  %v52 = vpack.c.bf16 %v26, %v25
  %v53 = vpack.c.bf16 %v28, %v27
  %v54 = vpack.c.bf16 %v30, %v29
  %v55 = vpack.c.bf16 %v32, %v31
  %v56 = vpack.c.bf16 %v34, %v33
  %v57 = vpack.c.bf16 %v36, %v35
  %v58 = vpack.c.bf16 %v38, %v37
  %v59 = vpack.c.bf16 %v40, %v39
  %v60 = vpack.c.bf16 %v42, %v41
  %v61 = vpack.c.bf16 %v44, %v43
  %v62 = vpack.c.bf16 %v46, %v45
  %v63 = vld [vmem:[%s1] sm:$0xff]
  %v64 = vld [vmem:[%s1 + $0x8] sm:$0xf]
  %v65 = vld [vmem:[%s1 + $0xc] sm:$0xff]
  %v66 = vld [vmem:[%s1 + $0x14] sm:$0xf]
  %v67 = vld [vmem:[%s1 + $0x18] sm:$0xff]
  %v68 = vld [vmem:[%s1 + $0x20] sm:$0xf]
  %v69 = vld [vmem:[%s1 + $0x24] sm:$0xff]
  %v70 = vld [vmem:[%s1 + $0x2c] sm:$0xf]
  %v71 = vld [vmem:[%s1 + $0x30] sm:$0xff]
  %v72 = vld [vmem:[%s1 + $0x38] sm:$0xf]
  %v73 = vld [vmem:[%s1 + $0x3c] sm:$0xff]
  %v74 = vld [vmem:[%s1 + $0x44] sm:$0xf]
  %v75 = vld [vmem:[%s1 + $0x48] sm:$0xff]
  %v76 = vld [vmem:[%s1 + $0x50] sm:$0xf]
  %v77 = vld [vmem:[%s1 + $0x54] sm:$0xff]
  %v78 = vld [vmem:[%s1 + $0x5c] sm:$0xf]
  %v79 = vld [vmem:[%s1 + $0x60] sm:$0xff]
  %v80 = vld [vmem:[%s1 + $0x68] sm:$0xf]
  %v81 = vld [vmem:[%s1 + $0x6c] sm:$0xff]
  %v82 = vld [vmem:[%s1 + $0x74] sm:$0xf]
  %v83 = vld [vmem:[%s1 + $0x78] sm:$0xff]
  %v84 = vld [vmem:[%s1 + $0x80] sm:$0xf]
  %v85 = vld [vmem:[%s1 + $0x84] sm:$0xff]
  %v86 = vld [vmem:[%s1 + $0x8c] sm:$0xf]
  %v87 = vld [vmem:[%s1 + $0x90] sm:$0xff]
  %v88 = vld [vmem:[%s1 + $0x98] sm:$0xf]
  %v89 = vld [vmem:[%s1 + $0x9c] sm:$0xff]
  %v90 = vld [vmem:[%s1 + $0xa4] sm:$0xf]
  %v91 = vld [vmem:[%s1 + $0xa8] sm:$0xff]
  %v92 = vld [vmem:[%s1 + $0xb0] sm:$0xf]
  %v93 = vld [vmem:[%s1 + $0xb4] sm:$0xff]
  %v94 = vld [vmem:[%s1 + $0xbc] sm:$0xf]
  %v127 = vunpack.c.l.b16 %v63
  %v128 = vunpack.c.h.b16 %v63
  %v129 = vunpack.c.l.b16 %v64
  %v130 = vunpack.c.l.b16 %v65
  %v131 = vunpack.c.h.b16 %v65
  %v132 = vunpack.c.l.b16 %v66
  %v133 = vunpack.c.l.b16 %v67
  %v134 = vunpack.c.h.b16 %v67
  %v135 = vunpack.c.l.b16 %v68
  %v136 = vunpack.c.l.b16 %v69
  %v137 = vunpack.c.h.b16 %v69
  %v138 = vunpack.c.l.b16 %v70
  %v139 = vunpack.c.l.b16 %v71
  %v140 = vunpack.c.h.b16 %v71
  %v141 = vunpack.c.l.b16 %v72
  %v142 = vunpack.c.l.b16 %v73
  %v143 = vunpack.c.h.b16 %v73
  %v144 = vunpack.c.l.b16 %v74
  %v145 = vunpack.c.l.b16 %v75
  %v146 = vunpack.c.h.b16 %v75
  %v147 = vunpack.c.l.b16 %v76
  %v148 = vunpack.c.l.b16 %v77
  %v149 = vunpack.c.h.b16 %v77
  %v150 = vunpack.c.l.b16 %v78
  %v151 = vunpack.c.l.b16 %v79
  %v152 = vunpack.c.h.b16 %v79
  %v153 = vunpack.c.l.b16 %v80
  %v154 = vunpack.c.l.b16 %v81
  %v155 = vunpack.c.h.b16 %v81
  %v156 = vunpack.c.l.b16 %v82
  %v157 = vunpack.c.l.b16 %v83
  %v158 = vunpack.c.h.b16 %v83
  %v159 = vunpack.c.l.b16 %v84
  %v160 = vunpack.c.l.b16 %v85
  %v161 = vunpack.c.h.b16 %v85
  %v162 = vunpack.c.l.b16 %v86
  %v163 = vunpack.c.l.b16 %v87
  %v164 = vunpack.c.h.b16 %v87
  %v165 = vunpack.c.l.b16 %v88
  %v166 = vunpack.c.l.b16 %v89
  %v167 = vunpack.c.h.b16 %v89
  %v168 = vunpack.c.l.b16 %v90
  %v169 = vunpack.c.l.b16 %v91
  %v170 = vunpack.c.h.b16 %v91
  %v171 = vunpack.c.l.b16 %v92
  %v172 = vunpack.c.l.b16 %v93
  %v173 = vunpack.c.h.b16 %v93
  %v174 = vunpack.c.l.b16 %v94
  %v175 = vpack.c.b16 %v130, %v127
  %v176 = vpack.c.b16 %v131, %v128
  %v177 = vpack.c.b16 %v132, %v129
  %v178 = vpack.c.b16 %v136, %v133
  %v179 = vpack.c.b16 %v137, %v134
  %v180 = vpack.c.b16 %v138, %v135
  %v181 = vpack.c.b16 %v142, %v139
  %v182 = vpack.c.b16 %v143, %v140
  %v183 = vpack.c.b16 %v144, %v141
  %v184 = vpack.c.b16 %v148, %v145
  %v185 = vpack.c.b16 %v149, %v146
  %v186 = vpack.c.b16 %v150, %v147
  %v187 = vpack.c.b16 %v154, %v151
  %v188 = vpack.c.b16 %v155, %v152
  %v189 = vpack.c.b16 %v156, %v153
  %v190 = vpack.c.b16 %v160, %v157
  %v191 = vpack.c.b16 %v161, %v158
  %v192 = vpack.c.b16 %v162, %v159
  %v193 = vpack.c.b16 %v166, %v163
  %v194 = vpack.c.b16 %v167, %v164
  %v195 = vpack.c.b16 %v168, %v165
  %v196 = vpack.c.b16 %v172, %v169
  %v197 = vpack.c.b16 %v173, %v170
  %v198 = vpack.c.b16 %v174, %v171
  %223 = vmatprep.subr.bf16.mxu0 %v176
  %224 = vmatpush1.bf16.msra.mxu0 %v175
  %225 = vmatprep.subr.bf16.mxu0 %v179
  %226 = vmatpush1.bf16.msra.mxu0 %v178
  %227 = vmatprep.subr.bf16.mxu0 %v182
  %228 = vmatpush1.bf16.msra.mxu0 %v181
  %229 = vmatprep.subr.bf16.mxu0 %v185
  %230 = vmatpush1.bf16.msra.mxu0 %v184
  %231 = vmatprep.subr.bf16.mxu0 %v188
  %232 = vmatpush1.bf16.msra.mxu0 %v187
  %233 = vmatprep.subr.bf16.mxu0 %v191
  %234 = vmatpush1.bf16.msra.mxu0 %v190
  %235 = vmatprep.subr.bf16.mxu0 %v194
  %236 = vmatpush1.bf16.msra.mxu0 %v193
  %237 = vmatprep.subr.bf16.mxu0 %v197
  %238 = vmatpush1.bf16.msra.mxu0 %v196
  %239 = vmatprep.subr.bf16.mxu0 0
  %240 = vmatpush1.bf16.msra.mxu0 0
  %241 = vmatprep.subr.bf16.mxu0 0
  %242 = vmatpush1.bf16.msra.mxu0 0
  %243 = vmatprep.subr.bf16.mxu0 0
  %244 = vmatpush1.bf16.msra.mxu0 0
  %245 = vmatprep.subr.bf16.mxu0 0
  %246 = vmatpush1.bf16.msra.mxu0 0
  %247 = vmatprep.subr.bf16.mxu0 0
  %248 = vmatpush1.bf16.msra.mxu0 0
  %249 = vmatprep.subr.bf16.mxu0 0
  %250 = vmatpush1.bf16.msra.mxu0 0
  %251 = vmatprep.subr.bf16.mxu0 0
  %252 = vmatpush1.bf16.msra.mxu0 0
  %253 = vmatprep.subr.bf16.mxu0 0
  %254 = vmatpush1.bf16.msra.mxu0 0
  %255 = vmatprep.mubr.bf16.mxu0 0
  %256 = vmatmul.mubr.bf16.gmra.mrb[0].mxu0 %v47
  %v257 = vpop.f32.mrb[0].mxu0
  %v258 = vadd.f32 0.0, %v257
  %v259 = vpop.f32.mrb[0].mxu0
  %v260 = vadd.f32 0.0, %v259
  %v261 = vpop.f32.mrb[0].mxu0
  %v262 = vadd.f32 0.0, %v261
  %v263 = vpop.f32.mrb[0].mxu0
  %v264 = vadd.f32 0.0, %v263
  %265 = vmatprep.mubr.bf16.mxu0 0
  %266 = vmatmul.mubr.bf16.gmra.mrb[0].mxu0 %v48
  %v267 = vpop.f32.mrb[0].mxu0
  %v268 = vadd.f32 0.0, %v267
  %v269 = vpop.f32.mrb[0].mxu0
  %v270 = vadd.f32 0.0, %v269
  %v271 = vpop.f32.mrb[0].mxu0
  %v272 = vadd.f32 0.0, %v271
  %v273 = vpop.f32.mrb[0].mxu0
  %v274 = vadd.f32 0.0, %v273
  %275 = vmatprep.mubr.bf16.mxu0 0
  %276 = vmatmul.mubr.bf16.gmra.mrb[0].mxu0 %v49
  %v277 = vpop.f32.mrb[0].mxu0
  %v278 = vadd.f32 0.0, %v277
  %v279 = vpop.f32.mrb[0].mxu0
  %v280 = vadd.f32 0.0, %v279
  %v281 = vpop.f32.mrb[0].mxu0
  %v282 = vadd.f32 0.0, %v281
  %v283 = vpop.f32.mrb[0].mxu0
  %v284 = vadd.f32 0.0, %v283
  %285 = vmatprep.mubr.bf16.mxu0 0
  %286 = vmatmul.mubr.bf16.gmra.mrb[0].mxu0 %v50
  %v287 = vpop.f32.mrb[0].mxu0
  %v288 = vadd.f32 0.0, %v287
  %v289 = vpop.f32.mrb[0].mxu0
  %v290 = vadd.f32 0.0, %v289
  %v291 = vpop.f32.mrb[0].mxu0
  %v292 = vadd.f32 0.0, %v291
  %v293 = vpop.f32.mrb[0].mxu0
  %v294 = vadd.f32 0.0, %v293
  %295 = vmatprep.mubr.bf16.mxu0 0
  %296 = vmatmul.mubr.bf16.gmra.mrb[0].mxu0 %v51
  %v297 = vpop.f32.mrb[0].mxu0
  %v298 = vadd.f32 0.0, %v297
  %v299 = vpop.f32.mrb[0].mxu0
  %v300 = vadd.f32 0.0, %v299
  %v301 = vpop.f32.mrb[0].mxu0
  %v302 = vadd.f32 0.0, %v301
  %v303 = vpop.f32.mrb[0].mxu0
  %v304 = vadd.f32 0.0, %v303
  %305 = vmatprep.mubr.bf16.mxu0 0
  %306 = vmatmul.mubr.bf16.gmra.mrb[0].mxu0 %v52
  %v307 = vpop.f32.mrb[0].mxu0
  %v308 = vadd.f32 0.0, %v307
  %v309 = vpop.f32.mrb[0].mxu0
  %v310 = vadd.f32 0.0, %v309
  %v311 = vpop.f32.mrb[0].mxu0
  %v312 = vadd.f32 0.0, %v311
  %v313 = vpop.f32.mrb[0].mxu0
  %v314 = vadd.f32 0.0, %v313
  %315 = vmatprep.mubr.bf16.mxu0 0
  %316 = vmatmul.mubr.bf16.gmra.mrb[0].mxu0 %v53
  %v317 = vpop.f32.mrb[0].mxu0
  %v318 = vadd.f32 0.0, %v317
  %v319 = vpop.f32.mrb[0].mxu0
  %v320 = vadd.f32 0.0, %v319
  %v321 = vpop.f32.mrb[0].mxu0
  %v322 = vadd.f32 0.0, %v321
  %v323 = vpop.f32.mrb[0].mxu0
  %v324 = vadd.f32 0.0, %v323
  %325 = vmatprep.mubr.bf16.mxu0 0
  %326 = vmatmul.mubr.bf16.gmra.mrb[0].mxu0 %v54
  %v327 = vpop.f32.mrb[0].mxu0
  %v328 = vadd.f32 0.0, %v327
  %v329 = vpop.f32.mrb[0].mxu0
  %v330 = vadd.f32 0.0, %v329
  %v331 = vpop.f32.mrb[0].mxu0
  %v332 = vadd.f32 0.0, %v331
  %v333 = vpop.f32.mrb[0].mxu0
  %v334 = vadd.f32 0.0, %v333
  %335 = vmatprep.mubr.bf16.mxu0 0
  %336 = vmatmul.mubr.bf16.gmra.mrb[0].mxu0 %v55
  %v337 = vpop.f32.mrb[0].mxu0
  %v338 = vadd.f32 0.0, %v337
  %v339 = vpop.f32.mrb[0].mxu0
  %v340 = vadd.f32 0.0, %v339
  %v341 = vpop.f32.mrb[0].mxu0
  %v342 = vadd.f32 0.0, %v341
  %v343 = vpop.f32.mrb[0].mxu0
  %v344 = vadd.f32 0.0, %v343
  %345 = vmatprep.mubr.bf16.mxu0 0
  %346 = vmatmul.mubr.bf16.gmra.mrb[0].mxu0 %v56
  %v347 = vpop.f32.mrb[0].mxu0
  %v348 = vadd.f32 0.0, %v347
  %v349 = vpop.f32.mrb[0].mxu0
  %v350 = vadd.f32 0.0, %v349
  %v351 = vpop.f32.mrb[0].mxu0
  %v352 = vadd.f32 0.0, %v351
  %v353 = vpop.f32.mrb[0].mxu0
  %v354 = vadd.f32 0.0, %v353
  %355 = vmatprep.mubr.bf16.mxu0 0
  %356 = vmatmul.mubr.bf16.gmra.mrb[0].mxu0 %v57
  %v357 = vpop.f32.mrb[0].mxu0
  %v358 = vadd.f32 0.0, %v357
  %v359 = vpop.f32.mrb[0].mxu0
  %v360 = vadd.f32 0.0, %v359
  %v361 = vpop.f32.mrb[0].mxu0
  %v362 = vadd.f32 0.0, %v361
  %v363 = vpop.f32.mrb[0].mxu0
  %v364 = vadd.f32 0.0, %v363
  %365 = vmatprep.mubr.bf16.mxu0 0
  %366 = vmatmul.mubr.bf16.gmra.mrb[0].mxu0 %v58
  %v367 = vpop.f32.mrb[0].mxu0
  %v368 = vadd.f32 0.0, %v367
  %v369 = vpop.f32.mrb[0].mxu0
  %v370 = vadd.f32 0.0, %v369
  %v371 = vpop.f32.mrb[0].mxu0
  %v372 = vadd.f32 0.0, %v371
  %v373 = vpop.f32.mrb[0].mxu0
  %v374 = vadd.f32 0.0, %v373
  %375 = vmatprep.mubr.bf16.mxu0 0
  %376 = vmatmul.mubr.bf16.gmra.mrb[0].mxu0 %v59
  %v377 = vpop.f32.mrb[0].mxu0
  %v378 = vadd.f32 0.0, %v377
  %v379 = vpop.f32.mrb[0].mxu0
  %v380 = vadd.f32 0.0, %v379
  %v381 = vpop.f32.mrb[0].mxu0
  %v382 = vadd.f32 0.0, %v381
  %v383 = vpop.f32.mrb[0].mxu0
  %v384 = vadd.f32 0.0, %v383
  %385 = vmatprep.mubr.bf16.mxu0 0
  %386 = vmatmul.mubr.bf16.gmra.mrb[0].mxu0 %v60
  %v387 = vpop.f32.mrb[0].mxu0
  %v388 = vadd.f32 0.0, %v387
  %v389 = vpop.f32.mrb[0].mxu0
  %v390 = vadd.f32 0.0, %v389
  %v391 = vpop.f32.mrb[0].mxu0
  %v392 = vadd.f32 0.0, %v391
  %v393 = vpop.f32.mrb[0].mxu0
  %v394 = vadd.f32 0.0, %v393
  %395 = vmatprep.mubr.bf16.mxu0 0
  %396 = vmatmul.mubr.bf16.gmra.mrb[0].mxu0 %v61
  %v397 = vpop.f32.mrb[0].mxu0
  %v398 = vadd.f32 0.0, %v397
  %v399 = vpop.f32.mrb[0].mxu0
  %v400 = vadd.f32 0.0, %v399
  %v401 = vpop.f32.mrb[0].mxu0
  %v402 = vadd.f32 0.0, %v401
  %v403 = vpop.f32.mrb[0].mxu0
  %v404 = vadd.f32 0.0, %v403
  %405 = vmatprep.mubr.bf16.mxu0 0
  %406 = vmatmul.mubr.bf16.gmra.mrb[0].mxu0 %v62
  %v407 = vpop.f32.mrb[0].mxu0
  %v408 = vadd.f32 0.0, %v407
  %v409 = vpop.f32.mrb[0].mxu0
  %v410 = vadd.f32 0.0, %v409
  %v411 = vpop.f32.mrb[0].mxu0
  %v412 = vadd.f32 0.0, %v411
  %v413 = vpop.f32.mrb[0].mxu0
  %v414 = vadd.f32 0.0, %v413
  %415 = vdwg.mxu0
  %416 = vmatprep.subr.bf16.mxu0 0
  %417 = vmatpush1.bf16.msra.mxu0 %v177
  %418 = vmatprep.subr.bf16.mxu0 0
  %419 = vmatpush1.bf16.msra.mxu0 %v180
  %420 = vmatprep.subr.bf16.mxu0 0
  %421 = vmatpush1.bf16.msra.mxu0 %v183
  %422 = vmatprep.subr.bf16.mxu0 0
  %423 = vmatpush1.bf16.msra.mxu0 %v186
  %424 = vmatprep.subr.bf16.mxu0 0
  %425 = vmatpush1.bf16.msra.mxu0 %v189
  %426 = vmatprep.subr.bf16.mxu0 0
  %427 = vmatpush1.bf16.msra.mxu0 %v192
  %428 = vmatprep.subr.bf16.mxu0 0
  %429 = vmatpush1.bf16.msra.mxu0 %v195
  %430 = vmatprep.subr.bf16.mxu0 0
  %431 = vmatpush1.bf16.msra.mxu0 %v198
  %432 = vmatprep.subr.bf16.mxu0 0
  %433 = vmatpush1.bf16.msra.mxu0 0
  %434 = vmatprep.subr.bf16.mxu0 0
  %435 = vmatpush1.bf16.msra.mxu0 0
  %436 = vmatprep.subr.bf16.mxu0 0
  %437 = vmatpush1.bf16.msra.mxu0 0
  %438 = vmatprep.subr.bf16.mxu0 0
  %439 = vmatpush1.bf16.msra.mxu0 0
  %440 = vmatprep.subr.bf16.mxu0 0
  %441 = vmatpush1.bf16.msra.mxu0 0
  %442 = vmatprep.subr.bf16.mxu0 0
  %443 = vmatpush1.bf16.msra.mxu0 0
  %444 = vmatprep.subr.bf16.mxu0 0
  %445 = vmatpush1.bf16.msra.mxu0 0
  %446 = vmatprep.subr.bf16.mxu0 0
  %447 = vmatpush1.bf16.msra.mxu0 0
  %448 = vmatprep.mubr.bf16.mxu0 0
  %449 = vmatmul.mubr.bf16.gmra.mrb[0].mxu0 %v47
  %v450 = vpop.f32.mrb[0].mxu0
  %v451 = vadd.f32 0.0, %v450
  %v452 = vpop.f32.mrb[0].mxu0
  %v453 = vpop.f32.mrb[0].mxu0
  %v454 = vadd.f32 0.0, %v453
  %v455 = vpop.f32.mrb[0].mxu0
  %456 = vmatprep.mubr.bf16.mxu0 0
  %457 = vmatmul.mubr.bf16.gmra.mrb[0].mxu0 %v48
  %v458 = vpop.f32.mrb[0].mxu0
  %v459 = vadd.f32 0.0, %v458
  %v460 = vpop.f32.mrb[0].mxu0
  %v461 = vpop.f32.mrb[0].mxu0
  %v462 = vadd.f32 0.0, %v461
  %v463 = vpop.f32.mrb[0].mxu0
  %464 = vmatprep.mubr.bf16.mxu0 0
  %465 = vmatmul.mubr.bf16.gmra.mrb[0].mxu0 %v49
  %v466 = vpop.f32.mrb[0].mxu0
  %v467 = vadd.f32 0.0, %v466
  %v468 = vpop.f32.mrb[0].mxu0
  %v469 = vpop.f32.mrb[0].mxu0
  %v470 = vadd.f32 0.0, %v469
  %v471 = vpop.f32.mrb[0].mxu0
  %472 = vmatprep.mubr.bf16.mxu0 0
  %473 = vmatmul.mubr.bf16.gmra.mrb[0].mxu0 %v50
  %v474 = vpop.f32.mrb[0].mxu0
  %v475 = vadd.f32 0.0, %v474
  %v476 = vpop.f32.mrb[0].mxu0
  %v477 = vpop.f32.mrb[0].mxu0
  %v478 = vadd.f32 0.0, %v477
  %v479 = vpop.f32.mrb[0].mxu0
  %480 = vmatprep.mubr.bf16.mxu0 0
  %481 = vmatmul.mubr.bf16.gmra.mrb[0].mxu0 %v51
  %v482 = vpop.f32.mrb[0].mxu0
  %v483 = vadd.f32 0.0, %v482
  %v484 = vpop.f32.mrb[0].mxu0
  %v485 = vpop.f32.mrb[0].mxu0
  %v486 = vadd.f32 0.0, %v485
  %v487 = vpop.f32.mrb[0].mxu0
  %488 = vmatprep.mubr.bf16.mxu0 0
  %489 = vmatmul.mubr.bf16.gmra.mrb[0].mxu0 %v52
  %v490 = vpop.f32.mrb[0].mxu0
  %v491 = vadd.f32 0.0, %v490
  %v492 = vpop.f32.mrb[0].mxu0
  %v493 = vpop.f32.mrb[0].mxu0
  %v494 = vadd.f32 0.0, %v493
  %v495 = vpop.f32.mrb[0].mxu0
  %496 = vmatprep.mubr.bf16.mxu0 0
  %497 = vmatmul.mubr.bf16.gmra.mrb[0].mxu0 %v53
  %v498 = vpop.f32.mrb[0].mxu0
  %v499 = vadd.f32 0.0, %v498
  %v500 = vpop.f32.mrb[0].mxu0
  %v501 = vpop.f32.mrb[0].mxu0
  %v502 = vadd.f32 0.0, %v501
  %v503 = vpop.f32.mrb[0].mxu0
  %504 = vmatprep.mubr.bf16.mxu0 0
  %505 = vmatmul.mubr.bf16.gmra.mrb[0].mxu0 %v54
  %v506 = vpop.f32.mrb[0].mxu0
  %v507 = vadd.f32 0.0, %v506
  %v508 = vpop.f32.mrb[0].mxu0
  %v509 = vpop.f32.mrb[0].mxu0
  %v510 = vadd.f32 0.0, %v509
  %v511 = vpop.f32.mrb[0].mxu0
  %512 = vmatprep.mubr.bf16.mxu0 0
  %513 = vmatmul.mubr.bf16.gmra.mrb[0].mxu0 %v55
  %v514 = vpop.f32.mrb[0].mxu0
  %v515 = vadd.f32 0.0, %v514
  %v516 = vpop.f32.mrb[0].mxu0
  %v517 = vpop.f32.mrb[0].mxu0
  %v518 = vadd.f32 0.0, %v517
  %v519 = vpop.f32.mrb[0].mxu0
  %520 = vmatprep.mubr.bf16.mxu0 0
  %521 = vmatmul.mubr.bf16.gmra.mrb[0].mxu0 %v56
  %v522 = vpop.f32.mrb[0].mxu0
  %v523 = vadd.f32 0.0, %v522
  %v524 = vpop.f32.mrb[0].mxu0
  %v525 = vpop.f32.mrb[0].mxu0
  %v526 = vadd.f32 0.0, %v525
  %v527 = vpop.f32.mrb[0].mxu0
  %528 = vmatprep.mubr.bf16.mxu0 0
  %529 = vmatmul.mubr.bf16.gmra.mrb[0].mxu0 %v57
  %v530 = vpop.f32.mrb[0].mxu0
  %v531 = vadd.f32 0.0, %v530
  %v532 = vpop.f32.mrb[0].mxu0
  %v533 = vpop.f32.mrb[0].mxu0
  %v534 = vadd.f32 0.0, %v533
  %v535 = vpop.f32.mrb[0].mxu0
  %536 = vmatprep.mubr.bf16.mxu0 0
  %537 = vmatmul.mubr.bf16.gmra.mrb[0].mxu0 %v58
  %v538 = vpop.f32.mrb[0].mxu0
  %v539 = vadd.f32 0.0, %v538
  %v540 = vpop.f32.mrb[0].mxu0
  %v541 = vpop.f32.mrb[0].mxu0
  %v542 = vadd.f32 0.0, %v541
  %v543 = vpop.f32.mrb[0].mxu0
  %544 = vmatprep.mubr.bf16.mxu0 0
  %545 = vmatmul.mubr.bf16.gmra.mrb[0].mxu0 %v59
  %v546 = vpop.f32.mrb[0].mxu0
  %v547 = vadd.f32 0.0, %v546
  %v548 = vpop.f32.mrb[0].mxu0
  %v549 = vpop.f32.mrb[0].mxu0
  %v550 = vadd.f32 0.0, %v549
  %v551 = vpop.f32.mrb[0].mxu0
  %552 = vmatprep.mubr.bf16.mxu0 0
  %553 = vmatmul.mubr.bf16.gmra.mrb[0].mxu0 %v60
  %v554 = vpop.f32.mrb[0].mxu0
  %v555 = vadd.f32 0.0, %v554
  %v556 = vpop.f32.mrb[0].mxu0
  %v557 = vpop.f32.mrb[0].mxu0
  %v558 = vadd.f32 0.0, %v557
  %v559 = vpop.f32.mrb[0].mxu0
  %560 = vmatprep.mubr.bf16.mxu0 0
  %561 = vmatmul.mubr.bf16.gmra.mrb[0].mxu0 %v61
  %v562 = vpop.f32.mrb[0].mxu0
  %v563 = vadd.f32 0.0, %v562
  %v564 = vpop.f32.mrb[0].mxu0
  %v565 = vpop.f32.mrb[0].mxu0
  %v566 = vadd.f32 0.0, %v565
  %v567 = vpop.f32.mrb[0].mxu0
  %568 = vmatprep.mubr.bf16.mxu0 0
  %569 = vmatmul.mubr.bf16.gmra.mrb[0].mxu0 %v62
  %v570 = vpop.f32.mrb[0].mxu0
  %v571 = vadd.f32 0.0, %v570
  %v572 = vpop.f32.mrb[0].mxu0
  %v573 = vpop.f32.mrb[0].mxu0
  %v574 = vadd.f32 0.0, %v573
  %v575 = vpop.f32.mrb[0].mxu0
  %576 = vdwg.mxu0
  %v577 = vpack.c.bf16 %v262, %v258
  %v578 = vpack.c.bf16 %v272, %v268
  %v579 = vpack.c.bf16 %v282, %v278
  %v580 = vpack.c.bf16 %v292, %v288
  %v581 = vpack.c.bf16 %v302, %v298
  %v582 = vpack.c.bf16 %v312, %v308
  %v583 = vpack.c.bf16 %v322, %v318
  %v584 = vpack.c.bf16 %v332, %v328
  %v585 = vpack.c.bf16 %v342, %v338
  %v586 = vpack.c.bf16 %v352, %v348
  %v587 = vpack.c.bf16 %v362, %v358
  %v588 = vpack.c.bf16 %v372, %v368
  %v589 = vpack.c.bf16 %v382, %v378
  %v590 = vpack.c.bf16 %v392, %v388
  %v591 = vpack.c.bf16 %v402, %v398
  %v592 = vpack.c.bf16 %v412, %v408
  %v593 = vpack.c.bf16 %v264, %v260
  %v594 = vpack.c.bf16 %v274, %v270
  %v595 = vpack.c.bf16 %v284, %v280
  %v596 = vpack.c.bf16 %v294, %v290
  %v597 = vpack.c.bf16 %v304, %v300
  %v598 = vpack.c.bf16 %v314, %v310
  %v599 = vpack.c.bf16 %v324, %v320
  %v600 = vpack.c.bf16 %v334, %v330
  %v601 = vpack.c.bf16 %v344, %v340
  %v602 = vpack.c.bf16 %v354, %v350
  %v603 = vpack.c.bf16 %v364, %v360
  %v604 = vpack.c.bf16 %v374, %v370
  %v605 = vpack.c.bf16 %v384, %v380
  %v606 = vpack.c.bf16 %v394, %v390
  %v607 = vpack.c.bf16 %v404, %v400
  %v608 = vpack.c.bf16 %v414, %v410
  %v609 = vpack.c.bf16 %v454, %v451
  %v610 = vpack.c.bf16 %v462, %v459
  %v611 = vpack.c.bf16 %v470, %v467
  %v612 = vpack.c.bf16 %v478, %v475
  %v613 = vpack.c.bf16 %v486, %v483
  %v614 = vpack.c.bf16 %v494, %v491
  %v615 = vpack.c.bf16 %v502, %v499
  %v616 = vpack.c.bf16 %v510, %v507
  %v617 = vpack.c.bf16 %v518, %v515
  %v618 = vpack.c.bf16 %v526, %v523
  %v619 = vpack.c.bf16 %v534, %v531
  %v620 = vpack.c.bf16 %v542, %v539
  %v621 = vpack.c.bf16 %v550, %v547
  %v622 = vpack.c.bf16 %v558, %v555
  %v623 = vpack.c.bf16 %v566, %v563
  %v624 = vpack.c.bf16 %v574, %v571
  %625 = vmatprep.subr.bf16.mxu0 0
  %626 = vmatpush1.bf16.xpose.msra.mxu0 %v593
  %627 = vmatprep.subr.bf16.mxu0 0
  %628 = vmatpush1.bf16.xpose.msra.mxu0 %v594
  %629 = vmatprep.subr.bf16.mxu0 0
  %630 = vmatpush1.bf16.xpose.msra.mxu0 %v595
  %631 = vmatprep.subr.bf16.mxu0 0
  %632 = vmatpush1.bf16.xpose.msra.mxu0 %v596
  %633 = vmatprep.subr.bf16.mxu0 0
  %634 = vmatpush1.bf16.xpose.msra.mxu0 0
  %635 = vmatprep.subr.bf16.mxu0 0
  %636 = vmatpush1.bf16.xpose.msra.mxu0 0
  %637 = vmatprep.subr.bf16.mxu0 0
  %638 = vmatpush1.bf16.xpose.msra.mxu0 0
  %639 = vmatprep.subr.bf16.mxu0 0
  %640 = vmatpush1.bf16.xpose.msra.mxu0 0
  %641 = vmatprep.subr.bf16.mxu0 0
  %642 = vmatpush1.bf16.xpose.msra.mxu0 0
  %643 = vmatprep.subr.bf16.mxu0 0
  %644 = vmatpush1.bf16.xpose.msra.mxu0 0
  %645 = vmatprep.subr.bf16.mxu0 0
  %646 = vmatpush1.bf16.xpose.msra.mxu0 0
  %647 = vmatprep.subr.bf16.mxu0 0
  %648 = vmatpush1.bf16.xpose.msra.mxu0 0
  %649 = vmatprep.subr.bf16.mxu0 0
  %650 = vmatpush1.bf16.xpose.msra.mxu0 0
  %651 = vmatprep.subr.bf16.mxu0 0
  %652 = vmatpush1.bf16.xpose.msra.mxu0 0
  %653 = vmatprep.subr.bf16.mxu0 0
  %654 = vmatpush1.bf16.xpose.msra.mxu0 0
  %655 = vmatprep.subr.bf16.mxu0 0
  %656 = vmatpush1.bf16.xpose.msra.mxu0 0
  %657 = vmatprep.mubr.bf16.mxu0 0
  %658 = vmatmul.mubr.bf16.gmra.mrb[0].mxu0 %v577
  %v659 = vpop.f32.mrb[0].mxu0
  %v660 = vadd.f32 0.0, %v659
  %v661 = vpop.f32.mrb[0].mxu0
  %v662 = vpop.f32.mrb[0].mxu0
  %v663 = vadd.f32 0.0, %v662
  %v664 = vpop.f32.mrb[0].mxu0
  %665 = vmatprep.mubr.bf16.mxu0 0
  %666 = vmatmul.mubr.bf16.gmra.mrb[0].mxu0 %v578
  %v667 = vpop.f32.mrb[0].mxu0
  %v668 = vadd.f32 0.0, %v667
  %v669 = vpop.f32.mrb[0].mxu0
  %v670 = vpop.f32.mrb[0].mxu0
  %v671 = vadd.f32 0.0, %v670
  %v672 = vpop.f32.mrb[0].mxu0
  %673 = vmatprep.mubr.bf16.mxu0 0
  %674 = vmatmul.mubr.bf16.gmra.mrb[0].mxu0 %v579
  %v675 = vpop.f32.mrb[0].mxu0
  %v676 = vadd.f32 0.0, %v675
  %v677 = vpop.f32.mrb[0].mxu0
  %v678 = vpop.f32.mrb[0].mxu0
  %v679 = vadd.f32 0.0, %v678
  %v680 = vpop.f32.mrb[0].mxu0
  %681 = vmatprep.mubr.bf16.mxu0 0
  %682 = vmatmul.mubr.bf16.gmra.mrb[0].mxu0 %v580
  %v683 = vpop.f32.mrb[0].mxu0
  %v684 = vadd.f32 0.0, %v683
  %v685 = vpop.f32.mrb[0].mxu0
  %v686 = vpop.f32.mrb[0].mxu0
  %v687 = vadd.f32 0.0, %v686
  %v688 = vpop.f32.mrb[0].mxu0
  %689 = vdwg.mxu0
  %690 = vmatprep.subr.bf16.mxu0 0
  %691 = vmatpush1.bf16.xpose.msra.mxu0 %v597
  %692 = vmatprep.subr.bf16.mxu0 0
  %693 = vmatpush1.bf16.xpose.msra.mxu0 %v598
  %694 = vmatprep.subr.bf16.mxu0 0
  %695 = vmatpush1.bf16.xpose.msra.mxu0 %v599
  %696 = vmatprep.subr.bf16.mxu0 0
  %697 = vmatpush1.bf16.xpose.msra.mxu0 %v600
  %698 = vmatprep.subr.bf16.mxu0 0
  %699 = vmatpush1.bf16.xpose.msra.mxu0 0
  %700 = vmatprep.subr.bf16.mxu0 0
  %701 = vmatpush1.bf16.xpose.msra.mxu0 0
  %702 = vmatprep.subr.bf16.mxu0 0
  %703 = vmatpush1.bf16.xpose.msra.mxu0 0
  %704 = vmatprep.subr.bf16.mxu0 0
  %705 = vmatpush1.bf16.xpose.msra.mxu0 0
  %706 = vmatprep.subr.bf16.mxu0 0
  %707 = vmatpush1.bf16.xpose.msra.mxu0 0
  %708 = vmatprep.subr.bf16.mxu0 0
  %709 = vmatpush1.bf16.xpose.msra.mxu0 0
  %710 = vmatprep.subr.bf16.mxu0 0
  %711 = vmatpush1.bf16.xpose.msra.mxu0 0
  %712 = vmatprep.subr.bf16.mxu0 0
  %713 = vmatpush1.bf16.xpose.msra.mxu0 0
  %714 = vmatprep.subr.bf16.mxu0 0
  %715 = vmatpush1.bf16.xpose.msra.mxu0 0
  %716 = vmatprep.subr.bf16.mxu0 0
  %717 = vmatpush1.bf16.xpose.msra.mxu0 0
  %718 = vmatprep.subr.bf16.mxu0 0
  %719 = vmatpush1.bf16.xpose.msra.mxu0 0
  %720 = vmatprep.subr.bf16.mxu0 0
  %721 = vmatpush1.bf16.xpose.msra.mxu0 0
  %722 = vmatprep.mubr.bf16.mxu0 0
  %723 = vmatmul.mubr.bf16.gmra.mrb[0].mxu0 %v581
  %v724 = vpop.f32.mrb[0].mxu0
  %v725 = vadd.f32 0.0, %v724
  %v726 = vpop.f32.mrb[0].mxu0
  %v727 = vpop.f32.mrb[0].mxu0
  %v728 = vadd.f32 0.0, %v727
  %v729 = vpop.f32.mrb[0].mxu0
  %730 = vmatprep.mubr.bf16.mxu0 0
  %731 = vmatmul.mubr.bf16.gmra.mrb[0].mxu0 %v582
  %v732 = vpop.f32.mrb[0].mxu0
  %v733 = vadd.f32 0.0, %v732
  %v734 = vpop.f32.mrb[0].mxu0
  %v735 = vpop.f32.mrb[0].mxu0
  %v736 = vadd.f32 0.0, %v735
  %v737 = vpop.f32.mrb[0].mxu0
  %738 = vmatprep.mubr.bf16.mxu0 0
  %739 = vmatmul.mubr.bf16.gmra.mrb[0].mxu0 %v583
  %v740 = vpop.f32.mrb[0].mxu0
  %v741 = vadd.f32 0.0, %v740
  %v742 = vpop.f32.mrb[0].mxu0
  %v743 = vpop.f32.mrb[0].mxu0
  %v744 = vadd.f32 0.0, %v743
  %v745 = vpop.f32.mrb[0].mxu0
  %746 = vmatprep.mubr.bf16.mxu0 0
  %747 = vmatmul.mubr.bf16.gmra.mrb[0].mxu0 %v584
  %v748 = vpop.f32.mrb[0].mxu0
  %v749 = vadd.f32 0.0, %v748
  %v750 = vpop.f32.mrb[0].mxu0
  %v751 = vpop.f32.mrb[0].mxu0
  %v752 = vadd.f32 0.0, %v751
  %v753 = vpop.f32.mrb[0].mxu0
  %754 = vdwg.mxu0
  %755 = vmatprep.subr.bf16.mxu0 0
  %756 = vmatpush1.bf16.xpose.msra.mxu0 %v601
  %757 = vmatprep.subr.bf16.mxu0 0
  %758 = vmatpush1.bf16.xpose.msra.mxu0 %v602
  %759 = vmatprep.subr.bf16.mxu0 0
  %760 = vmatpush1.bf16.xpose.msra.mxu0 %v603
  %761 = vmatprep.subr.bf16.mxu0 0
  %762 = vmatpush1.bf16.xpose.msra.mxu0 %v604
  %763 = vmatprep.subr.bf16.mxu0 0
  %764 = vmatpush1.bf16.xpose.msra.mxu0 0
  %765 = vmatprep.subr.bf16.mxu0 0
  %766 = vmatpush1.bf16.xpose.msra.mxu0 0
  %767 = vmatprep.subr.bf16.mxu0 0
  %768 = vmatpush1.bf16.xpose.msra.mxu0 0
  %769 = vmatprep.subr.bf16.mxu0 0
  %770 = vmatpush1.bf16.xpose.msra.mxu0 0
  %771 = vmatprep.subr.bf16.mxu0 0
  %772 = vmatpush1.bf16.xpose.msra.mxu0 0
  %773 = vmatprep.subr.bf16.mxu0 0
  %774 = vmatpush1.bf16.xpose.msra.mxu0 0
  %775 = vmatprep.subr.bf16.mxu0 0
  %776 = vmatpush1.bf16.xpose.msra.mxu0 0
  %777 = vmatprep.subr.bf16.mxu0 0
  %778 = vmatpush1.bf16.xpose.msra.mxu0 0
  %779 = vmatprep.subr.bf16.mxu0 0
  %780 = vmatpush1.bf16.xpose.msra.mxu0 0
  %781 = vmatprep.subr.bf16.mxu0 0
  %782 = vmatpush1.bf16.xpose.msra.mxu0 0
  %783 = vmatprep.subr.bf16.mxu0 0
  %784 = vmatpush1.bf16.xpose.msra.mxu0 0
  %785 = vmatprep.subr.bf16.mxu0 0
  %786 = vmatpush1.bf16.xpose.msra.mxu0 0
  %787 = vmatprep.mubr.bf16.mxu0 0
  %788 = vmatmul.mubr.bf16.gmra.mrb[0].mxu0 %v585
  %v789 = vpop.f32.mrb[0].mxu0
  %v790 = vadd.f32 0.0, %v789
  %v791 = vpop.f32.mrb[0].mxu0
  %v792 = vpop.f32.mrb[0].mxu0
  %v793 = vadd.f32 0.0, %v792
  %v794 = vpop.f32.mrb[0].mxu0
  %795 = vmatprep.mubr.bf16.mxu0 0
  %796 = vmatmul.mubr.bf16.gmra.mrb[0].mxu0 %v586
  %v797 = vpop.f32.mrb[0].mxu0
  %v798 = vadd.f32 0.0, %v797
  %v799 = vpop.f32.mrb[0].mxu0
  %v800 = vpop.f32.mrb[0].mxu0
  %v801 = vadd.f32 0.0, %v800
  %v802 = vpop.f32.mrb[0].mxu0
  %803 = vmatprep.mubr.bf16.mxu0 0
  %804 = vmatmul.mubr.bf16.gmra.mrb[0].mxu0 %v587
  %v805 = vpop.f32.mrb[0].mxu0
  %v806 = vadd.f32 0.0, %v805
  %v807 = vpop.f32.mrb[0].mxu0
  %v808 = vpop.f32.mrb[0].mxu0
  %v809 = vadd.f32 0.0, %v808
  %v810 = vpop.f32.mrb[0].mxu0
  %811 = vmatprep.mubr.bf16.mxu0 0
  %812 = vmatmul.mubr.bf16.gmra.mrb[0].mxu0 %v588
  %v813 = vpop.f32.mrb[0].mxu0
  %v814 = vadd.f32 0.0, %v813
  %v815 = vpop.f32.mrb[0].mxu0
  %v816 = vpop.f32.mrb[0].mxu0
  %v817 = vadd.f32 0.0, %v816
  %v818 = vpop.f32.mrb[0].mxu0
  %819 = vdwg.mxu0
  %820 = vmatprep.subr.bf16.mxu0 0
  %821 = vmatpush1.bf16.xpose.msra.mxu0 %v605
  %822 = vmatprep.subr.bf16.mxu0 0
  %823 = vmatpush1.bf16.xpose.msra.mxu0 %v606
  %824 = vmatprep.subr.bf16.mxu0 0
  %825 = vmatpush1.bf16.xpose.msra.mxu0 %v607
  %826 = vmatprep.subr.bf16.mxu0 0
  %827 = vmatpush1.bf16.xpose.msra.mxu0 %v608
  %828 = vmatprep.subr.bf16.mxu0 0
  %829 = vmatpush1.bf16.xpose.msra.mxu0 0
  %830 = vmatprep.subr.bf16.mxu0 0
  %831 = vmatpush1.bf16.xpose.msra.mxu0 0
  %832 = vmatprep.subr.bf16.mxu0 0
  %833 = vmatpush1.bf16.xpose.msra.mxu0 0
  %834 = vmatprep.subr.bf16.mxu0 0
  %835 = vmatpush1.bf16.xpose.msra.mxu0 0
  %836 = vmatprep.subr.bf16.mxu0 0
  %837 = vmatpush1.bf16.xpose.msra.mxu0 0
  %838 = vmatprep.subr.bf16.mxu0 0
  %839 = vmatpush1.bf16.xpose.msra.mxu0 0
  %840 = vmatprep.subr.bf16.mxu0 0
  %841 = vmatpush1.bf16.xpose.msra.mxu0 0
  %842 = vmatprep.subr.bf16.mxu0 0
  %843 = vmatpush1.bf16.xpose.msra.mxu0 0
  %844 = vmatprep.subr.bf16.mxu0 0
  %845 = vmatpush1.bf16.xpose.msra.mxu0 0
  %846 = vmatprep.subr.bf16.mxu0 0
  %847 = vmatpush1.bf16.xpose.msra.mxu0 0
  %848 = vmatprep.subr.bf16.mxu0 0
  %849 = vmatpush1.bf16.xpose.msra.mxu0 0
  %850 = vmatprep.subr.bf16.mxu0 0
  %851 = vmatpush1.bf16.xpose.msra.mxu0 0
  %852 = vmatprep.mubr.bf16.mxu0 0
  %853 = vmatmul.mubr.bf16.gmra.mrb[0].mxu0 %v589
  %v854 = vpop.f32.mrb[0].mxu0
  %v855 = vadd.f32 0.0, %v854
  %v856 = vpop.f32.mrb[0].mxu0
  %v857 = vpop.f32.mrb[0].mxu0
  %v858 = vadd.f32 0.0, %v857
  %v859 = vpop.f32.mrb[0].mxu0
  %860 = vmatprep.mubr.bf16.mxu0 0
  %861 = vmatmul.mubr.bf16.gmra.mrb[0].mxu0 %v590
  %v862 = vpop.f32.mrb[0].mxu0
  %v863 = vadd.f32 0.0, %v862
  %v864 = vpop.f32.mrb[0].mxu0
  %v865 = vpop.f32.mrb[0].mxu0
  %v866 = vadd.f32 0.0, %v865
  %v867 = vpop.f32.mrb[0].mxu0
  %868 = vmatprep.mubr.bf16.mxu0 0
  %869 = vmatmul.mubr.bf16.gmra.mrb[0].mxu0 %v591
  %v870 = vpop.f32.mrb[0].mxu0
  %v871 = vadd.f32 0.0, %v870
  %v872 = vpop.f32.mrb[0].mxu0
  %v873 = vpop.f32.mrb[0].mxu0
  %v874 = vadd.f32 0.0, %v873
  %v875 = vpop.f32.mrb[0].mxu0
  %876 = vmatprep.mubr.bf16.mxu0 0
  %877 = vmatmul.mubr.bf16.gmra.mrb[0].mxu0 %v592
  %v878 = vpop.f32.mrb[0].mxu0
  %v879 = vadd.f32 0.0, %v878
  %v880 = vpop.f32.mrb[0].mxu0
  %v881 = vpop.f32.mrb[0].mxu0
  %v882 = vadd.f32 0.0, %v881
  %v883 = vpop.f32.mrb[0].mxu0
  %884 = vdwg.mxu0
  %vm885 = vcmask 523264
  %v886 = vsel %vm885, %v660, -inf
  %887 = vmax.xlane.f32.xlu0 %v886
  %v888 = vpop.xlane.xlu0 %887
  %v889 = vsel %vm885, %v663, -inf
  %890 = vmax.xlane.f32.xlu0 %v889
  %v891 = vpop.xlane.xlu0 %890
  %v892 = vsel %vm885, %v668, -inf
  %893 = vmax.xlane.f32.xlu0 %v892
  %v894 = vpop.xlane.xlu0 %893
  %v895 = vsel %vm885, %v671, -inf
  %896 = vmax.xlane.f32.xlu0 %v895
  %v897 = vpop.xlane.xlu0 %896
  %v898 = vsel %vm885, %v676, -inf
  %899 = vmax.xlane.f32.xlu0 %v898
  %v900 = vpop.xlane.xlu0 %899
  %v901 = vsel %vm885, %v679, -inf
  %902 = vmax.xlane.f32.xlu0 %v901
  %v903 = vpop.xlane.xlu0 %902
  %v904 = vsel %vm885, %v684, -inf
  %905 = vmax.xlane.f32.xlu0 %v904
  %v906 = vpop.xlane.xlu0 %905
  %v907 = vsel %vm885, %v687, -inf
  %908 = vmax.xlane.f32.xlu0 %v907
  %v909 = vpop.xlane.xlu0 %908
  %v910 = vsel %vm885, %v725, -inf
  %911 = vmax.xlane.f32.xlu0 %v910
  %v912 = vpop.xlane.xlu0 %911
  %v913 = vsel %vm885, %v728, -inf
  %914 = vmax.xlane.f32.xlu0 %v913
  %v915 = vpop.xlane.xlu0 %914
  %v916 = vsel %vm885, %v733, -inf
  %917 = vmax.xlane.f32.xlu0 %v916
  %v918 = vpop.xlane.xlu0 %917
  %v919 = vsel %vm885, %v736, -inf
  %920 = vmax.xlane.f32.xlu0 %v919
  %v921 = vpop.xlane.xlu0 %920
  %v922 = vsel %vm885, %v741, -inf
  %923 = vmax.xlane.f32.xlu0 %v922
  %v924 = vpop.xlane.xlu0 %923
  %v925 = vsel %vm885, %v744, -inf
  %926 = vmax.xlane.f32.xlu0 %v925
  %v927 = vpop.xlane.xlu0 %926
  %v928 = vsel %vm885, %v749, -inf
  %929 = vmax.xlane.f32.xlu0 %v928
  %v930 = vpop.xlane.xlu0 %929
  %v931 = vsel %vm885, %v752, -inf
  %932 = vmax.xlane.f32.xlu0 %v931
  %v933 = vpop.xlane.xlu0 %932
  %v934 = vsel %vm885, %v790, -inf
  %935 = vmax.xlane.f32.xlu0 %v934
  %v936 = vpop.xlane.xlu0 %935
  %v937 = vsel %vm885, %v793, -inf
  %938 = vmax.xlane.f32.xlu0 %v937
  %v939 = vpop.xlane.xlu0 %938
  %v940 = vsel %vm885, %v798, -inf
  %941 = vmax.xlane.f32.xlu0 %v940
  %v942 = vpop.xlane.xlu0 %941
  %v943 = vsel %vm885, %v801, -inf
  %944 = vmax.xlane.f32.xlu0 %v943
  %v945 = vpop.xlane.xlu0 %944
  %v946 = vsel %vm885, %v806, -inf
  %947 = vmax.xlane.f32.xlu0 %v946
  %v948 = vpop.xlane.xlu0 %947
  %v949 = vsel %vm885, %v809, -inf
  %950 = vmax.xlane.f32.xlu0 %v949
  %v951 = vpop.xlane.xlu0 %950
  %v952 = vsel %vm885, %v814, -inf
  %953 = vmax.xlane.f32.xlu0 %v952
  %v954 = vpop.xlane.xlu0 %953
  %v955 = vsel %vm885, %v817, -inf
  %956 = vmax.xlane.f32.xlu0 %v955
  %v957 = vpop.xlane.xlu0 %956
  %v958 = vsel %vm885, %v855, -inf
  %959 = vmax.xlane.f32.xlu0 %v958
  %v960 = vpop.xlane.xlu0 %959
  %v961 = vsel %vm885, %v858, -inf
  %962 = vmax.xlane.f32.xlu0 %v961
  %v963 = vpop.xlane.xlu0 %962
  %v964 = vsel %vm885, %v863, -inf
  %965 = vmax.xlane.f32.xlu0 %v964
  %v966 = vpop.xlane.xlu0 %965
  %v967 = vsel %vm885, %v866, -inf
  %968 = vmax.xlane.f32.xlu0 %v967
  %v969 = vpop.xlane.xlu0 %968
  %v970 = vsel %vm885, %v871, -inf
  %971 = vmax.xlane.f32.xlu0 %v970
  %v972 = vpop.xlane.xlu0 %971
  %v973 = vsel %vm885, %v874, -inf
  %974 = vmax.xlane.f32.xlu0 %v973
  %v975 = vpop.xlane.xlu0 %974
  %v976 = vsel %vm885, %v879, -inf
  %977 = vmax.xlane.f32.xlu0 %v976
  %v978 = vpop.xlane.xlu0 %977
  %v979 = vsel %vm885, %v882, -inf
  %980 = vmax.xlane.f32.xlu0 %v979
  %v981 = vpop.xlane.xlu0 %980
  %v982 = vsub.f32 %v660, %v888
  %v983 = vsub.f32 %v663, %v891
  %v984 = vsub.f32 %v668, %v894
  %v985 = vsub.f32 %v671, %v897
  %v986 = vsub.f32 %v676, %v900
  %v987 = vsub.f32 %v679, %v903
  %v988 = vsub.f32 %v684, %v906
  %v989 = vsub.f32 %v687, %v909
  %v990 = vsub.f32 %v725, %v912
  %v991 = vsub.f32 %v728, %v915
  %v992 = vsub.f32 %v733, %v918
  %v993 = vsub.f32 %v736, %v921
  %v994 = vsub.f32 %v741, %v924
  %v995 = vsub.f32 %v744, %v927
  %v996 = vsub.f32 %v749, %v930
  %v997 = vsub.f32 %v752, %v933
  %v998 = vsub.f32 %v790, %v936
  %v999 = vsub.f32 %v793, %v939
  %v1000 = vsub.f32 %v798, %v942
  %v1001 = vsub.f32 %v801, %v945
  %v1002 = vsub.f32 %v806, %v948
  %v1003 = vsub.f32 %v809, %v951
  %v1004 = vsub.f32 %v814, %v954
  %v1005 = vsub.f32 %v817, %v957
  %v1006 = vsub.f32 %v855, %v960
  %v1007 = vsub.f32 %v858, %v963
  %v1008 = vsub.f32 %v863, %v966
  %v1009 = vsub.f32 %v866, %v969
  %v1010 = vsub.f32 %v871, %v972
  %v1011 = vsub.f32 %v874, %v975
  %v1012 = vsub.f32 %v879, %v978
  %v1013 = vsub.f32 %v882, %v981
  %v1014 = vmul.f32 %v982, 1.442695
  %v1015 = vpow.pop %v1014
  %v1016 = vmul.f32 %v983, 1.442695
  %v1017 = vpow.pop %v1016
  %v1018 = vmul.f32 %v984, 1.442695
  %v1019 = vpow.pop %v1018
  %v1020 = vmul.f32 %v985, 1.442695
  %v1021 = vpow.pop %v1020
  %v1022 = vmul.f32 %v986, 1.442695
  %v1023 = vpow.pop %v1022
  %v1024 = vmul.f32 %v987, 1.442695
  %v1025 = vpow.pop %v1024
  %v1026 = vmul.f32 %v988, 1.442695
  %v1027 = vpow.pop %v1026
  %v1028 = vmul.f32 %v989, 1.442695
  %v1029 = vpow.pop %v1028
  %v1030 = vmul.f32 %v990, 1.442695
  %v1031 = vpow.pop %v1030
  %v1032 = vmul.f32 %v991, 1.442695
  %v1033 = vpow.pop %v1032
  %v1034 = vmul.f32 %v992, 1.442695
  %v1035 = vpow.pop %v1034
  %v1036 = vmul.f32 %v993, 1.442695
  %v1037 = vpow.pop %v1036
  %v1038 = vmul.f32 %v994, 1.442695
  %v1039 = vpow.pop %v1038
  %v1040 = vmul.f32 %v995, 1.442695
  %v1041 = vpow.pop %v1040
  %v1042 = vmul.f32 %v996, 1.442695
  %v1043 = vpow.pop %v1042
  %v1044 = vmul.f32 %v997, 1.442695
  %v1045 = vpow.pop %v1044
  %v1046 = vmul.f32 %v998, 1.442695
  %v1047 = vpow.pop %v1046
  %v1048 = vmul.f32 %v999, 1.442695
  %v1049 = vpow.pop %v1048
  %v1050 = vmul.f32 %v1000, 1.442695
  %v1051 = vpow.pop %v1050
  %v1052 = vmul.f32 %v1001, 1.442695
  %v1053 = vpow.pop %v1052
  %v1054 = vmul.f32 %v1002, 1.442695
  %v1055 = vpow.pop %v1054
  %v1056 = vmul.f32 %v1003, 1.442695
  %v1057 = vpow.pop %v1056
  %v1058 = vmul.f32 %v1004, 1.442695
  %v1059 = vpow.pop %v1058
  %v1060 = vmul.f32 %v1005, 1.442695
  %v1061 = vpow.pop %v1060
  %v1062 = vmul.f32 %v1006, 1.442695
  %v1063 = vpow.pop %v1062
  %v1064 = vmul.f32 %v1007, 1.442695
  %v1065 = vpow.pop %v1064
  %v1066 = vmul.f32 %v1008, 1.442695
  %v1067 = vpow.pop %v1066
  %v1068 = vmul.f32 %v1009, 1.442695
  %v1069 = vpow.pop %v1068
  %v1070 = vmul.f32 %v1010, 1.442695
  %v1071 = vpow.pop %v1070
  %v1072 = vmul.f32 %v1011, 1.442695
  %v1073 = vpow.pop %v1072
  %v1074 = vmul.f32 %v1012, 1.442695
  %v1075 = vpow.pop %v1074
  %v1076 = vmul.f32 %v1013, 1.442695
  %v1077 = vpow.pop %v1076
  %v1078 = vpack.c.bf16 %v1017, %v1015
  %v1079 = vpack.c.bf16 %v1021, %v1019
  %v1080 = vpack.c.bf16 %v1025, %v1023
  %v1081 = vpack.c.bf16 %v1029, %v1027
  %v1082 = vpack.c.bf16 %v1033, %v1031
  %v1083 = vpack.c.bf16 %v1037, %v1035
  %v1084 = vpack.c.bf16 %v1041, %v1039
  %v1085 = vpack.c.bf16 %v1045, %v1043
  %v1086 = vpack.c.bf16 %v1049, %v1047
  %v1087 = vpack.c.bf16 %v1053, %v1051
  %v1088 = vpack.c.bf16 %v1057, %v1055
  %v1089 = vpack.c.bf16 %v1061, %v1059
  %v1090 = vpack.c.bf16 %v1065, %v1063
  %v1091 = vpack.c.bf16 %v1069, %v1067
  %v1092 = vpack.c.bf16 %v1073, %v1071
  %v1093 = vpack.c.bf16 %v1077, %v1075
  %v1095 = vsel %vm885, %v1078, 0
  %v1098 = vsel %vm885, %v1079, 0
  %v1101 = vsel %vm885, %v1080, 0
  %v1104 = vsel %vm885, %v1081, 0
  %1106 = vmatprep.subr.bf16.mxu0 0
  %1107 = vmatpush1.bf16.msra.mxu0 %v609
  %1108 = vmatprep.subr.bf16.mxu0 0
  %1109 = vmatpush1.bf16.msra.mxu0 %v610
  %1110 = vmatprep.subr.bf16.mxu0 0
  %1111 = vmatpush1.bf16.msra.mxu0 %v611
  %1112 = vmatprep.subr.bf16.mxu0 0
  %1113 = vmatpush1.bf16.msra.mxu0 %v612
  %1114 = vmatprep.subr.bf16.mxu0 0
  %1115 = vmatpush1.bf16.msra.mxu0 0
  %1116 = vmatprep.subr.bf16.mxu0 0
  %1117 = vmatpush1.bf16.msra.mxu0 0
  %1118 = vmatprep.subr.bf16.mxu0 0
  %1119 = vmatpush1.bf16.msra.mxu0 0
  %1120 = vmatprep.subr.bf16.mxu0 0
  %1121 = vmatpush1.bf16.msra.mxu0 0
  %1122 = vmatprep.subr.bf16.mxu0 0
  %1123 = vmatpush1.bf16.msra.mxu0 0
  %1124 = vmatprep.subr.bf16.mxu0 0
  %1125 = vmatpush1.bf16.msra.mxu0 0
  %1126 = vmatprep.subr.bf16.mxu0 0
  %1127 = vmatpush1.bf16.msra.mxu0 0
  %1128 = vmatprep.subr.bf16.mxu0 0
  %1129 = vmatpush1.bf16.msra.mxu0 0
  %1130 = vmatprep.subr.bf16.mxu0 0
  %1131 = vmatpush1.bf16.msra.mxu0 0
  %1132 = vmatprep.subr.bf16.mxu0 0
  %1133 = vmatpush1.bf16.msra.mxu0 0
  %1134 = vmatprep.subr.bf16.mxu0 0
  %1135 = vmatpush1.bf16.msra.mxu0 0
  %1136 = vmatprep.subr.bf16.mxu0 0
  %1137 = vmatpush1.bf16.msra.mxu0 0
  %1138 = vmatprep.mubr.bf16.mxu0 0
  %1139 = vmatmul.mubr.bf16.gmra.mrb[0].mxu0 %v1095
  %v1140 = vpop.f32.mrb[0].mxu0
  %v1141 = vadd.f32 0.0, %v1140
  %v1142 = vpop.f32.mrb[0].mxu0
  %v1143 = vpop.f32.mrb[0].mxu0
  %v1144 = vadd.f32 0.0, %v1143
  %v1145 = vpop.f32.mrb[0].mxu0
  %1146 = vmatprep.mubr.bf16.mxu0 0
  %1147 = vmatmul.mubr.bf16.gmra.mrb[0].mxu0 %v1098
  %v1148 = vpop.f32.mrb[0].mxu0
  %v1149 = vadd.f32 0.0, %v1148
  %v1150 = vpop.f32.mrb[0].mxu0
  %v1151 = vpop.f32.mrb[0].mxu0
  %v1152 = vadd.f32 0.0, %v1151
  %v1153 = vpop.f32.mrb[0].mxu0
  %1154 = vmatprep.mubr.bf16.mxu0 0
  %1155 = vmatmul.mubr.bf16.gmra.mrb[0].mxu0 %v1101
  %v1156 = vpop.f32.mrb[0].mxu0
  %v1157 = vadd.f32 0.0, %v1156
  %v1158 = vpop.f32.mrb[0].mxu0
  %v1159 = vpop.f32.mrb[0].mxu0
  %v1160 = vadd.f32 0.0, %v1159
  %v1161 = vpop.f32.mrb[0].mxu0
  %1162 = vmatprep.mubr.bf16.mxu0 0
  %1163 = vmatmul.mubr.bf16.gmra.mrb[0].mxu0 %v1104
  %v1164 = vpop.f32.mrb[0].mxu0
  %v1165 = vadd.f32 0.0, %v1164
  %v1166 = vpop.f32.mrb[0].mxu0
  %v1167 = vpop.f32.mrb[0].mxu0
  %v1168 = vadd.f32 0.0, %v1167
  %v1169 = vpop.f32.mrb[0].mxu0
  %1170 = vdwg.mxu0
  %v1172 = vsel %vm885, %v1082, 0
  %v1175 = vsel %vm885, %v1083, 0
  %v1178 = vsel %vm885, %v1084, 0
  %v1181 = vsel %vm885, %v1085, 0
  %1183 = vmatprep.subr.bf16.mxu0 0
  %1184 = vmatpush1.bf16.msra.mxu0 %v613
  %1185 = vmatprep.subr.bf16.mxu0 0
  %1186 = vmatpush1.bf16.msra.mxu0 %v614
  %1187 = vmatprep.subr.bf16.mxu0 0
  %1188 = vmatpush1.bf16.msra.mxu0 %v615
  %1189 = vmatprep.subr.bf16.mxu0 0
  %1190 = vmatpush1.bf16.msra.mxu0 %v616
  %1191 = vmatprep.subr.bf16.mxu0 0
  %1192 = vmatpush1.bf16.msra.mxu0 0
  %1193 = vmatprep.subr.bf16.mxu0 0
  %1194 = vmatpush1.bf16.msra.mxu0 0
  %1195 = vmatprep.subr.bf16.mxu0 0
  %1196 = vmatpush1.bf16.msra.mxu0 0
  %1197 = vmatprep.subr.bf16.mxu0 0
  %1198 = vmatpush1.bf16.msra.mxu0 0
  %1199 = vmatprep.subr.bf16.mxu0 0
  %1200 = vmatpush1.bf16.msra.mxu0 0
  %1201 = vmatprep.subr.bf16.mxu0 0
  %1202 = vmatpush1.bf16.msra.mxu0 0
  %1203 = vmatprep.subr.bf16.mxu0 0
  %1204 = vmatpush1.bf16.msra.mxu0 0
  %1205 = vmatprep.subr.bf16.mxu0 0
  %1206 = vmatpush1.bf16.msra.mxu0 0
  %1207 = vmatprep.subr.bf16.mxu0 0
  %1208 = vmatpush1.bf16.msra.mxu0 0
  %1209 = vmatprep.subr.bf16.mxu0 0
  %1210 = vmatpush1.bf16.msra.mxu0 0
  %1211 = vmatprep.subr.bf16.mxu0 0
  %1212 = vmatpush1.bf16.msra.mxu0 0
  %1213 = vmatprep.subr.bf16.mxu0 0
  %1214 = vmatpush1.bf16.msra.mxu0 0
  %1215 = vmatprep.mubr.bf16.mxu0 0
  %1216 = vmatmul.mubr.bf16.gmra.mrb[0].mxu0 %v1172
  %v1217 = vpop.f32.mrb[0].mxu0
  %v1218 = vadd.f32 0.0, %v1217
  %v1219 = vpop.f32.mrb[0].mxu0
  %v1220 = vpop.f32.mrb[0].mxu0
  %v1221 = vadd.f32 0.0, %v1220
  %v1222 = vpop.f32.mrb[0].mxu0
  %1223 = vmatprep.mubr.bf16.mxu0 0
  %1224 = vmatmul.mubr.bf16.gmra.mrb[0].mxu0 %v1175
  %v1225 = vpop.f32.mrb[0].mxu0
  %v1226 = vadd.f32 0.0, %v1225
  %v1227 = vpop.f32.mrb[0].mxu0
  %v1228 = vpop.f32.mrb[0].mxu0
  %v1229 = vadd.f32 0.0, %v1228
  %v1230 = vpop.f32.mrb[0].mxu0
  %1231 = vmatprep.mubr.bf16.mxu0 0
  %1232 = vmatmul.mubr.bf16.gmra.mrb[0].mxu0 %v1178
  %v1233 = vpop.f32.mrb[0].mxu0
  %v1234 = vadd.f32 0.0, %v1233
  %v1235 = vpop.f32.mrb[0].mxu0
  %v1236 = vpop.f32.mrb[0].mxu0
  %v1237 = vadd.f32 0.0, %v1236
  %v1238 = vpop.f32.mrb[0].mxu0
  %1239 = vmatprep.mubr.bf16.mxu0 0
  %1240 = vmatmul.mubr.bf16.gmra.mrb[0].mxu0 %v1181
  %v1241 = vpop.f32.mrb[0].mxu0
  %v1242 = vadd.f32 0.0, %v1241
  %v1243 = vpop.f32.mrb[0].mxu0
  %v1244 = vpop.f32.mrb[0].mxu0
  %v1245 = vadd.f32 0.0, %v1244
  %v1246 = vpop.f32.mrb[0].mxu0
  %1247 = vdwg.mxu0
  %v1249 = vsel %vm885, %v1086, 0
  %v1252 = vsel %vm885, %v1087, 0
  %v1255 = vsel %vm885, %v1088, 0
  %v1258 = vsel %vm885, %v1089, 0
  %1260 = vmatprep.subr.bf16.mxu0 0
  %1261 = vmatpush1.bf16.msra.mxu0 %v617
  %1262 = vmatprep.subr.bf16.mxu0 0
  %1263 = vmatpush1.bf16.msra.mxu0 %v618
  %1264 = vmatprep.subr.bf16.mxu0 0
  %1265 = vmatpush1.bf16.msra.mxu0 %v619
  %1266 = vmatprep.subr.bf16.mxu0 0
  %1267 = vmatpush1.bf16.msra.mxu0 %v620
  %1268 = vmatprep.subr.bf16.mxu0 0
  %1269 = vmatpush1.bf16.msra.mxu0 0
  %1270 = vmatprep.subr.bf16.mxu0 0
  %1271 = vmatpush1.bf16.msra.mxu0 0
  %1272 = vmatprep.subr.bf16.mxu0 0
  %1273 = vmatpush1.bf16.msra.mxu0 0
  %1274 = vmatprep.subr.bf16.mxu0 0
  %1275 = vmatpush1.bf16.msra.mxu0 0
  %1276 = vmatprep.subr.bf16.mxu0 0
  %1277 = vmatpush1.bf16.msra.mxu0 0
  %1278 = vmatprep.subr.bf16.mxu0 0
  %1279 = vmatpush1.bf16.msra.mxu0 0
  %1280 = vmatprep.subr.bf16.mxu0 0
  %1281 = vmatpush1.bf16.msra.mxu0 0
  %1282 = vmatprep.subr.bf16.mxu0 0
  %1283 = vmatpush1.bf16.msra.mxu0 0
  %1284 = vmatprep.subr.bf16.mxu0 0
  %1285 = vmatpush1.bf16.msra.mxu0 0
  %1286 = vmatprep.subr.bf16.mxu0 0
  %1287 = vmatpush1.bf16.msra.mxu0 0
  %1288 = vmatprep.subr.bf16.mxu0 0
  %1289 = vmatpush1.bf16.msra.mxu0 0
  %1290 = vmatprep.subr.bf16.mxu0 0
  %1291 = vmatpush1.bf16.msra.mxu0 0
  %1292 = vmatprep.mubr.bf16.mxu0 0
  %1293 = vmatmul.mubr.bf16.gmra.mrb[0].mxu0 %v1249
  %v1294 = vpop.f32.mrb[0].mxu0
  %v1295 = vadd.f32 0.0, %v1294
  %v1296 = vpop.f32.mrb[0].mxu0
  %v1297 = vpop.f32.mrb[0].mxu0
  %v1298 = vadd.f32 0.0, %v1297
  %v1299 = vpop.f32.mrb[0].mxu0
  %1300 = vmatprep.mubr.bf16.mxu0 0
  %1301 = vmatmul.mubr.bf16.gmra.mrb[0].mxu0 %v1252
  %v1302 = vpop.f32.mrb[0].mxu0
  %v1303 = vadd.f32 0.0, %v1302
  %v1304 = vpop.f32.mrb[0].mxu0
  %v1305 = vpop.f32.mrb[0].mxu0
  %v1306 = vadd.f32 0.0, %v1305
  %v1307 = vpop.f32.mrb[0].mxu0
  %1308 = vmatprep.mubr.bf16.mxu0 0
  %1309 = vmatmul.mubr.bf16.gmra.mrb[0].mxu0 %v1255
  %v1310 = vpop.f32.mrb[0].mxu0
  %v1311 = vadd.f32 0.0, %v1310
  %v1312 = vpop.f32.mrb[0].mxu0
  %v1313 = vpop.f32.mrb[0].mxu0
  %v1314 = vadd.f32 0.0, %v1313
  %v1315 = vpop.f32.mrb[0].mxu0
  %1316 = vmatprep.mubr.bf16.mxu0 0
  %1317 = vmatmul.mubr.bf16.gmra.mrb[0].mxu0 %v1258
  %v1318 = vpop.f32.mrb[0].mxu0
  %v1319 = vadd.f32 0.0, %v1318
  %v1320 = vpop.f32.mrb[0].mxu0
  %v1321 = vpop.f32.mrb[0].mxu0
  %v1322 = vadd.f32 0.0, %v1321
  %v1323 = vpop.f32.mrb[0].mxu0
  %1324 = vdwg.mxu0
  %v1326 = vsel %vm885, %v1090, 0
  %v1329 = vsel %vm885, %v1091, 0
  %v1332 = vsel %vm885, %v1092, 0
  %v1335 = vsel %vm885, %v1093, 0
  %1337 = vmatprep.subr.bf16.mxu0 0
  %1338 = vmatpush1.bf16.msra.mxu0 %v621
  %1339 = vmatprep.subr.bf16.mxu0 0
  %1340 = vmatpush1.bf16.msra.mxu0 %v622
  %1341 = vmatprep.subr.bf16.mxu0 0
  %1342 = vmatpush1.bf16.msra.mxu0 %v623
  %1343 = vmatprep.subr.bf16.mxu0 0
  %1344 = vmatpush1.bf16.msra.mxu0 %v624
  %1345 = vmatprep.subr.bf16.mxu0 0
  %1346 = vmatpush1.bf16.msra.mxu0 0
  %1347 = vmatprep.subr.bf16.mxu0 0
  %1348 = vmatpush1.bf16.msra.mxu0 0
  %1349 = vmatprep.subr.bf16.mxu0 0
  %1350 = vmatpush1.bf16.msra.mxu0 0
  %1351 = vmatprep.subr.bf16.mxu0 0
  %1352 = vmatpush1.bf16.msra.mxu0 0
  %1353 = vmatprep.subr.bf16.mxu0 0
  %1354 = vmatpush1.bf16.msra.mxu0 0
  %1355 = vmatprep.subr.bf16.mxu0 0
  %1356 = vmatpush1.bf16.msra.mxu0 0
  %1357 = vmatprep.subr.bf16.mxu0 0
  %1358 = vmatpush1.bf16.msra.mxu0 0
  %1359 = vmatprep.subr.bf16.mxu0 0
  %1360 = vmatpush1.bf16.msra.mxu0 0
  %1361 = vmatprep.subr.bf16.mxu0 0
  %1362 = vmatpush1.bf16.msra.mxu0 0
  %1363 = vmatprep.subr.bf16.mxu0 0
  %1364 = vmatpush1.bf16.msra.mxu0 0
  %1365 = vmatprep.subr.bf16.mxu0 0
  %1366 = vmatpush1.bf16.msra.mxu0 0
  %1367 = vmatprep.subr.bf16.mxu0 0
  %1368 = vmatpush1.bf16.msra.mxu0 0
  %1369 = vmatprep.mubr.bf16.mxu0 0
  %1370 = vmatmul.mubr.bf16.gmra.mrb[0].mxu0 %v1326
  %v1371 = vpop.f32.mrb[0].mxu0
  %v1372 = vadd.f32 0.0, %v1371
  %v1373 = vpop.f32.mrb[0].mxu0
  %v1374 = vpop.f32.mrb[0].mxu0
  %v1375 = vadd.f32 0.0, %v1374
  %v1376 = vpop.f32.mrb[0].mxu0
  %1377 = vmatprep.mubr.bf16.mxu0 0
  %1378 = vmatmul.mubr.bf16.gmra.mrb[0].mxu0 %v1329
  %v1379 = vpop.f32.mrb[0].mxu0
  %v1380 = vadd.f32 0.0, %v1379
  %v1381 = vpop.f32.mrb[0].mxu0
  %v1382 = vpop.f32.mrb[0].mxu0
  %v1383 = vadd.f32 0.0, %v1382
  %v1384 = vpop.f32.mrb[0].mxu0
  %1385 = vmatprep.mubr.bf16.mxu0 0
  %1386 = vmatmul.mubr.bf16.gmra.mrb[0].mxu0 %v1332
  %v1387 = vpop.f32.mrb[0].mxu0
  %v1388 = vadd.f32 0.0, %v1387
  %v1389 = vpop.f32.mrb[0].mxu0
  %v1390 = vpop.f32.mrb[0].mxu0
  %v1391 = vadd.f32 0.0, %v1390
  %v1392 = vpop.f32.mrb[0].mxu0
  %1393 = vmatprep.mubr.bf16.mxu0 0
  %1394 = vmatmul.mubr.bf16.gmra.mrb[0].mxu0 %v1335
  %v1395 = vpop.f32.mrb[0].mxu0
  %v1396 = vadd.f32 0.0, %v1395
  %v1397 = vpop.f32.mrb[0].mxu0
  %v1398 = vpop.f32.mrb[0].mxu0
  %v1399 = vadd.f32 0.0, %v1398
  %v1400 = vpop.f32.mrb[0].mxu0
  %1401 = vdwg.mxu0
  %v1402 = vrcp.pop %v1141
  %v1403 = vrcp.pop %v1144
  %v1404 = vrcp.pop %v1149
  %v1405 = vrcp.pop %v1152
  %v1406 = vrcp.pop %v1157
  %v1407 = vrcp.pop %v1160
  %v1408 = vrcp.pop %v1165
  %v1409 = vrcp.pop %v1168
  %v1410 = vrcp.pop %v1218
  %v1411 = vrcp.pop %v1221
  %v1412 = vrcp.pop %v1226
  %v1413 = vrcp.pop %v1229
  %v1414 = vrcp.pop %v1234
  %v1415 = vrcp.pop %v1237
  %v1416 = vrcp.pop %v1242
  %v1417 = vrcp.pop %v1245
  %v1418 = vrcp.pop %v1295
  %v1419 = vrcp.pop %v1298
  %v1420 = vrcp.pop %v1303
  %v1421 = vrcp.pop %v1306
  %v1422 = vrcp.pop %v1311
  %v1423 = vrcp.pop %v1314
  %v1424 = vrcp.pop %v1319
  %v1425 = vrcp.pop %v1322
  %v1426 = vrcp.pop %v1372
  %v1427 = vrcp.pop %v1375
  %v1428 = vrcp.pop %v1380
  %v1429 = vrcp.pop %v1383
  %v1430 = vrcp.pop %v1388
  %v1431 = vrcp.pop %v1391
  %v1432 = vrcp.pop %v1396
  %v1433 = vrcp.pop %v1399
  %1435 = vset.pattern.permute.xlu0 32
  %1436 = vperm.xlu0 %1435, %v1402
  %v1437 = vpop.permute.xlu0 %1436
  %1440 = vset.pattern.permute.xlu0 32
  %1441 = vperm.xlu0 %1440, %v1403
  %v1442 = vpop.permute.xlu0 %1441
  %1445 = vset.pattern.permute.xlu0 32
  %1446 = vperm.xlu0 %1445, %v1404
  %v1447 = vpop.permute.xlu0 %1446
  %1450 = vset.pattern.permute.xlu0 32
  %1451 = vperm.xlu0 %1450, %v1405
  %v1452 = vpop.permute.xlu0 %1451
  %1455 = vset.pattern.permute.xlu0 32
  %1456 = vperm.xlu0 %1455, %v1406
  %v1457 = vpop.permute.xlu0 %1456
  %1460 = vset.pattern.permute.xlu0 32
  %1461 = vperm.xlu0 %1460, %v1407
  %v1462 = vpop.permute.xlu0 %1461
  %1465 = vset.pattern.permute.xlu0 32
  %1466 = vperm.xlu0 %1465, %v1408
  %v1467 = vpop.permute.xlu0 %1466
  %1470 = vset.pattern.permute.xlu0 32
  %1471 = vperm.xlu0 %1470, %v1409
  %v1472 = vpop.permute.xlu0 %1471
  %1475 = vset.pattern.permute.xlu0 32
  %1476 = vperm.xlu0 %1475, %v1410
  %v1477 = vpop.permute.xlu0 %1476
  %1480 = vset.pattern.permute.xlu0 32
  %1481 = vperm.xlu0 %1480, %v1411
  %v1482 = vpop.permute.xlu0 %1481
  %1485 = vset.pattern.permute.xlu0 32
  %1486 = vperm.xlu0 %1485, %v1412
  %v1487 = vpop.permute.xlu0 %1486
  %1490 = vset.pattern.permute.xlu0 32
  %1491 = vperm.xlu0 %1490, %v1413
  %v1492 = vpop.permute.xlu0 %1491
  %1495 = vset.pattern.permute.xlu0 32
  %1496 = vperm.xlu0 %1495, %v1414
  %v1497 = vpop.permute.xlu0 %1496
  %1500 = vset.pattern.permute.xlu0 32
  %1501 = vperm.xlu0 %1500, %v1415
  %v1502 = vpop.permute.xlu0 %1501
  %1505 = vset.pattern.permute.xlu0 32
  %1506 = vperm.xlu0 %1505, %v1416
  %v1507 = vpop.permute.xlu0 %1506
  %1510 = vset.pattern.permute.xlu0 32
  %1511 = vperm.xlu0 %1510, %v1417
  %v1512 = vpop.permute.xlu0 %1511
  %1515 = vset.pattern.permute.xlu0 32
  %1516 = vperm.xlu0 %1515, %v1418
  %v1517 = vpop.permute.xlu0 %1516
  %1520 = vset.pattern.permute.xlu0 32
  %1521 = vperm.xlu0 %1520, %v1419
  %v1522 = vpop.permute.xlu0 %1521
  %1525 = vset.pattern.permute.xlu0 32
  %1526 = vperm.xlu0 %1525, %v1420
  %v1527 = vpop.permute.xlu0 %1526
  %1530 = vset.pattern.permute.xlu0 32
  %1531 = vperm.xlu0 %1530, %v1421
  %v1532 = vpop.permute.xlu0 %1531
  %1535 = vset.pattern.permute.xlu0 32
  %1536 = vperm.xlu0 %1535, %v1422
  %v1537 = vpop.permute.xlu0 %1536
  %1540 = vset.pattern.permute.xlu0 32
  %1541 = vperm.xlu0 %1540, %v1423
  %v1542 = vpop.permute.xlu0 %1541
  %1545 = vset.pattern.permute.xlu0 32
  %1546 = vperm.xlu0 %1545, %v1424
  %v1547 = vpop.permute.xlu0 %1546
  %1550 = vset.pattern.permute.xlu0 32
  %1551 = vperm.xlu0 %1550, %v1425
  %v1552 = vpop.permute.xlu0 %1551
  %1555 = vset.pattern.permute.xlu0 32
  %1556 = vperm.xlu0 %1555, %v1426
  %v1557 = vpop.permute.xlu0 %1556
  %1560 = vset.pattern.permute.xlu0 32
  %1561 = vperm.xlu0 %1560, %v1427
  %v1562 = vpop.permute.xlu0 %1561
  %1565 = vset.pattern.permute.xlu0 32
  %1566 = vperm.xlu0 %1565, %v1428
  %v1567 = vpop.permute.xlu0 %1566
  %1570 = vset.pattern.permute.xlu0 32
  %1571 = vperm.xlu0 %1570, %v1429
  %v1572 = vpop.permute.xlu0 %1571
  %1575 = vset.pattern.permute.xlu0 32
  %1576 = vperm.xlu0 %1575, %v1430
  %v1577 = vpop.permute.xlu0 %1576
  %1580 = vset.pattern.permute.xlu0 32
  %1581 = vperm.xlu0 %1580, %v1431
  %v1582 = vpop.permute.xlu0 %1581
  %1585 = vset.pattern.permute.xlu0 32
  %1586 = vperm.xlu0 %1585, %v1432
  %v1587 = vpop.permute.xlu0 %1586
  %1590 = vset.pattern.permute.xlu0 32
  %1591 = vperm.xlu0 %1590, %v1433
  %v1592 = vpop.permute.xlu0 %1591
  %v1594 = vmul.f32 %v1141, %v1437
  %v1595 = vmul.f32 %v1144, %v1442
  %v1596 = vmul.f32 %v1149, %v1447
  %v1597 = vmul.f32 %v1152, %v1452
  %v1598 = vmul.f32 %v1157, %v1457
  %v1599 = vmul.f32 %v1160, %v1462
  %v1600 = vmul.f32 %v1165, %v1467
  %v1601 = vmul.f32 %v1168, %v1472
  %v1602 = vmul.f32 %v1218, %v1477
  %v1603 = vmul.f32 %v1221, %v1482
  %v1604 = vmul.f32 %v1226, %v1487
  %v1605 = vmul.f32 %v1229, %v1492
  %v1606 = vmul.f32 %v1234, %v1497
  %v1607 = vmul.f32 %v1237, %v1502
  %v1608 = vmul.f32 %v1242, %v1507
  %v1609 = vmul.f32 %v1245, %v1512
  %v1610 = vmul.f32 %v1295, %v1517
  %v1611 = vmul.f32 %v1298, %v1522
  %v1612 = vmul.f32 %v1303, %v1527
  %v1613 = vmul.f32 %v1306, %v1532
  %v1614 = vmul.f32 %v1311, %v1537
  %v1615 = vmul.f32 %v1314, %v1542
  %v1616 = vmul.f32 %v1319, %v1547
  %v1617 = vmul.f32 %v1322, %v1552
  %v1618 = vmul.f32 %v1372, %v1557
  %v1619 = vmul.f32 %v1375, %v1562
  %v1620 = vmul.f32 %v1380, %v1567
  %v1621 = vmul.f32 %v1383, %v1572
  %v1622 = vmul.f32 %v1388, %v1577
  %v1623 = vmul.f32 %v1391, %v1582
  %v1624 = vmul.f32 %v1396, %v1587
  %v1625 = vmul.f32 %v1399, %v1592
  %v1626 = vpack.c.bf16 %v1595, %v1594
  %v1627 = vpack.c.bf16 %v1597, %v1596
  %v1628 = vpack.c.bf16 %v1599, %v1598
  %v1629 = vpack.c.bf16 %v1601, %v1600
  %v1630 = vpack.c.bf16 %v1603, %v1602
  %v1631 = vpack.c.bf16 %v1605, %v1604
  %v1632 = vpack.c.bf16 %v1607, %v1606
  %v1633 = vpack.c.bf16 %v1609, %v1608
  %v1634 = vpack.c.bf16 %v1611, %v1610
  %v1635 = vpack.c.bf16 %v1613, %v1612
  %v1636 = vpack.c.bf16 %v1615, %v1614
  %v1637 = vpack.c.bf16 %v1617, %v1616
  %v1638 = vpack.c.bf16 %v1619, %v1618
  %v1639 = vpack.c.bf16 %v1621, %v1620
  %v1640 = vpack.c.bf16 %v1623, %v1622
  %v1641 = vpack.c.bf16 %v1625, %v1624
  %v1642 = vld [vmem:[%s2] sm:$0xf]
  %v1643 = vld [vmem:[%s2 + $0x4] sm:$0xf]
  %v1644 = vld [vmem:[%s2 + $0x8] sm:$0xf]
  %v1645 = vld [vmem:[%s2 + $0xc] sm:$0xf]
  %v1646 = vld [vmem:[%s2 + $0x10] sm:$0xf]
  %v1647 = vld [vmem:[%s2 + $0x14] sm:$0xf]
  %v1648 = vld [vmem:[%s2 + $0x18] sm:$0xf]
  %v1649 = vld [vmem:[%s2 + $0x1c] sm:$0xf]
  %v1650 = vld [vmem:[%s2 + $0x20] sm:$0xf]
  %v1651 = vld [vmem:[%s2 + $0x24] sm:$0xf]
  %v1652 = vld [vmem:[%s2 + $0x28] sm:$0xf]
  %v1653 = vld [vmem:[%s2 + $0x2c] sm:$0xf]
  %v1654 = vld [vmem:[%s2 + $0x30] sm:$0xf]
  %v1655 = vld [vmem:[%s2 + $0x34] sm:$0xf]
  %v1656 = vld [vmem:[%s2 + $0x38] sm:$0xf]
  %v1657 = vld [vmem:[%s2 + $0x3c] sm:$0xf]
  %v1658 = vld [vmem:[%s0] sm:$0xff]
  %v1659 = vld [vmem:[%s0 + $0x10] sm:$0xff]
  %v1660 = vld [vmem:[%s0 + $0x20] sm:$0xff]
  %v1661 = vld [vmem:[%s0 + $0x30] sm:$0xff]
  %v1662 = vld [vmem:[%s0 + $0x40] sm:$0xff]
  %v1663 = vld [vmem:[%s0 + $0x50] sm:$0xff]
  %v1664 = vld [vmem:[%s0 + $0x60] sm:$0xff]
  %v1665 = vld [vmem:[%s0 + $0x70] sm:$0xff]
  %v1666 = vld [vmem:[%s0 + $0x80] sm:$0xff]
  %v1667 = vld [vmem:[%s0 + $0x90] sm:$0xff]
  %v1668 = vld [vmem:[%s0 + $0xa0] sm:$0xff]
  %v1669 = vld [vmem:[%s0 + $0xb0] sm:$0xff]
  %v1670 = vld [vmem:[%s0 + $0xc0] sm:$0xff]
  %v1671 = vld [vmem:[%s0 + $0xd0] sm:$0xff]
  %v1672 = vld [vmem:[%s0 + $0xe0] sm:$0xff]
  %v1673 = vld [vmem:[%s0 + $0xf0] sm:$0xff]
  %v1674 = vld [vmem:[%s0 + $0x100] sm:$0xff]
  %v1675 = vld [vmem:[%s0 + $0x110] sm:$0xff]
  %v1676 = vld [vmem:[%s0 + $0x120] sm:$0xff]
  %v1677 = vld [vmem:[%s0 + $0x130] sm:$0xff]
  %v1678 = vld [vmem:[%s0 + $0x140] sm:$0xff]
  %v1679 = vld [vmem:[%s0 + $0x150] sm:$0xff]
  %v1680 = vld [vmem:[%s0 + $0x160] sm:$0xff]
  %v1681 = vld [vmem:[%s0 + $0x170] sm:$0xff]
  %v1682 = vld [vmem:[%s0 + $0x180] sm:$0xff]
  %v1683 = vld [vmem:[%s0 + $0x190] sm:$0xff]
  %v1684 = vld [vmem:[%s0 + $0x1a0] sm:$0xff]
  %v1685 = vld [vmem:[%s0 + $0x1b0] sm:$0xff]
  %v1686 = vld [vmem:[%s0 + $0x1c0] sm:$0xff]
  %v1687 = vld [vmem:[%s0 + $0x1d0] sm:$0xff]
  %v1688 = vld [vmem:[%s0 + $0x1e0] sm:$0xff]
  %v1689 = vld [vmem:[%s0 + $0x1f0] sm:$0xff]
  %v1706 = vunpack.c.l.b16 %v1642
  %v1707 = vunpack.c.l.b16 %v1643
  %v1708 = vunpack.c.l.b16 %v1644
  %v1709 = vunpack.c.l.b16 %v1645
  %v1710 = vunpack.c.l.b16 %v1646
  %v1711 = vunpack.c.l.b16 %v1647
  %v1712 = vunpack.c.l.b16 %v1648
  %v1713 = vunpack.c.l.b16 %v1649
  %v1714 = vunpack.c.l.b16 %v1650
  %v1715 = vunpack.c.l.b16 %v1651
  %v1716 = vunpack.c.l.b16 %v1652
  %v1717 = vunpack.c.l.b16 %v1653
  %v1718 = vunpack.c.l.b16 %v1654
  %v1719 = vunpack.c.l.b16 %v1655
  %v1720 = vunpack.c.l.b16 %v1656
  %v1721 = vunpack.c.l.b16 %v1657
  %v1722 = vpack.c.b16 %v1707, %v1706
  %v1723 = vpack.c.b16 %v1709, %v1708
  %v1724 = vpack.c.b16 %v1711, %v1710
  %v1725 = vpack.c.b16 %v1713, %v1712
  %v1726 = vpack.c.b16 %v1715, %v1714
  %v1727 = vpack.c.b16 %v1717, %v1716
  %v1728 = vpack.c.b16 %v1719, %v1718
  %v1729 = vpack.c.b16 %v1721, %v1720
  %1738 = vmatprep.subr.bf16.mxu0 0
  %1739 = vmatpush1.bf16.msra.mxu0 %v1722
  %1740 = vmatprep.subr.bf16.mxu0 0
  %1741 = vmatpush1.bf16.msra.mxu0 %v1723
  %1742 = vmatprep.subr.bf16.mxu0 0
  %1743 = vmatpush1.bf16.msra.mxu0 %v1724
  %1744 = vmatprep.subr.bf16.mxu0 0
  %1745 = vmatpush1.bf16.msra.mxu0 %v1725
  %1746 = vmatprep.subr.bf16.mxu0 0
  %1747 = vmatpush1.bf16.msra.mxu0 %v1726
  %1748 = vmatprep.subr.bf16.mxu0 0
  %1749 = vmatpush1.bf16.msra.mxu0 %v1727
  %1750 = vmatprep.subr.bf16.mxu0 0
  %1751 = vmatpush1.bf16.msra.mxu0 %v1728
  %1752 = vmatprep.subr.bf16.mxu0 0
  %1753 = vmatpush1.bf16.msra.mxu0 %v1729
  %1754 = vmatprep.subr.bf16.mxu0 0
  %1755 = vmatpush1.bf16.msra.mxu0 0
  %1756 = vmatprep.subr.bf16.mxu0 0
  %1757 = vmatpush1.bf16.msra.mxu0 0
  %1758 = vmatprep.subr.bf16.mxu0 0
  %1759 = vmatpush1.bf16.msra.mxu0 0
  %1760 = vmatprep.subr.bf16.mxu0 0
  %1761 = vmatpush1.bf16.msra.mxu0 0
  %1762 = vmatprep.subr.bf16.mxu0 0
  %1763 = vmatpush1.bf16.msra.mxu0 0
  %1764 = vmatprep.subr.bf16.mxu0 0
  %1765 = vmatpush1.bf16.msra.mxu0 0
  %1766 = vmatprep.subr.bf16.mxu0 0
  %1767 = vmatpush1.bf16.msra.mxu0 0
  %1768 = vmatprep.subr.bf16.mxu0 0
  %1769 = vmatpush1.bf16.msra.mxu0 0
  %1770 = vmatprep.mubr.bf16.mxu0 0
  %1771 = vmatmul.mubr.bf16.gmra.mrb[0].mxu0 %v1626
  %v1772 = vpop.f32.mrb[0].mxu0
  %v1773 = vadd.f32 %v1658, %v1772
  %v1774 = vpop.f32.mrb[0].mxu0
  %v1775 = vpop.f32.mrb[0].mxu0
  %v1776 = vadd.f32 %v1659, %v1775
  %v1777 = vpop.f32.mrb[0].mxu0
  %1778 = vmatprep.mubr.bf16.mxu0 0
  %1779 = vmatmul.mubr.bf16.gmra.mrb[0].mxu0 %v1627
  %v1780 = vpop.f32.mrb[0].mxu0
  %v1781 = vadd.f32 %v1660, %v1780
  %v1782 = vpop.f32.mrb[0].mxu0
  %v1783 = vpop.f32.mrb[0].mxu0
  %v1784 = vadd.f32 %v1661, %v1783
  %v1785 = vpop.f32.mrb[0].mxu0
  %1786 = vmatprep.mubr.bf16.mxu0 0
  %1787 = vmatmul.mubr.bf16.gmra.mrb[0].mxu0 %v1628
  %v1788 = vpop.f32.mrb[0].mxu0
  %v1789 = vadd.f32 %v1662, %v1788
  %v1790 = vpop.f32.mrb[0].mxu0
  %v1791 = vpop.f32.mrb[0].mxu0
  %v1792 = vadd.f32 %v1663, %v1791
  %v1793 = vpop.f32.mrb[0].mxu0
  %1794 = vmatprep.mubr.bf16.mxu0 0
  %1795 = vmatmul.mubr.bf16.gmra.mrb[0].mxu0 %v1629
  %v1796 = vpop.f32.mrb[0].mxu0
  %v1797 = vadd.f32 %v1664, %v1796
  %v1798 = vpop.f32.mrb[0].mxu0
  %v1799 = vpop.f32.mrb[0].mxu0
  %v1800 = vadd.f32 %v1665, %v1799
  %v1801 = vpop.f32.mrb[0].mxu0
  %1802 = vmatprep.mubr.bf16.mxu0 0
  %1803 = vmatmul.mubr.bf16.gmra.mrb[0].mxu0 %v1630
  %v1804 = vpop.f32.mrb[0].mxu0
  %v1805 = vadd.f32 %v1666, %v1804
  %v1806 = vpop.f32.mrb[0].mxu0
  %v1807 = vpop.f32.mrb[0].mxu0
  %v1808 = vadd.f32 %v1667, %v1807
  %v1809 = vpop.f32.mrb[0].mxu0
  %1810 = vmatprep.mubr.bf16.mxu0 0
  %1811 = vmatmul.mubr.bf16.gmra.mrb[0].mxu0 %v1631
  %v1812 = vpop.f32.mrb[0].mxu0
  %v1813 = vadd.f32 %v1668, %v1812
  %v1814 = vpop.f32.mrb[0].mxu0
  %v1815 = vpop.f32.mrb[0].mxu0
  %v1816 = vadd.f32 %v1669, %v1815
  %v1817 = vpop.f32.mrb[0].mxu0
  %1818 = vmatprep.mubr.bf16.mxu0 0
  %1819 = vmatmul.mubr.bf16.gmra.mrb[0].mxu0 %v1632
  %v1820 = vpop.f32.mrb[0].mxu0
  %v1821 = vadd.f32 %v1670, %v1820
  %v1822 = vpop.f32.mrb[0].mxu0
  %v1823 = vpop.f32.mrb[0].mxu0
  %v1824 = vadd.f32 %v1671, %v1823
  %v1825 = vpop.f32.mrb[0].mxu0
  %1826 = vmatprep.mubr.bf16.mxu0 0
  %1827 = vmatmul.mubr.bf16.gmra.mrb[0].mxu0 %v1633
  %v1828 = vpop.f32.mrb[0].mxu0
  %v1829 = vadd.f32 %v1672, %v1828
  %v1830 = vpop.f32.mrb[0].mxu0
  %v1831 = vpop.f32.mrb[0].mxu0
  %v1832 = vadd.f32 %v1673, %v1831
  %v1833 = vpop.f32.mrb[0].mxu0
  %1834 = vmatprep.mubr.bf16.mxu0 0
  %1835 = vmatmul.mubr.bf16.gmra.mrb[0].mxu0 %v1634
  %v1836 = vpop.f32.mrb[0].mxu0
  %v1837 = vadd.f32 %v1674, %v1836
  %v1838 = vpop.f32.mrb[0].mxu0
  %v1839 = vpop.f32.mrb[0].mxu0
  %v1840 = vadd.f32 %v1675, %v1839
  %v1841 = vpop.f32.mrb[0].mxu0
  %1842 = vmatprep.mubr.bf16.mxu0 0
  %1843 = vmatmul.mubr.bf16.gmra.mrb[0].mxu0 %v1635
  %v1844 = vpop.f32.mrb[0].mxu0
  %v1845 = vadd.f32 %v1676, %v1844
  %v1846 = vpop.f32.mrb[0].mxu0
  %v1847 = vpop.f32.mrb[0].mxu0
  %v1848 = vadd.f32 %v1677, %v1847
  %v1849 = vpop.f32.mrb[0].mxu0
  %1850 = vmatprep.mubr.bf16.mxu0 0
  %1851 = vmatmul.mubr.bf16.gmra.mrb[0].mxu0 %v1636
  %v1852 = vpop.f32.mrb[0].mxu0
  %v1853 = vadd.f32 %v1678, %v1852
  %v1854 = vpop.f32.mrb[0].mxu0
  %v1855 = vpop.f32.mrb[0].mxu0
  %v1856 = vadd.f32 %v1679, %v1855
  %v1857 = vpop.f32.mrb[0].mxu0
  %1858 = vmatprep.mubr.bf16.mxu0 0
  %1859 = vmatmul.mubr.bf16.gmra.mrb[0].mxu0 %v1637
  %v1860 = vpop.f32.mrb[0].mxu0
  %v1861 = vadd.f32 %v1680, %v1860
  %v1862 = vpop.f32.mrb[0].mxu0
  %v1863 = vpop.f32.mrb[0].mxu0
  %v1864 = vadd.f32 %v1681, %v1863
  %v1865 = vpop.f32.mrb[0].mxu0
  %1866 = vmatprep.mubr.bf16.mxu0 0
  %1867 = vmatmul.mubr.bf16.gmra.mrb[0].mxu0 %v1638
  %v1868 = vpop.f32.mrb[0].mxu0
  %v1869 = vadd.f32 %v1682, %v1868
  %v1870 = vpop.f32.mrb[0].mxu0
  %v1871 = vpop.f32.mrb[0].mxu0
  %v1872 = vadd.f32 %v1683, %v1871
  %v1873 = vpop.f32.mrb[0].mxu0
  %1874 = vmatprep.mubr.bf16.mxu0 0
  %1875 = vmatmul.mubr.bf16.gmra.mrb[0].mxu0 %v1639
  %v1876 = vpop.f32.mrb[0].mxu0
  %v1877 = vadd.f32 %v1684, %v1876
  %v1878 = vpop.f32.mrb[0].mxu0
  %v1879 = vpop.f32.mrb[0].mxu0
  %v1880 = vadd.f32 %v1685, %v1879
  %v1881 = vpop.f32.mrb[0].mxu0
  %1882 = vmatprep.mubr.bf16.mxu0 0
  %1883 = vmatmul.mubr.bf16.gmra.mrb[0].mxu0 %v1640
  %v1884 = vpop.f32.mrb[0].mxu0
  %v1885 = vadd.f32 %v1686, %v1884
  %v1886 = vpop.f32.mrb[0].mxu0
  %v1887 = vpop.f32.mrb[0].mxu0
  %v1888 = vadd.f32 %v1687, %v1887
  %v1889 = vpop.f32.mrb[0].mxu0
  %1890 = vmatprep.mubr.bf16.mxu0 0
  %1891 = vmatmul.mubr.bf16.gmra.mrb[0].mxu0 %v1641
  %v1892 = vpop.f32.mrb[0].mxu0
  %v1893 = vadd.f32 %v1688, %v1892
  %v1894 = vpop.f32.mrb[0].mxu0
  %v1895 = vpop.f32.mrb[0].mxu0
  %v1896 = vadd.f32 %v1689, %v1895
  %v1897 = vpop.f32.mrb[0].mxu0
  %1898 = vdwg.mxu0
  %1899 = vst [vmem:[%s3] sm:$0xff] %v1773
  %1900 = vst [vmem:[%s3 + $0x10] sm:$0xff] %v1776
  %1901 = vst [vmem:[%s3 + $0x20] sm:$0xff] %v1781
  %1902 = vst [vmem:[%s3 + $0x30] sm:$0xff] %v1784
  %1903 = vst [vmem:[%s3 + $0x40] sm:$0xff] %v1789
  %1904 = vst [vmem:[%s3 + $0x50] sm:$0xff] %v1792
  %1905 = vst [vmem:[%s3 + $0x60] sm:$0xff] %v1797
  %1906 = vst [vmem:[%s3 + $0x70] sm:$0xff] %v1800
  %1907 = vst [vmem:[%s3 + $0x80] sm:$0xff] %v1805
  %1908 = vst [vmem:[%s3 + $0x90] sm:$0xff] %v1808
  %1909 = vst [vmem:[%s3 + $0xa0] sm:$0xff] %v1813
  %1910 = vst [vmem:[%s3 + $0xb0] sm:$0xff] %v1816
  %1911 = vst [vmem:[%s3 + $0xc0] sm:$0xff] %v1821
  %1912 = vst [vmem:[%s3 + $0xd0] sm:$0xff] %v1824
  %1913 = vst [vmem:[%s3 + $0xe0] sm:$0xff] %v1829
  %1914 = vst [vmem:[%s3 + $0xf0] sm:$0xff] %v1832
  %1915 = vst [vmem:[%s3 + $0x100] sm:$0xff] %v1837
  %1916 = vst [vmem:[%s3 + $0x110] sm:$0xff] %v1840
  %1917 = vst [vmem:[%s3 + $0x120] sm:$0xff] %v1845
  %1918 = vst [vmem:[%s3 + $0x130] sm:$0xff] %v1848
  %1919 = vst [vmem:[%s3 + $0x140] sm:$0xff] %v1853
  %1920 = vst [vmem:[%s3 + $0x150] sm:$0xff] %v1856
  %1921 = vst [vmem:[%s3 + $0x160] sm:$0xff] %v1861
  %1922 = vst [vmem:[%s3 + $0x170] sm:$0xff] %v1864
  %1923 = vst [vmem:[%s3 + $0x180] sm:$0xff] %v1869
  %1924 = vst [vmem:[%s3 + $0x190] sm:$0xff] %v1872
  %1925 = vst [vmem:[%s3 + $0x1a0] sm:$0xff] %v1877
  %1926 = vst [vmem:[%s3 + $0x1b0] sm:$0xff] %v1880
  %1927 = vst [vmem:[%s3 + $0x1c0] sm:$0xff] %v1885
  %1928 = vst [vmem:[%s3 + $0x1d0] sm:$0xff] %v1888
  %1929 = vst [vmem:[%s3 + $0x1e0] sm:$0xff] %v1893
  %1930 = vst [vmem:[%s3 + $0x1f0] sm:$0xff] %v1896
  %s1931 = scalar_lea.vmem %s0, 8
  %v1932 = vld [vmem:[%s1931] sm:$0xff]
  %v1933 = vld [vmem:[%s1931 + $0x10] sm:$0xff]
  %v1934 = vld [vmem:[%s1931 + $0x20] sm:$0xff]
  %v1935 = vld [vmem:[%s1931 + $0x30] sm:$0xff]
  %v1936 = vld [vmem:[%s1931 + $0x40] sm:$0xff]
  %v1937 = vld [vmem:[%s1931 + $0x50] sm:$0xff]
  %v1938 = vld [vmem:[%s1931 + $0x60] sm:$0xff]
  %v1939 = vld [vmem:[%s1931 + $0x70] sm:$0xff]
  %v1940 = vld [vmem:[%s1931 + $0x80] sm:$0xff]
  %v1941 = vld [vmem:[%s1931 + $0x90] sm:$0xff]
  %v1942 = vld [vmem:[%s1931 + $0xa0] sm:$0xff]
  %v1943 = vld [vmem:[%s1931 + $0xb0] sm:$0xff]
  %v1944 = vld [vmem:[%s1931 + $0xc0] sm:$0xff]
  %v1945 = vld [vmem:[%s1931 + $0xd0] sm:$0xff]
  %v1946 = vld [vmem:[%s1931 + $0xe0] sm:$0xff]
  %v1947 = vld [vmem:[%s1931 + $0xf0] sm:$0xff]
  %v1948 = vld [vmem:[%s1931 + $0x100] sm:$0xff]
  %v1949 = vld [vmem:[%s1931 + $0x110] sm:$0xff]
  %v1950 = vld [vmem:[%s1931 + $0x120] sm:$0xff]
  %v1951 = vld [vmem:[%s1931 + $0x130] sm:$0xff]
  %v1952 = vld [vmem:[%s1931 + $0x140] sm:$0xff]
  %v1953 = vld [vmem:[%s1931 + $0x150] sm:$0xff]
  %v1954 = vld [vmem:[%s1931 + $0x160] sm:$0xff]
  %v1955 = vld [vmem:[%s1931 + $0x170] sm:$0xff]
  %v1956 = vld [vmem:[%s1931 + $0x180] sm:$0xff]
  %v1957 = vld [vmem:[%s1931 + $0x190] sm:$0xff]
  %v1958 = vld [vmem:[%s1931 + $0x1a0] sm:$0xff]
  %v1959 = vld [vmem:[%s1931 + $0x1b0] sm:$0xff]
  %v1960 = vld [vmem:[%s1931 + $0x1c0] sm:$0xff]
  %v1961 = vld [vmem:[%s1931 + $0x1d0] sm:$0xff]
  %v1962 = vld [vmem:[%s1931 + $0x1e0] sm:$0xff]
  %v1963 = vld [vmem:[%s1931 + $0x1f0] sm:$0xff]
  %v1964 = vpack.c.bf16 %v1933, %v1932
  %v1965 = vpack.c.bf16 %v1935, %v1934
  %v1966 = vpack.c.bf16 %v1937, %v1936
  %v1967 = vpack.c.bf16 %v1939, %v1938
  %v1968 = vpack.c.bf16 %v1941, %v1940
  %v1969 = vpack.c.bf16 %v1943, %v1942
  %v1970 = vpack.c.bf16 %v1945, %v1944
  %v1971 = vpack.c.bf16 %v1947, %v1946
  %v1972 = vpack.c.bf16 %v1949, %v1948
  %v1973 = vpack.c.bf16 %v1951, %v1950
  %v1974 = vpack.c.bf16 %v1953, %v1952
  %v1975 = vpack.c.bf16 %v1955, %v1954
  %v1976 = vpack.c.bf16 %v1957, %v1956
  %v1977 = vpack.c.bf16 %v1959, %v1958
  %v1978 = vpack.c.bf16 %v1961, %v1960
  %v1979 = vpack.c.bf16 %v1963, %v1962
  %v1980 = vld [vmem:[%s1] sm:$0xff]
  %v1981 = vld [vmem:[%s1 + $0x8] sm:$0xf]
  %v1982 = vld [vmem:[%s1 + $0xc] sm:$0xff]
  %v1983 = vld [vmem:[%s1 + $0x14] sm:$0xf]
  %v1984 = vld [vmem:[%s1 + $0x18] sm:$0xff]
  %v1985 = vld [vmem:[%s1 + $0x20] sm:$0xf]
  %v1986 = vld [vmem:[%s1 + $0x24] sm:$0xff]
  %v1987 = vld [vmem:[%s1 + $0x2c] sm:$0xf]
  %v1988 = vld [vmem:[%s1 + $0x30] sm:$0xff]
  %v1989 = vld [vmem:[%s1 + $0x38] sm:$0xf]
  %v1990 = vld [vmem:[%s1 + $0x3c] sm:$0xff]
  %v1991 = vld [vmem:[%s1 + $0x44] sm:$0xf]
  %v1992 = vld [vmem:[%s1 + $0x48] sm:$0xff]
  %v1993 = vld [vmem:[%s1 + $0x50] sm:$0xf]
  %v1994 = vld [vmem:[%s1 + $0x54] sm:$0xff]
  %v1995 = vld [vmem:[%s1 + $0x5c] sm:$0xf]
  %v1996 = vld [vmem:[%s1 + $0x60] sm:$0xff]
  %v1997 = vld [vmem:[%s1 + $0x68] sm:$0xf]
  %v1998 = vld [vmem:[%s1 + $0x6c] sm:$0xff]
  %v1999 = vld [vmem:[%s1 + $0x74] sm:$0xf]
  %v2000 = vld [vmem:[%s1 + $0x78] sm:$0xff]
  %v2001 = vld [vmem:[%s1 + $0x80] sm:$0xf]
  %v2002 = vld [vmem:[%s1 + $0x84] sm:$0xff]
  %v2003 = vld [vmem:[%s1 + $0x8c] sm:$0xf]
  %v2004 = vld [vmem:[%s1 + $0x90] sm:$0xff]
  %v2005 = vld [vmem:[%s1 + $0x98] sm:$0xf]
  %v2006 = vld [vmem:[%s1 + $0x9c] sm:$0xff]
  %v2007 = vld [vmem:[%s1 + $0xa4] sm:$0xf]
  %v2008 = vld [vmem:[%s1 + $0xa8] sm:$0xff]
  %v2009 = vld [vmem:[%s1 + $0xb0] sm:$0xf]
  %v2010 = vld [vmem:[%s1 + $0xb4] sm:$0xff]
  %v2011 = vld [vmem:[%s1 + $0xbc] sm:$0xf]
  %v2044 = vunpack.c.l.b16 %v1980
  %v2045 = vunpack.c.h.b16 %v1980
  %v2046 = vunpack.c.l.b16 %v1981
  %v2047 = vunpack.c.l.b16 %v1982
  %v2048 = vunpack.c.h.b16 %v1982
  %v2049 = vunpack.c.l.b16 %v1983
  %v2050 = vunpack.c.l.b16 %v1984
  %v2051 = vunpack.c.h.b16 %v1984
  %v2052 = vunpack.c.l.b16 %v1985
  %v2053 = vunpack.c.l.b16 %v1986
  %v2054 = vunpack.c.h.b16 %v1986
  %v2055 = vunpack.c.l.b16 %v1987
  %v2056 = vunpack.c.l.b16 %v1988
  %v2057 = vunpack.c.h.b16 %v1988
  %v2058 = vunpack.c.l.b16 %v1989
  %v2059 = vunpack.c.l.b16 %v1990
  %v2060 = vunpack.c.h.b16 %v1990
  %v2061 = vunpack.c.l.b16 %v1991
  %v2062 = vunpack.c.l.b16 %v1992
  %v2063 = vunpack.c.h.b16 %v1992
  %v2064 = vunpack.c.l.b16 %v1993
  %v2065 = vunpack.c.l.b16 %v1994
  %v2066 = vunpack.c.h.b16 %v1994
  %v2067 = vunpack.c.l.b16 %v1995
  %v2068 = vunpack.c.l.b16 %v1996
  %v2069 = vunpack.c.h.b16 %v1996
  %v2070 = vunpack.c.l.b16 %v1997
  %v2071 = vunpack.c.l.b16 %v1998
  %v2072 = vunpack.c.h.b16 %v1998
  %v2073 = vunpack.c.l.b16 %v1999
  %v2074 = vunpack.c.l.b16 %v2000
  %v2075 = vunpack.c.h.b16 %v2000
  %v2076 = vunpack.c.l.b16 %v2001
  %v2077 = vunpack.c.l.b16 %v2002
  %v2078 = vunpack.c.h.b16 %v2002
  %v2079 = vunpack.c.l.b16 %v2003
  %v2080 = vunpack.c.l.b16 %v2004
  %v2081 = vunpack.c.h.b16 %v2004
  %v2082 = vunpack.c.l.b16 %v2005
  %v2083 = vunpack.c.l.b16 %v2006
  %v2084 = vunpack.c.h.b16 %v2006
  %v2085 = vunpack.c.l.b16 %v2007
  %v2086 = vunpack.c.l.b16 %v2008
  %v2087 = vunpack.c.h.b16 %v2008
  %v2088 = vunpack.c.l.b16 %v2009
  %v2089 = vunpack.c.l.b16 %v2010
  %v2090 = vunpack.c.h.b16 %v2010
  %v2091 = vunpack.c.l.b16 %v2011
  %v2092 = vpack.c.b16 %v2047, %v2044
  %v2093 = vpack.c.b16 %v2048, %v2045
  %v2094 = vpack.c.b16 %v2049, %v2046
  %v2095 = vpack.c.b16 %v2053, %v2050
  %v2096 = vpack.c.b16 %v2054, %v2051
  %v2097 = vpack.c.b16 %v2055, %v2052
  %v2098 = vpack.c.b16 %v2059, %v2056
  %v2099 = vpack.c.b16 %v2060, %v2057
  %v2100 = vpack.c.b16 %v2061, %v2058
  %v2101 = vpack.c.b16 %v2065, %v2062
  %v2102 = vpack.c.b16 %v2066, %v2063
  %v2103 = vpack.c.b16 %v2067, %v2064
  %v2104 = vpack.c.b16 %v2071, %v2068
  %v2105 = vpack.c.b16 %v2072, %v2069
  %v2106 = vpack.c.b16 %v2073, %v2070
  %v2107 = vpack.c.b16 %v2077, %v2074
  %v2108 = vpack.c.b16 %v2078, %v2075
  %v2109 = vpack.c.b16 %v2079, %v2076
  %v2110 = vpack.c.b16 %v2083, %v2080
  %v2111 = vpack.c.b16 %v2084, %v2081
  %v2112 = vpack.c.b16 %v2085, %v2082
  %v2113 = vpack.c.b16 %v2089, %v2086
  %v2114 = vpack.c.b16 %v2090, %v2087
  %v2115 = vpack.c.b16 %v2091, %v2088
  %2140 = vmatprep.subr.bf16.mxu0 %v2093
  %2141 = vmatpush1.bf16.msra.mxu0 %v2092
  %2142 = vmatprep.subr.bf16.mxu0 %v2096
  %2143 = vmatpush1.bf16.msra.mxu0 %v2095
  %2144 = vmatprep.subr.bf16.mxu0 %v2099
  %2145 = vmatpush1.bf16.msra.mxu0 %v2098
  %2146 = vmatprep.subr.bf16.mxu0 %v2102
  %2147 = vmatpush1.bf16.msra.mxu0 %v2101
  %2148 = vmatprep.subr.bf16.mxu0 %v2105
  %2149 = vmatpush1.bf16.msra.mxu0 %v2104
  %2150 = vmatprep.subr.bf16.mxu0 %v2108
  %2151 = vmatpush1.bf16.msra.mxu0 %v2107
  %2152 = vmatprep.subr.bf16.mxu0 %v2111
  %2153 = vmatpush1.bf16.msra.mxu0 %v2110
  %2154 = vmatprep.subr.bf16.mxu0 %v2114
  %2155 = vmatpush1.bf16.msra.mxu0 %v2113
  %2156 = vmatprep.subr.bf16.mxu0 0
  %2157 = vmatpush1.bf16.msra.mxu0 0
  %2158 = vmatprep.subr.bf16.mxu0 0
  %2159 = vmatpush1.bf16.msra.mxu0 0
  %2160 = vmatprep.subr.bf16.mxu0 0
  %2161 = vmatpush1.bf16.msra.mxu0 0
  %2162 = vmatprep.subr.bf16.mxu0 0
  %2163 = vmatpush1.bf16.msra.mxu0 0
  %2164 = vmatprep.subr.bf16.mxu0 0
  %2165 = vmatpush1.bf16.msra.mxu0 0
  %2166 = vmatprep.subr.bf16.mxu0 0
  %2167 = vmatpush1.bf16.msra.mxu0 0
  %2168 = vmatprep.subr.bf16.mxu0 0
  %2169 = vmatpush1.bf16.msra.mxu0 0
  %2170 = vmatprep.subr.bf16.mxu0 0
  %2171 = vmatpush1.bf16.msra.mxu0 0
  %2172 = vmatprep.mubr.bf16.mxu0 0
  %2173 = vmatmul.mubr.bf16.gmra.mrb[0].mxu0 %v1964
  %v2174 = vpop.f32.mrb[0].mxu0
  %v2175 = vadd.f32 0.0, %v2174
  %v2176 = vpop.f32.mrb[0].mxu0
  %v2177 = vadd.f32 0.0, %v2176
  %v2178 = vpop.f32.mrb[0].mxu0
  %v2179 = vadd.f32 0.0, %v2178
  %v2180 = vpop.f32.mrb[0].mxu0
  %v2181 = vadd.f32 0.0, %v2180
  %2182 = vmatprep.mubr.bf16.mxu0 0
  %2183 = vmatmul.mubr.bf16.gmra.mrb[0].mxu0 %v1965
  %v2184 = vpop.f32.mrb[0].mxu0
  %v2185 = vadd.f32 0.0, %v2184
  %v2186 = vpop.f32.mrb[0].mxu0
  %v2187 = vadd.f32 0.0, %v2186
  %v2188 = vpop.f32.mrb[0].mxu0
  %v2189 = vadd.f32 0.0, %v2188
  %v2190 = vpop.f32.mrb[0].mxu0
  %v2191 = vadd.f32 0.0, %v2190
  %2192 = vmatprep.mubr.bf16.mxu0 0
  %2193 = vmatmul.mubr.bf16.gmra.mrb[0].mxu0 %v1966
  %v2194 = vpop.f32.mrb[0].mxu0
  %v2195 = vadd.f32 0.0, %v2194
  %v2196 = vpop.f32.mrb[0].mxu0
  %v2197 = vadd.f32 0.0, %v2196
  %v2198 = vpop.f32.mrb[0].mxu0
  %v2199 = vadd.f32 0.0, %v2198
  %v2200 = vpop.f32.mrb[0].mxu0
  %v2201 = vadd.f32 0.0, %v2200
  %2202 = vmatprep.mubr.bf16.mxu0 0
  %2203 = vmatmul.mubr.bf16.gmra.mrb[0].mxu0 %v1967
  %v2204 = vpop.f32.mrb[0].mxu0
  %v2205 = vadd.f32 0.0, %v2204
  %v2206 = vpop.f32.mrb[0].mxu0
  %v2207 = vadd.f32 0.0, %v2206
  %v2208 = vpop.f32.mrb[0].mxu0
  %v2209 = vadd.f32 0.0, %v2208
  %v2210 = vpop.f32.mrb[0].mxu0
  %v2211 = vadd.f32 0.0, %v2210
  %2212 = vmatprep.mubr.bf16.mxu0 0
  %2213 = vmatmul.mubr.bf16.gmra.mrb[0].mxu0 %v1968
  %v2214 = vpop.f32.mrb[0].mxu0
  %v2215 = vadd.f32 0.0, %v2214
  %v2216 = vpop.f32.mrb[0].mxu0
  %v2217 = vadd.f32 0.0, %v2216
  %v2218 = vpop.f32.mrb[0].mxu0
  %v2219 = vadd.f32 0.0, %v2218
  %v2220 = vpop.f32.mrb[0].mxu0
  %v2221 = vadd.f32 0.0, %v2220
  %2222 = vmatprep.mubr.bf16.mxu0 0
  %2223 = vmatmul.mubr.bf16.gmra.mrb[0].mxu0 %v1969
  %v2224 = vpop.f32.mrb[0].mxu0
  %v2225 = vadd.f32 0.0, %v2224
  %v2226 = vpop.f32.mrb[0].mxu0
  %v2227 = vadd.f32 0.0, %v2226
  %v2228 = vpop.f32.mrb[0].mxu0
  %v2229 = vadd.f32 0.0, %v2228
  %v2230 = vpop.f32.mrb[0].mxu0
  %v2231 = vadd.f32 0.0, %v2230
  %2232 = vmatprep.mubr.bf16.mxu0 0
  %2233 = vmatmul.mubr.bf16.gmra.mrb[0].mxu0 %v1970
  %v2234 = vpop.f32.mrb[0].mxu0
  %v2235 = vadd.f32 0.0, %v2234
  %v2236 = vpop.f32.mrb[0].mxu0
  %v2237 = vadd.f32 0.0, %v2236
  %v2238 = vpop.f32.mrb[0].mxu0
  %v2239 = vadd.f32 0.0, %v2238
  %v2240 = vpop.f32.mrb[0].mxu0
  %v2241 = vadd.f32 0.0, %v2240
  %2242 = vmatprep.mubr.bf16.mxu0 0
  %2243 = vmatmul.mubr.bf16.gmra.mrb[0].mxu0 %v1971
  %v2244 = vpop.f32.mrb[0].mxu0
  %v2245 = vadd.f32 0.0, %v2244
  %v2246 = vpop.f32.mrb[0].mxu0
  %v2247 = vadd.f32 0.0, %v2246
  %v2248 = vpop.f32.mrb[0].mxu0
  %v2249 = vadd.f32 0.0, %v2248
  %v2250 = vpop.f32.mrb[0].mxu0
  %v2251 = vadd.f32 0.0, %v2250
  %2252 = vmatprep.mubr.bf16.mxu0 0
  %2253 = vmatmul.mubr.bf16.gmra.mrb[0].mxu0 %v1972
  %v2254 = vpop.f32.mrb[0].mxu0
  %v2255 = vadd.f32 0.0, %v2254
  %v2256 = vpop.f32.mrb[0].mxu0
  %v2257 = vadd.f32 0.0, %v2256
  %v2258 = vpop.f32.mrb[0].mxu0
  %v2259 = vadd.f32 0.0, %v2258
  %v2260 = vpop.f32.mrb[0].mxu0
  %v2261 = vadd.f32 0.0, %v2260
  %2262 = vmatprep.mubr.bf16.mxu0 0
  %2263 = vmatmul.mubr.bf16.gmra.mrb[0].mxu0 %v1973
  %v2264 = vpop.f32.mrb[0].mxu0
  %v2265 = vadd.f32 0.0, %v2264
  %v2266 = vpop.f32.mrb[0].mxu0
  %v2267 = vadd.f32 0.0, %v2266
  %v2268 = vpop.f32.mrb[0].mxu0
  %v2269 = vadd.f32 0.0, %v2268
  %v2270 = vpop.f32.mrb[0].mxu0
  %v2271 = vadd.f32 0.0, %v2270
  %2272 = vmatprep.mubr.bf16.mxu0 0
  %2273 = vmatmul.mubr.bf16.gmra.mrb[0].mxu0 %v1974
  %v2274 = vpop.f32.mrb[0].mxu0
  %v2275 = vadd.f32 0.0, %v2274
  %v2276 = vpop.f32.mrb[0].mxu0
  %v2277 = vadd.f32 0.0, %v2276
  %v2278 = vpop.f32.mrb[0].mxu0
  %v2279 = vadd.f32 0.0, %v2278
  %v2280 = vpop.f32.mrb[0].mxu0
  %v2281 = vadd.f32 0.0, %v2280
  %2282 = vmatprep.mubr.bf16.mxu0 0
  %2283 = vmatmul.mubr.bf16.gmra.mrb[0].mxu0 %v1975
  %v2284 = vpop.f32.mrb[0].mxu0
  %v2285 = vadd.f32 0.0, %v2284
  %v2286 = vpop.f32.mrb[0].mxu0
  %v2287 = vadd.f32 0.0, %v2286
  %v2288 = vpop.f32.mrb[0].mxu0
  %v2289 = vadd.f32 0.0, %v2288
  %v2290 = vpop.f32.mrb[0].mxu0
  %v2291 = vadd.f32 0.0, %v2290
  %2292 = vmatprep.mubr.bf16.mxu0 0
  %2293 = vmatmul.mubr.bf16.gmra.mrb[0].mxu0 %v1976
  %v2294 = vpop.f32.mrb[0].mxu0
  %v2295 = vadd.f32 0.0, %v2294
  %v2296 = vpop.f32.mrb[0].mxu0
  %v2297 = vadd.f32 0.0, %v2296
  %v2298 = vpop.f32.mrb[0].mxu0
  %v2299 = vadd.f32 0.0, %v2298
  %v2300 = vpop.f32.mrb[0].mxu0
  %v2301 = vadd.f32 0.0, %v2300
  %2302 = vmatprep.mubr.bf16.mxu0 0
  %2303 = vmatmul.mubr.bf16.gmra.mrb[0].mxu0 %v1977
  %v2304 = vpop.f32.mrb[0].mxu0
  %v2305 = vadd.f32 0.0, %v2304
  %v2306 = vpop.f32.mrb[0].mxu0
  %v2307 = vadd.f32 0.0, %v2306
  %v2308 = vpop.f32.mrb[0].mxu0
  %v2309 = vadd.f32 0.0, %v2308
  %v2310 = vpop.f32.mrb[0].mxu0
  %v2311 = vadd.f32 0.0, %v2310
  %2312 = vmatprep.mubr.bf16.mxu0 0
  %2313 = vmatmul.mubr.bf16.gmra.mrb[0].mxu0 %v1978
  %v2314 = vpop.f32.mrb[0].mxu0
  %v2315 = vadd.f32 0.0, %v2314
  %v2316 = vpop.f32.mrb[0].mxu0
  %v2317 = vadd.f32 0.0, %v2316
  %v2318 = vpop.f32.mrb[0].mxu0
  %v2319 = vadd.f32 0.0, %v2318
  %v2320 = vpop.f32.mrb[0].mxu0
  %v2321 = vadd.f32 0.0, %v2320
  %2322 = vmatprep.mubr.bf16.mxu0 0
  %2323 = vmatmul.mubr.bf16.gmra.mrb[0].mxu0 %v1979
  %v2324 = vpop.f32.mrb[0].mxu0
  %v2325 = vadd.f32 0.0, %v2324
  %v2326 = vpop.f32.mrb[0].mxu0
  %v2327 = vadd.f32 0.0, %v2326
  %v2328 = vpop.f32.mrb[0].mxu0
  %v2329 = vadd.f32 0.0, %v2328
  %v2330 = vpop.f32.mrb[0].mxu0
  %v2331 = vadd.f32 0.0, %v2330
  %2332 = vdwg.mxu0
  %2333 = vmatprep.subr.bf16.mxu0 0
  %2334 = vmatpush1.bf16.msra.mxu0 %v2094
  %2335 = vmatprep.subr.bf16.mxu0 0
  %2336 = vmatpush1.bf16.msra.mxu0 %v2097
  %2337 = vmatprep.subr.bf16.mxu0 0
  %2338 = vmatpush1.bf16.msra.mxu0 %v2100
  %2339 = vmatprep.subr.bf16.mxu0 0
  %2340 = vmatpush1.bf16.msra.mxu0 %v2103
  %2341 = vmatprep.subr.bf16.mxu0 0
  %2342 = vmatpush1.bf16.msra.mxu0 %v2106
  %2343 = vmatprep.subr.bf16.mxu0 0
  %2344 = vmatpush1.bf16.msra.mxu0 %v2109
  %2345 = vmatprep.subr.bf16.mxu0 0
  %2346 = vmatpush1.bf16.msra.mxu0 %v2112
  %2347 = vmatprep.subr.bf16.mxu0 0
  %2348 = vmatpush1.bf16.msra.mxu0 %v2115
  %2349 = vmatprep.subr.bf16.mxu0 0
  %2350 = vmatpush1.bf16.msra.mxu0 0
  %2351 = vmatprep.subr.bf16.mxu0 0
  %2352 = vmatpush1.bf16.msra.mxu0 0
  %2353 = vmatprep.subr.bf16.mxu0 0
  %2354 = vmatpush1.bf16.msra.mxu0 0
  %2355 = vmatprep.subr.bf16.mxu0 0
  %2356 = vmatpush1.bf16.msra.mxu0 0
  %2357 = vmatprep.subr.bf16.mxu0 0
  %2358 = vmatpush1.bf16.msra.mxu0 0
  %2359 = vmatprep.subr.bf16.mxu0 0
  %2360 = vmatpush1.bf16.msra.mxu0 0
  %2361 = vmatprep.subr.bf16.mxu0 0
  %2362 = vmatpush1.bf16.msra.mxu0 0
  %2363 = vmatprep.subr.bf16.mxu0 0
  %2364 = vmatpush1.bf16.msra.mxu0 0
  %2365 = vmatprep.mubr.bf16.mxu0 0
  %2366 = vmatmul.mubr.bf16.gmra.mrb[0].mxu0 %v1964
  %v2367 = vpop.f32.mrb[0].mxu0
  %v2368 = vadd.f32 0.0, %v2367
  %v2369 = vpop.f32.mrb[0].mxu0
  %v2370 = vpop.f32.mrb[0].mxu0
  %v2371 = vadd.f32 0.0, %v2370
  %v2372 = vpop.f32.mrb[0].mxu0
  %2373 = vmatprep.mubr.bf16.mxu0 0
  %2374 = vmatmul.mubr.bf16.gmra.mrb[0].mxu0 %v1965
  %v2375 = vpop.f32.mrb[0].mxu0
  %v2376 = vadd.f32 0.0, %v2375
  %v2377 = vpop.f32.mrb[0].mxu0
  %v2378 = vpop.f32.mrb[0].mxu0
  %v2379 = vadd.f32 0.0, %v2378
  %v2380 = vpop.f32.mrb[0].mxu0
  %2381 = vmatprep.mubr.bf16.mxu0 0
  %2382 = vmatmul.mubr.bf16.gmra.mrb[0].mxu0 %v1966
  %v2383 = vpop.f32.mrb[0].mxu0
  %v2384 = vadd.f32 0.0, %v2383
  %v2385 = vpop.f32.mrb[0].mxu0
  %v2386 = vpop.f32.mrb[0].mxu0
  %v2387 = vadd.f32 0.0, %v2386
  %v2388 = vpop.f32.mrb[0].mxu0
  %2389 = vmatprep.mubr.bf16.mxu0 0
  %2390 = vmatmul.mubr.bf16.gmra.mrb[0].mxu0 %v1967
  %v2391 = vpop.f32.mrb[0].mxu0
  %v2392 = vadd.f32 0.0, %v2391
  %v2393 = vpop.f32.mrb[0].mxu0
  %v2394 = vpop.f32.mrb[0].mxu0
  %v2395 = vadd.f32 0.0, %v2394
  %v2396 = vpop.f32.mrb[0].mxu0
  %2397 = vmatprep.mubr.bf16.mxu0 0
  %2398 = vmatmul.mubr.bf16.gmra.mrb[0].mxu0 %v1968
  %v2399 = vpop.f32.mrb[0].mxu0
  %v2400 = vadd.f32 0.0, %v2399
  %v2401 = vpop.f32.mrb[0].mxu0
  %v2402 = vpop.f32.mrb[0].mxu0
  %v2403 = vadd.f32 0.0, %v2402
  %v2404 = vpop.f32.mrb[0].mxu0
  %2405 = vmatprep.mubr.bf16.mxu0 0
  %2406 = vmatmul.mubr.bf16.gmra.mrb[0].mxu0 %v1969
  %v2407 = vpop.f32.mrb[0].mxu0
  %v2408 = vadd.f32 0.0, %v2407
  %v2409 = vpop.f32.mrb[0].mxu0
  %v2410 = vpop.f32.mrb[0].mxu0
  %v2411 = vadd.f32 0.0, %v2410
  %v2412 = vpop.f32.mrb[0].mxu0
  %2413 = vmatprep.mubr.bf16.mxu0 0
  %2414 = vmatmul.mubr.bf16.gmra.mrb[0].mxu0 %v1970
  %v2415 = vpop.f32.mrb[0].mxu0
  %v2416 = vadd.f32 0.0, %v2415
  %v2417 = vpop.f32.mrb[0].mxu0
  %v2418 = vpop.f32.mrb[0].mxu0
  %v2419 = vadd.f32 0.0, %v2418
  %v2420 = vpop.f32.mrb[0].mxu0
  %2421 = vmatprep.mubr.bf16.mxu0 0
  %2422 = vmatmul.mubr.bf16.gmra.mrb[0].mxu0 %v1971
  %v2423 = vpop.f32.mrb[0].mxu0
  %v2424 = vadd.f32 0.0, %v2423
  %v2425 = vpop.f32.mrb[0].mxu0
  %v2426 = vpop.f32.mrb[0].mxu0
  %v2427 = vadd.f32 0.0, %v2426
  %v2428 = vpop.f32.mrb[0].mxu0
  %2429 = vmatprep.mubr.bf16.mxu0 0
  %2430 = vmatmul.mubr.bf16.gmra.mrb[0].mxu0 %v1972
  %v2431 = vpop.f32.mrb[0].mxu0
  %v2432 = vadd.f32 0.0, %v2431
  %v2433 = vpop.f32.mrb[0].mxu0
  %v2434 = vpop.f32.mrb[0].mxu0
  %v2435 = vadd.f32 0.0, %v2434
  %v2436 = vpop.f32.mrb[0].mxu0
  %2437 = vmatprep.mubr.bf16.mxu0 0
  %2438 = vmatmul.mubr.bf16.gmra.mrb[0].mxu0 %v1973
  %v2439 = vpop.f32.mrb[0].mxu0
  %v2440 = vadd.f32 0.0, %v2439
  %v2441 = vpop.f32.mrb[0].mxu0
  %v2442 = vpop.f32.mrb[0].mxu0
  %v2443 = vadd.f32 0.0, %v2442
  %v2444 = vpop.f32.mrb[0].mxu0
  %2445 = vmatprep.mubr.bf16.mxu0 0
  %2446 = vmatmul.mubr.bf16.gmra.mrb[0].mxu0 %v1974
  %v2447 = vpop.f32.mrb[0].mxu0
  %v2448 = vadd.f32 0.0, %v2447
  %v2449 = vpop.f32.mrb[0].mxu0
  %v2450 = vpop.f32.mrb[0].mxu0
  %v2451 = vadd.f32 0.0, %v2450
  %v2452 = vpop.f32.mrb[0].mxu0
  %2453 = vmatprep.mubr.bf16.mxu0 0
  %2454 = vmatmul.mubr.bf16.gmra.mrb[0].mxu0 %v1975
  %v2455 = vpop.f32.mrb[0].mxu0
  %v2456 = vadd.f32 0.0, %v2455
  %v2457 = vpop.f32.mrb[0].mxu0
  %v2458 = vpop.f32.mrb[0].mxu0
  %v2459 = vadd.f32 0.0, %v2458
  %v2460 = vpop.f32.mrb[0].mxu0
  %2461 = vmatprep.mubr.bf16.mxu0 0
  %2462 = vmatmul.mubr.bf16.gmra.mrb[0].mxu0 %v1976
  %v2463 = vpop.f32.mrb[0].mxu0
  %v2464 = vadd.f32 0.0, %v2463
  %v2465 = vpop.f32.mrb[0].mxu0
  %v2466 = vpop.f32.mrb[0].mxu0
  %v2467 = vadd.f32 0.0, %v2466
  %v2468 = vpop.f32.mrb[0].mxu0
  %2469 = vmatprep.mubr.bf16.mxu0 0
  %2470 = vmatmul.mubr.bf16.gmra.mrb[0].mxu0 %v1977
  %v2471 = vpop.f32.mrb[0].mxu0
  %v2472 = vadd.f32 0.0, %v2471
  %v2473 = vpop.f32.mrb[0].mxu0
  %v2474 = vpop.f32.mrb[0].mxu0
  %v2475 = vadd.f32 0.0, %v2474
  %v2476 = vpop.f32.mrb[0].mxu0
  %2477 = vmatprep.mubr.bf16.mxu0 0
  %2478 = vmatmul.mubr.bf16.gmra.mrb[0].mxu0 %v1978
  %v2479 = vpop.f32.mrb[0].mxu0
  %v2480 = vadd.f32 0.0, %v2479
  %v2481 = vpop.f32.mrb[0].mxu0
  %v2482 = vpop.f32.mrb[0].mxu0
  %v2483 = vadd.f32 0.0, %v2482
  %v2484 = vpop.f32.mrb[0].mxu0
  %2485 = vmatprep.mubr.bf16.mxu0 0
  %2486 = vmatmul.mubr.bf16.gmra.mrb[0].mxu0 %v1979
  %v2487 = vpop.f32.mrb[0].mxu0
  %v2488 = vadd.f32 0.0, %v2487
  %v2489 = vpop.f32.mrb[0].mxu0
  %v2490 = vpop.f32.mrb[0].mxu0
  %v2491 = vadd.f32 0.0, %v2490
  %v2492 = vpop.f32.mrb[0].mxu0
  %2493 = vdwg.mxu0
  %v2494 = vpack.c.bf16 %v2179, %v2175
  %v2495 = vpack.c.bf16 %v2189, %v2185
  %v2496 = vpack.c.bf16 %v2199, %v2195
  %v2497 = vpack.c.bf16 %v2209, %v2205
  %v2498 = vpack.c.bf16 %v2219, %v2215
  %v2499 = vpack.c.bf16 %v2229, %v2225
  %v2500 = vpack.c.bf16 %v2239, %v2235
  %v2501 = vpack.c.bf16 %v2249, %v2245
  %v2502 = vpack.c.bf16 %v2259, %v2255
  %v2503 = vpack.c.bf16 %v2269, %v2265
  %v2504 = vpack.c.bf16 %v2279, %v2275
  %v2505 = vpack.c.bf16 %v2289, %v2285
  %v2506 = vpack.c.bf16 %v2299, %v2295
  %v2507 = vpack.c.bf16 %v2309, %v2305
  %v2508 = vpack.c.bf16 %v2319, %v2315
  %v2509 = vpack.c.bf16 %v2329, %v2325
  %v2510 = vpack.c.bf16 %v2181, %v2177
  %v2511 = vpack.c.bf16 %v2191, %v2187
  %v2512 = vpack.c.bf16 %v2201, %v2197
  %v2513 = vpack.c.bf16 %v2211, %v2207
  %v2514 = vpack.c.bf16 %v2221, %v2217
  %v2515 = vpack.c.bf16 %v2231, %v2227
  %v2516 = vpack.c.bf16 %v2241, %v2237
  %v2517 = vpack.c.bf16 %v2251, %v2247
  %v2518 = vpack.c.bf16 %v2261, %v2257
  %v2519 = vpack.c.bf16 %v2271, %v2267
  %v2520 = vpack.c.bf16 %v2281, %v2277
  %v2521 = vpack.c.bf16 %v2291, %v2287
  %v2522 = vpack.c.bf16 %v2301, %v2297
  %v2523 = vpack.c.bf16 %v2311, %v2307
  %v2524 = vpack.c.bf16 %v2321, %v2317
  %v2525 = vpack.c.bf16 %v2331, %v2327
  %v2526 = vpack.c.bf16 %v2371, %v2368
  %v2527 = vpack.c.bf16 %v2379, %v2376
  %v2528 = vpack.c.bf16 %v2387, %v2384
  %v2529 = vpack.c.bf16 %v2395, %v2392
  %v2530 = vpack.c.bf16 %v2403, %v2400
  %v2531 = vpack.c.bf16 %v2411, %v2408
  %v2532 = vpack.c.bf16 %v2419, %v2416
  %v2533 = vpack.c.bf16 %v2427, %v2424
  %v2534 = vpack.c.bf16 %v2435, %v2432
  %v2535 = vpack.c.bf16 %v2443, %v2440
  %v2536 = vpack.c.bf16 %v2451, %v2448
  %v2537 = vpack.c.bf16 %v2459, %v2456
  %v2538 = vpack.c.bf16 %v2467, %v2464
  %v2539 = vpack.c.bf16 %v2475, %v2472
  %v2540 = vpack.c.bf16 %v2483, %v2480
  %v2541 = vpack.c.bf16 %v2491, %v2488
  %2542 = vmatprep.subr.bf16.mxu0 0
  %2543 = vmatpush1.bf16.xpose.msra.mxu0 %v2510
  %2544 = vmatprep.subr.bf16.mxu0 0
  %2545 = vmatpush1.bf16.xpose.msra.mxu0 %v2511
  %2546 = vmatprep.subr.bf16.mxu0 0
  %2547 = vmatpush1.bf16.xpose.msra.mxu0 %v2512
  %2548 = vmatprep.subr.bf16.mxu0 0
  %2549 = vmatpush1.bf16.xpose.msra.mxu0 %v2513
  %2550 = vmatprep.subr.bf16.mxu0 0
  %2551 = vmatpush1.bf16.xpose.msra.mxu0 0
  %2552 = vmatprep.subr.bf16.mxu0 0
  %2553 = vmatpush1.bf16.xpose.msra.mxu0 0
  %2554 = vmatprep.subr.bf16.mxu0 0
  %2555 = vmatpush1.bf16.xpose.msra.mxu0 0
  %2556 = vmatprep.subr.bf16.mxu0 0
  %2557 = vmatpush1.bf16.xpose.msra.mxu0 0
  %2558 = vmatprep.subr.bf16.mxu0 0
  %2559 = vmatpush1.bf16.xpose.msra.mxu0 0
  %2560 = vmatprep.subr.bf16.mxu0 0
  %2561 = vmatpush1.bf16.xpose.msra.mxu0 0
  %2562 = vmatprep.subr.bf16.mxu0 0
  %2563 = vmatpush1.bf16.xpose.msra.mxu0 0
  %2564 = vmatprep.subr.bf16.mxu0 0
  %2565 = vmatpush1.bf16.xpose.msra.mxu0 0
  %2566 = vmatprep.subr.bf16.mxu0 0
  %2567 = vmatpush1.bf16.xpose.msra.mxu0 0
  %2568 = vmatprep.subr.bf16.mxu0 0
  %2569 = vmatpush1.bf16.xpose.msra.mxu0 0
  %2570 = vmatprep.subr.bf16.mxu0 0
  %2571 = vmatpush1.bf16.xpose.msra.mxu0 0
  %2572 = vmatprep.subr.bf16.mxu0 0
  %2573 = vmatpush1.bf16.xpose.msra.mxu0 0
  %2574 = vmatprep.mubr.bf16.mxu0 0
  %2575 = vmatmul.mubr.bf16.gmra.mrb[0].mxu0 %v2494
  %v2576 = vpop.f32.mrb[0].mxu0
  %v2577 = vadd.f32 0.0, %v2576
  %v2578 = vpop.f32.mrb[0].mxu0
  %v2579 = vpop.f32.mrb[0].mxu0
  %v2580 = vadd.f32 0.0, %v2579
  %v2581 = vpop.f32.mrb[0].mxu0
  %2582 = vmatprep.mubr.bf16.mxu0 0
  %2583 = vmatmul.mubr.bf16.gmra.mrb[0].mxu0 %v2495
  %v2584 = vpop.f32.mrb[0].mxu0
  %v2585 = vadd.f32 0.0, %v2584
  %v2586 = vpop.f32.mrb[0].mxu0
  %v2587 = vpop.f32.mrb[0].mxu0
  %v2588 = vadd.f32 0.0, %v2587
  %v2589 = vpop.f32.mrb[0].mxu0
  %2590 = vmatprep.mubr.bf16.mxu0 0
  %2591 = vmatmul.mubr.bf16.gmra.mrb[0].mxu0 %v2496
  %v2592 = vpop.f32.mrb[0].mxu0
  %v2593 = vadd.f32 0.0, %v2592
  %v2594 = vpop.f32.mrb[0].mxu0
  %v2595 = vpop.f32.mrb[0].mxu0
  %v2596 = vadd.f32 0.0, %v2595
  %v2597 = vpop.f32.mrb[0].mxu0
  %2598 = vmatprep.mubr.bf16.mxu0 0
  %2599 = vmatmul.mubr.bf16.gmra.mrb[0].mxu0 %v2497
  %v2600 = vpop.f32.mrb[0].mxu0
  %v2601 = vadd.f32 0.0, %v2600
  %v2602 = vpop.f32.mrb[0].mxu0
  %v2603 = vpop.f32.mrb[0].mxu0
  %v2604 = vadd.f32 0.0, %v2603
  %v2605 = vpop.f32.mrb[0].mxu0
  %2606 = vdwg.mxu0
  %2607 = vmatprep.subr.bf16.mxu0 0
  %2608 = vmatpush1.bf16.xpose.msra.mxu0 %v2514
  %2609 = vmatprep.subr.bf16.mxu0 0
  %2610 = vmatpush1.bf16.xpose.msra.mxu0 %v2515
  %2611 = vmatprep.subr.bf16.mxu0 0
  %2612 = vmatpush1.bf16.xpose.msra.mxu0 %v2516
  %2613 = vmatprep.subr.bf16.mxu0 0
  %2614 = vmatpush1.bf16.xpose.msra.mxu0 %v2517
  %2615 = vmatprep.subr.bf16.mxu0 0
  %2616 = vmatpush1.bf16.xpose.msra.mxu0 0
  %2617 = vmatprep.subr.bf16.mxu0 0
  %2618 = vmatpush1.bf16.xpose.msra.mxu0 0
  %2619 = vmatprep.subr.bf16.mxu0 0
  %2620 = vmatpush1.bf16.xpose.msra.mxu0 0
  %2621 = vmatprep.subr.bf16.mxu0 0
  %2622 = vmatpush1.bf16.xpose.msra.mxu0 0
  %2623 = vmatprep.subr.bf16.mxu0 0
  %2624 = vmatpush1.bf16.xpose.msra.mxu0 0
  %2625 = vmatprep.subr.bf16.mxu0 0
  %2626 = vmatpush1.bf16.xpose.msra.mxu0 0
  %2627 = vmatprep.subr.bf16.mxu0 0
  %2628 = vmatpush1.bf16.xpose.msra.mxu0 0
  %2629 = vmatprep.subr.bf16.mxu0 0
  %2630 = vmatpush1.bf16.xpose.msra.mxu0 0
  %2631 = vmatprep.subr.bf16.mxu0 0
  %2632 = vmatpush1.bf16.xpose.msra.mxu0 0
  %2633 = vmatprep.subr.bf16.mxu0 0
  %2634 = vmatpush1.bf16.xpose.msra.mxu0 0
  %2635 = vmatprep.subr.bf16.mxu0 0
  %2636 = vmatpush1.bf16.xpose.msra.mxu0 0
  %2637 = vmatprep.subr.bf16.mxu0 0
  %2638 = vmatpush1.bf16.xpose.msra.mxu0 0
  %2639 = vmatprep.mubr.bf16.mxu0 0
  %2640 = vmatmul.mubr.bf16.gmra.mrb[0].mxu0 %v2498
  %v2641 = vpop.f32.mrb[0].mxu0
  %v2642 = vadd.f32 0.0, %v2641
  %v2643 = vpop.f32.mrb[0].mxu0
  %v2644 = vpop.f32.mrb[0].mxu0
  %v2645 = vadd.f32 0.0, %v2644
  %v2646 = vpop.f32.mrb[0].mxu0
  %2647 = vmatprep.mubr.bf16.mxu0 0
  %2648 = vmatmul.mubr.bf16.gmra.mrb[0].mxu0 %v2499
  %v2649 = vpop.f32.mrb[0].mxu0
  %v2650 = vadd.f32 0.0, %v2649
  %v2651 = vpop.f32.mrb[0].mxu0
  %v2652 = vpop.f32.mrb[0].mxu0
  %v2653 = vadd.f32 0.0, %v2652
  %v2654 = vpop.f32.mrb[0].mxu0
  %2655 = vmatprep.mubr.bf16.mxu0 0
  %2656 = vmatmul.mubr.bf16.gmra.mrb[0].mxu0 %v2500
  %v2657 = vpop.f32.mrb[0].mxu0
  %v2658 = vadd.f32 0.0, %v2657
  %v2659 = vpop.f32.mrb[0].mxu0
  %v2660 = vpop.f32.mrb[0].mxu0
  %v2661 = vadd.f32 0.0, %v2660
  %v2662 = vpop.f32.mrb[0].mxu0
  %2663 = vmatprep.mubr.bf16.mxu0 0
  %2664 = vmatmul.mubr.bf16.gmra.mrb[0].mxu0 %v2501
  %v2665 = vpop.f32.mrb[0].mxu0
  %v2666 = vadd.f32 0.0, %v2665
  %v2667 = vpop.f32.mrb[0].mxu0
  %v2668 = vpop.f32.mrb[0].mxu0
  %v2669 = vadd.f32 0.0, %v2668
  %v2670 = vpop.f32.mrb[0].mxu0
  %2671 = vdwg.mxu0
  %2672 = vmatprep.subr.bf16.mxu0 0
  %2673 = vmatpush1.bf16.xpose.msra.mxu0 %v2518
  %2674 = vmatprep.subr.bf16.mxu0 0
  %2675 = vmatpush1.bf16.xpose.msra.mxu0 %v2519
  %2676 = vmatprep.subr.bf16.mxu0 0
  %2677 = vmatpush1.bf16.xpose.msra.mxu0 %v2520
  %2678 = vmatprep.subr.bf16.mxu0 0
  %2679 = vmatpush1.bf16.xpose.msra.mxu0 %v2521
  %2680 = vmatprep.subr.bf16.mxu0 0
  %2681 = vmatpush1.bf16.xpose.msra.mxu0 0
  %2682 = vmatprep.subr.bf16.mxu0 0
  %2683 = vmatpush1.bf16.xpose.msra.mxu0 0
  %2684 = vmatprep.subr.bf16.mxu0 0
  %2685 = vmatpush1.bf16.xpose.msra.mxu0 0
  %2686 = vmatprep.subr.bf16.mxu0 0
  %2687 = vmatpush1.bf16.xpose.msra.mxu0 0
  %2688 = vmatprep.subr.bf16.mxu0 0
  %2689 = vmatpush1.bf16.xpose.msra.mxu0 0
  %2690 = vmatprep.subr.bf16.mxu0 0
  %2691 = vmatpush1.bf16.xpose.msra.mxu0 0
  %2692 = vmatprep.subr.bf16.mxu0 0
  %2693 = vmatpush1.bf16.xpose.msra.mxu0 0
  %2694 = vmatprep.subr.bf16.mxu0 0
  %2695 = vmatpush1.bf16.xpose.msra.mxu0 0
  %2696 = vmatprep.subr.bf16.mxu0 0
  %2697 = vmatpush1.bf16.xpose.msra.mxu0 0
  %2698 = vmatprep.subr.bf16.mxu0 0
  %2699 = vmatpush1.bf16.xpose.msra.mxu0 0
  %2700 = vmatprep.subr.bf16.mxu0 0
  %2701 = vmatpush1.bf16.xpose.msra.mxu0 0
  %2702 = vmatprep.subr.bf16.mxu0 0
  %2703 = vmatpush1.bf16.xpose.msra.mxu0 0
  %2704 = vmatprep.mubr.bf16.mxu0 0
  %2705 = vmatmul.mubr.bf16.gmra.mrb[0].mxu0 %v2502
  %v2706 = vpop.f32.mrb[0].mxu0
  %v2707 = vadd.f32 0.0, %v2706
  %v2708 = vpop.f32.mrb[0].mxu0
  %v2709 = vpop.f32.mrb[0].mxu0
  %v2710 = vadd.f32 0.0, %v2709
  %v2711 = vpop.f32.mrb[0].mxu0
  %2712 = vmatprep.mubr.bf16.mxu0 0
  %2713 = vmatmul.mubr.bf16.gmra.mrb[0].mxu0 %v2503
  %v2714 = vpop.f32.mrb[0].mxu0
  %v2715 = vadd.f32 0.0, %v2714
  %v2716 = vpop.f32.mrb[0].mxu0
  %v2717 = vpop.f32.mrb[0].mxu0
  %v2718 = vadd.f32 0.0, %v2717
  %v2719 = vpop.f32.mrb[0].mxu0
  %2720 = vmatprep.mubr.bf16.mxu0 0
  %2721 = vmatmul.mubr.bf16.gmra.mrb[0].mxu0 %v2504
  %v2722 = vpop.f32.mrb[0].mxu0
  %v2723 = vadd.f32 0.0, %v2722
  %v2724 = vpop.f32.mrb[0].mxu0
  %v2725 = vpop.f32.mrb[0].mxu0
  %v2726 = vadd.f32 0.0, %v2725
  %v2727 = vpop.f32.mrb[0].mxu0
  %2728 = vmatprep.mubr.bf16.mxu0 0
  %2729 = vmatmul.mubr.bf16.gmra.mrb[0].mxu0 %v2505
  %v2730 = vpop.f32.mrb[0].mxu0
  %v2731 = vadd.f32 0.0, %v2730
  %v2732 = vpop.f32.mrb[0].mxu0
  %v2733 = vpop.f32.mrb[0].mxu0
  %v2734 = vadd.f32 0.0, %v2733
  %v2735 = vpop.f32.mrb[0].mxu0
  %2736 = vdwg.mxu0
  %2737 = vmatprep.subr.bf16.mxu0 0
  %2738 = vmatpush1.bf16.xpose.msra.mxu0 %v2522
  %2739 = vmatprep.subr.bf16.mxu0 0
  %2740 = vmatpush1.bf16.xpose.msra.mxu0 %v2523
  %2741 = vmatprep.subr.bf16.mxu0 0
  %2742 = vmatpush1.bf16.xpose.msra.mxu0 %v2524
  %2743 = vmatprep.subr.bf16.mxu0 0
  %2744 = vmatpush1.bf16.xpose.msra.mxu0 %v2525
  %2745 = vmatprep.subr.bf16.mxu0 0
  %2746 = vmatpush1.bf16.xpose.msra.mxu0 0
  %2747 = vmatprep.subr.bf16.mxu0 0
  %2748 = vmatpush1.bf16.xpose.msra.mxu0 0
  %2749 = vmatprep.subr.bf16.mxu0 0
  %2750 = vmatpush1.bf16.xpose.msra.mxu0 0
  %2751 = vmatprep.subr.bf16.mxu0 0
  %2752 = vmatpush1.bf16.xpose.msra.mxu0 0
  %2753 = vmatprep.subr.bf16.mxu0 0
  %2754 = vmatpush1.bf16.xpose.msra.mxu0 0
  %2755 = vmatprep.subr.bf16.mxu0 0
  %2756 = vmatpush1.bf16.xpose.msra.mxu0 0
  %2757 = vmatprep.subr.bf16.mxu0 0
  %2758 = vmatpush1.bf16.xpose.msra.mxu0 0
  %2759 = vmatprep.subr.bf16.mxu0 0
  %2760 = vmatpush1.bf16.xpose.msra.mxu0 0
  %2761 = vmatprep.subr.bf16.mxu0 0
  %2762 = vmatpush1.bf16.xpose.msra.mxu0 0
  %2763 = vmatprep.subr.bf16.mxu0 0
  %2764 = vmatpush1.bf16.xpose.msra.mxu0 0
  %2765 = vmatprep.subr.bf16.mxu0 0
  %2766 = vmatpush1.bf16.xpose.msra.mxu0 0
  %2767 = vmatprep.subr.bf16.mxu0 0
  %2768 = vmatpush1.bf16.xpose.msra.mxu0 0
  %2769 = vmatprep.mubr.bf16.mxu0 0
  %2770 = vmatmul.mubr.bf16.gmra.mrb[0].mxu0 %v2506
  %v2771 = vpop.f32.mrb[0].mxu0
  %v2772 = vadd.f32 0.0, %v2771
  %v2773 = vpop.f32.mrb[0].mxu0
  %v2774 = vpop.f32.mrb[0].mxu0
  %v2775 = vadd.f32 0.0, %v2774
  %v2776 = vpop.f32.mrb[0].mxu0
  %2777 = vmatprep.mubr.bf16.mxu0 0
  %2778 = vmatmul.mubr.bf16.gmra.mrb[0].mxu0 %v2507
  %v2779 = vpop.f32.mrb[0].mxu0
  %v2780 = vadd.f32 0.0, %v2779
  %v2781 = vpop.f32.mrb[0].mxu0
  %v2782 = vpop.f32.mrb[0].mxu0
  %v2783 = vadd.f32 0.0, %v2782
  %v2784 = vpop.f32.mrb[0].mxu0
  %2785 = vmatprep.mubr.bf16.mxu0 0
  %2786 = vmatmul.mubr.bf16.gmra.mrb[0].mxu0 %v2508
  %v2787 = vpop.f32.mrb[0].mxu0
  %v2788 = vadd.f32 0.0, %v2787
  %v2789 = vpop.f32.mrb[0].mxu0
  %v2790 = vpop.f32.mrb[0].mxu0
  %v2791 = vadd.f32 0.0, %v2790
  %v2792 = vpop.f32.mrb[0].mxu0
  %2793 = vmatprep.mubr.bf16.mxu0 0
  %2794 = vmatmul.mubr.bf16.gmra.mrb[0].mxu0 %v2509
  %v2795 = vpop.f32.mrb[0].mxu0
  %v2796 = vadd.f32 0.0, %v2795
  %v2797 = vpop.f32.mrb[0].mxu0
  %v2798 = vpop.f32.mrb[0].mxu0
  %v2799 = vadd.f32 0.0, %v2798
  %v2800 = vpop.f32.mrb[0].mxu0
  %2801 = vdwg.mxu0
  %v2802 = vsel %vm885, %v2577, -inf
  %2803 = vmax.xlane.f32.xlu0 %v2802
  %v2804 = vpop.xlane.xlu0 %2803
  %v2805 = vsel %vm885, %v2580, -inf
  %2806 = vmax.xlane.f32.xlu0 %v2805
  %v2807 = vpop.xlane.xlu0 %2806
  %v2808 = vsel %vm885, %v2585, -inf
  %2809 = vmax.xlane.f32.xlu0 %v2808
  %v2810 = vpop.xlane.xlu0 %2809
  %v2811 = vsel %vm885, %v2588, -inf
  %2812 = vmax.xlane.f32.xlu0 %v2811
  %v2813 = vpop.xlane.xlu0 %2812
  %v2814 = vsel %vm885, %v2593, -inf
  %2815 = vmax.xlane.f32.xlu0 %v2814
  %v2816 = vpop.xlane.xlu0 %2815
  %v2817 = vsel %vm885, %v2596, -inf
  %2818 = vmax.xlane.f32.xlu0 %v2817
  %v2819 = vpop.xlane.xlu0 %2818
  %v2820 = vsel %vm885, %v2601, -inf
  %2821 = vmax.xlane.f32.xlu0 %v2820
  %v2822 = vpop.xlane.xlu0 %2821
  %v2823 = vsel %vm885, %v2604, -inf
  %2824 = vmax.xlane.f32.xlu0 %v2823
  %v2825 = vpop.xlane.xlu0 %2824
  %v2826 = vsel %vm885, %v2642, -inf
  %2827 = vmax.xlane.f32.xlu0 %v2826
  %v2828 = vpop.xlane.xlu0 %2827
  %v2829 = vsel %vm885, %v2645, -inf
  %2830 = vmax.xlane.f32.xlu0 %v2829
  %v2831 = vpop.xlane.xlu0 %2830
  %v2832 = vsel %vm885, %v2650, -inf
  %2833 = vmax.xlane.f32.xlu0 %v2832
  %v2834 = vpop.xlane.xlu0 %2833
  %v2835 = vsel %vm885, %v2653, -inf
  %2836 = vmax.xlane.f32.xlu0 %v2835
  %v2837 = vpop.xlane.xlu0 %2836
  %v2838 = vsel %vm885, %v2658, -inf
  %2839 = vmax.xlane.f32.xlu0 %v2838
  %v2840 = vpop.xlane.xlu0 %2839
  %v2841 = vsel %vm885, %v2661, -inf
  %2842 = vmax.xlane.f32.xlu0 %v2841
  %v2843 = vpop.xlane.xlu0 %2842
  %v2844 = vsel %vm885, %v2666, -inf
  %2845 = vmax.xlane.f32.xlu0 %v2844
  %v2846 = vpop.xlane.xlu0 %2845
  %v2847 = vsel %vm885, %v2669, -inf
  %2848 = vmax.xlane.f32.xlu0 %v2847
  %v2849 = vpop.xlane.xlu0 %2848
  %v2850 = vsel %vm885, %v2707, -inf
  %2851 = vmax.xlane.f32.xlu0 %v2850
  %v2852 = vpop.xlane.xlu0 %2851
  %v2853 = vsel %vm885, %v2710, -inf
  %2854 = vmax.xlane.f32.xlu0 %v2853
  %v2855 = vpop.xlane.xlu0 %2854
  %v2856 = vsel %vm885, %v2715, -inf
  %2857 = vmax.xlane.f32.xlu0 %v2856
  %v2858 = vpop.xlane.xlu0 %2857
  %v2859 = vsel %vm885, %v2718, -inf
  %2860 = vmax.xlane.f32.xlu0 %v2859
  %v2861 = vpop.xlane.xlu0 %2860
  %v2862 = vsel %vm885, %v2723, -inf
  %2863 = vmax.xlane.f32.xlu0 %v2862
  %v2864 = vpop.xlane.xlu0 %2863
  %v2865 = vsel %vm885, %v2726, -inf
  %2866 = vmax.xlane.f32.xlu0 %v2865
  %v2867 = vpop.xlane.xlu0 %2866
  %v2868 = vsel %vm885, %v2731, -inf
  %2869 = vmax.xlane.f32.xlu0 %v2868
  %v2870 = vpop.xlane.xlu0 %2869
  %v2871 = vsel %vm885, %v2734, -inf
  %2872 = vmax.xlane.f32.xlu0 %v2871
  %v2873 = vpop.xlane.xlu0 %2872
  %v2874 = vsel %vm885, %v2772, -inf
  %2875 = vmax.xlane.f32.xlu0 %v2874
  %v2876 = vpop.xlane.xlu0 %2875
  %v2877 = vsel %vm885, %v2775, -inf
  %2878 = vmax.xlane.f32.xlu0 %v2877
  %v2879 = vpop.xlane.xlu0 %2878
  %v2880 = vsel %vm885, %v2780, -inf
  %2881 = vmax.xlane.f32.xlu0 %v2880
  %v2882 = vpop.xlane.xlu0 %2881
  %v2883 = vsel %vm885, %v2783, -inf
  %2884 = vmax.xlane.f32.xlu0 %v2883
  %v2885 = vpop.xlane.xlu0 %2884
  %v2886 = vsel %vm885, %v2788, -inf
  %2887 = vmax.xlane.f32.xlu0 %v2886
  %v2888 = vpop.xlane.xlu0 %2887
  %v2889 = vsel %vm885, %v2791, -inf
  %2890 = vmax.xlane.f32.xlu0 %v2889
  %v2891 = vpop.xlane.xlu0 %2890
  %v2892 = vsel %vm885, %v2796, -inf
  %2893 = vmax.xlane.f32.xlu0 %v2892
  %v2894 = vpop.xlane.xlu0 %2893
  %v2895 = vsel %vm885, %v2799, -inf
  %2896 = vmax.xlane.f32.xlu0 %v2895
  %v2897 = vpop.xlane.xlu0 %2896
  %v2898 = vsub.f32 %v2577, %v2804
  %v2899 = vsub.f32 %v2580, %v2807
  %v2900 = vsub.f32 %v2585, %v2810
  %v2901 = vsub.f32 %v2588, %v2813
  %v2902 = vsub.f32 %v2593, %v2816
  %v2903 = vsub.f32 %v2596, %v2819
  %v2904 = vsub.f32 %v2601, %v2822
  %v2905 = vsub.f32 %v2604, %v2825
  %v2906 = vsub.f32 %v2642, %v2828
  %v2907 = vsub.f32 %v2645, %v2831
  %v2908 = vsub.f32 %v2650, %v2834
  %v2909 = vsub.f32 %v2653, %v2837
  %v2910 = vsub.f32 %v2658, %v2840
  %v2911 = vsub.f32 %v2661, %v2843
  %v2912 = vsub.f32 %v2666, %v2846
  %v2913 = vsub.f32 %v2669, %v2849
  %v2914 = vsub.f32 %v2707, %v2852
  %v2915 = vsub.f32 %v2710, %v2855
  %v2916 = vsub.f32 %v2715, %v2858
  %v2917 = vsub.f32 %v2718, %v2861
  %v2918 = vsub.f32 %v2723, %v2864
  %v2919 = vsub.f32 %v2726, %v2867
  %v2920 = vsub.f32 %v2731, %v2870
  %v2921 = vsub.f32 %v2734, %v2873
  %v2922 = vsub.f32 %v2772, %v2876
  %v2923 = vsub.f32 %v2775, %v2879
  %v2924 = vsub.f32 %v2780, %v2882
  %v2925 = vsub.f32 %v2783, %v2885
  %v2926 = vsub.f32 %v2788, %v2888
  %v2927 = vsub.f32 %v2791, %v2891
  %v2928 = vsub.f32 %v2796, %v2894
  %v2929 = vsub.f32 %v2799, %v2897
  %v2930 = vmul.f32 %v2898, 1.442695
  %v2931 = vpow.pop %v2930
  %v2932 = vmul.f32 %v2899, 1.442695
  %v2933 = vpow.pop %v2932
  %v2934 = vmul.f32 %v2900, 1.442695
  %v2935 = vpow.pop %v2934
  %v2936 = vmul.f32 %v2901, 1.442695
  %v2937 = vpow.pop %v2936
  %v2938 = vmul.f32 %v2902, 1.442695
  %v2939 = vpow.pop %v2938
  %v2940 = vmul.f32 %v2903, 1.442695
  %v2941 = vpow.pop %v2940
  %v2942 = vmul.f32 %v2904, 1.442695
  %v2943 = vpow.pop %v2942
  %v2944 = vmul.f32 %v2905, 1.442695
  %v2945 = vpow.pop %v2944
  %v2946 = vmul.f32 %v2906, 1.442695
  %v2947 = vpow.pop %v2946
  %v2948 = vmul.f32 %v2907, 1.442695
  %v2949 = vpow.pop %v2948
  %v2950 = vmul.f32 %v2908, 1.442695
  %v2951 = vpow.pop %v2950
  %v2952 = vmul.f32 %v2909, 1.442695
  %v2953 = vpow.pop %v2952
  %v2954 = vmul.f32 %v2910, 1.442695
  %v2955 = vpow.pop %v2954
  %v2956 = vmul.f32 %v2911, 1.442695
  %v2957 = vpow.pop %v2956
  %v2958 = vmul.f32 %v2912, 1.442695
  %v2959 = vpow.pop %v2958
  %v2960 = vmul.f32 %v2913, 1.442695
  %v2961 = vpow.pop %v2960
  %v2962 = vmul.f32 %v2914, 1.442695
  %v2963 = vpow.pop %v2962
  %v2964 = vmul.f32 %v2915, 1.442695
  %v2965 = vpow.pop %v2964
  %v2966 = vmul.f32 %v2916, 1.442695
  %v2967 = vpow.pop %v2966
  %v2968 = vmul.f32 %v2917, 1.442695
  %v2969 = vpow.pop %v2968
  %v2970 = vmul.f32 %v2918, 1.442695
  %v2971 = vpow.pop %v2970
  %v2972 = vmul.f32 %v2919, 1.442695
  %v2973 = vpow.pop %v2972
  %v2974 = vmul.f32 %v2920, 1.442695
  %v2975 = vpow.pop %v2974
  %v2976 = vmul.f32 %v2921, 1.442695
  %v2977 = vpow.pop %v2976
  %v2978 = vmul.f32 %v2922, 1.442695
  %v2979 = vpow.pop %v2978
  %v2980 = vmul.f32 %v2923, 1.442695
  %v2981 = vpow.pop %v2980
  %v2982 = vmul.f32 %v2924, 1.442695
  %v2983 = vpow.pop %v2982
  %v2984 = vmul.f32 %v2925, 1.442695
  %v2985 = vpow.pop %v2984
  %v2986 = vmul.f32 %v2926, 1.442695
  %v2987 = vpow.pop %v2986
  %v2988 = vmul.f32 %v2927, 1.442695
  %v2989 = vpow.pop %v2988
  %v2990 = vmul.f32 %v2928, 1.442695
  %v2991 = vpow.pop %v2990
  %v2992 = vmul.f32 %v2929, 1.442695
  %v2993 = vpow.pop %v2992
  %v2994 = vpack.c.bf16 %v2933, %v2931
  %v2995 = vpack.c.bf16 %v2937, %v2935
  %v2996 = vpack.c.bf16 %v2941, %v2939
  %v2997 = vpack.c.bf16 %v2945, %v2943
  %v2998 = vpack.c.bf16 %v2949, %v2947
  %v2999 = vpack.c.bf16 %v2953, %v2951
  %v3000 = vpack.c.bf16 %v2957, %v2955
  %v3001 = vpack.c.bf16 %v2961, %v2959
  %v3002 = vpack.c.bf16 %v2965, %v2963
  %v3003 = vpack.c.bf16 %v2969, %v2967
  %v3004 = vpack.c.bf16 %v2973, %v2971
  %v3005 = vpack.c.bf16 %v2977, %v2975
  %v3006 = vpack.c.bf16 %v2981, %v2979
  %v3007 = vpack.c.bf16 %v2985, %v2983
  %v3008 = vpack.c.bf16 %v2989, %v2987
  %v3009 = vpack.c.bf16 %v2993, %v2991
  %v3011 = vsel %vm885, %v2994, 0
  %v3014 = vsel %vm885, %v2995, 0
  %v3017 = vsel %vm885, %v2996, 0
  %v3020 = vsel %vm885, %v2997, 0
  %3022 = vmatprep.subr.bf16.mxu0 0
  %3023 = vmatpush1.bf16.msra.mxu0 %v2526
  %3024 = vmatprep.subr.bf16.mxu0 0
  %3025 = vmatpush1.bf16.msra.mxu0 %v2527
  %3026 = vmatprep.subr.bf16.mxu0 0
  %3027 = vmatpush1.bf16.msra.mxu0 %v2528
  %3028 = vmatprep.subr.bf16.mxu0 0
  %3029 = vmatpush1.bf16.msra.mxu0 %v2529
  %3030 = vmatprep.subr.bf16.mxu0 0
  %3031 = vmatpush1.bf16.msra.mxu0 0
  %3032 = vmatprep.subr.bf16.mxu0 0
  %3033 = vmatpush1.bf16.msra.mxu0 0
  %3034 = vmatprep.subr.bf16.mxu0 0
  %3035 = vmatpush1.bf16.msra.mxu0 0
  %3036 = vmatprep.subr.bf16.mxu0 0
  %3037 = vmatpush1.bf16.msra.mxu0 0
  %3038 = vmatprep.subr.bf16.mxu0 0
  %3039 = vmatpush1.bf16.msra.mxu0 0
  %3040 = vmatprep.subr.bf16.mxu0 0
  %3041 = vmatpush1.bf16.msra.mxu0 0
  %3042 = vmatprep.subr.bf16.mxu0 0
  %3043 = vmatpush1.bf16.msra.mxu0 0
  %3044 = vmatprep.subr.bf16.mxu0 0
  %3045 = vmatpush1.bf16.msra.mxu0 0
  %3046 = vmatprep.subr.bf16.mxu0 0
  %3047 = vmatpush1.bf16.msra.mxu0 0
  %3048 = vmatprep.subr.bf16.mxu0 0
  %3049 = vmatpush1.bf16.msra.mxu0 0
  %3050 = vmatprep.subr.bf16.mxu0 0
  %3051 = vmatpush1.bf16.msra.mxu0 0
  %3052 = vmatprep.subr.bf16.mxu0 0
  %3053 = vmatpush1.bf16.msra.mxu0 0
  %3054 = vmatprep.mubr.bf16.mxu0 0
  %3055 = vmatmul.mubr.bf16.gmra.mrb[0].mxu0 %v3011
  %v3056 = vpop.f32.mrb[0].mxu0
  %v3057 = vadd.f32 0.0, %v3056
  %v3058 = vpop.f32.mrb[0].mxu0
  %v3059 = vpop.f32.mrb[0].mxu0
  %v3060 = vadd.f32 0.0, %v3059
  %v3061 = vpop.f32.mrb[0].mxu0
  %3062 = vmatprep.mubr.bf16.mxu0 0
  %3063 = vmatmul.mubr.bf16.gmra.mrb[0].mxu0 %v3014
  %v3064 = vpop.f32.mrb[0].mxu0
  %v3065 = vadd.f32 0.0, %v3064
  %v3066 = vpop.f32.mrb[0].mxu0
  %v3067 = vpop.f32.mrb[0].mxu0
  %v3068 = vadd.f32 0.0, %v3067
  %v3069 = vpop.f32.mrb[0].mxu0
  %3070 = vmatprep.mubr.bf16.mxu0 0
  %3071 = vmatmul.mubr.bf16.gmra.mrb[0].mxu0 %v3017
  %v3072 = vpop.f32.mrb[0].mxu0
  %v3073 = vadd.f32 0.0, %v3072
  %v3074 = vpop.f32.mrb[0].mxu0
  %v3075 = vpop.f32.mrb[0].mxu0
  %v3076 = vadd.f32 0.0, %v3075
  %v3077 = vpop.f32.mrb[0].mxu0
  %3078 = vmatprep.mubr.bf16.mxu0 0
  %3079 = vmatmul.mubr.bf16.gmra.mrb[0].mxu0 %v3020
  %v3080 = vpop.f32.mrb[0].mxu0
  %v3081 = vadd.f32 0.0, %v3080
  %v3082 = vpop.f32.mrb[0].mxu0
  %v3083 = vpop.f32.mrb[0].mxu0
  %v3084 = vadd.f32 0.0, %v3083
  %v3085 = vpop.f32.mrb[0].mxu0
  %3086 = vdwg.mxu0
  %v3088 = vsel %vm885, %v2998, 0
  %v3091 = vsel %vm885, %v2999, 0
  %v3094 = vsel %vm885, %v3000, 0
  %v3097 = vsel %vm885, %v3001, 0
  %3099 = vmatprep.subr.bf16.mxu0 0
  %3100 = vmatpush1.bf16.msra.mxu0 %v2530
  %3101 = vmatprep.subr.bf16.mxu0 0
  %3102 = vmatpush1.bf16.msra.mxu0 %v2531
  %3103 = vmatprep.subr.bf16.mxu0 0
  %3104 = vmatpush1.bf16.msra.mxu0 %v2532
  %3105 = vmatprep.subr.bf16.mxu0 0
  %3106 = vmatpush1.bf16.msra.mxu0 %v2533
  %3107 = vmatprep.subr.bf16.mxu0 0
  %3108 = vmatpush1.bf16.msra.mxu0 0
  %3109 = vmatprep.subr.bf16.mxu0 0
  %3110 = vmatpush1.bf16.msra.mxu0 0
  %3111 = vmatprep.subr.bf16.mxu0 0
  %3112 = vmatpush1.bf16.msra.mxu0 0
  %3113 = vmatprep.subr.bf16.mxu0 0
  %3114 = vmatpush1.bf16.msra.mxu0 0
  %3115 = vmatprep.subr.bf16.mxu0 0
  %3116 = vmatpush1.bf16.msra.mxu0 0
  %3117 = vmatprep.subr.bf16.mxu0 0
  %3118 = vmatpush1.bf16.msra.mxu0 0
  %3119 = vmatprep.subr.bf16.mxu0 0
  %3120 = vmatpush1.bf16.msra.mxu0 0
  %3121 = vmatprep.subr.bf16.mxu0 0
  %3122 = vmatpush1.bf16.msra.mxu0 0
  %3123 = vmatprep.subr.bf16.mxu0 0
  %3124 = vmatpush1.bf16.msra.mxu0 0
  %3125 = vmatprep.subr.bf16.mxu0 0
  %3126 = vmatpush1.bf16.msra.mxu0 0
  %3127 = vmatprep.subr.bf16.mxu0 0
  %3128 = vmatpush1.bf16.msra.mxu0 0
  %3129 = vmatprep.subr.bf16.mxu0 0
  %3130 = vmatpush1.bf16.msra.mxu0 0
  %3131 = vmatprep.mubr.bf16.mxu0 0
  %3132 = vmatmul.mubr.bf16.gmra.mrb[0].mxu0 %v3088
  %v3133 = vpop.f32.mrb[0].mxu0
  %v3134 = vadd.f32 0.0, %v3133
  %v3135 = vpop.f32.mrb[0].mxu0
  %v3136 = vpop.f32.mrb[0].mxu0
  %v3137 = vadd.f32 0.0, %v3136
  %v3138 = vpop.f32.mrb[0].mxu0
  %3139 = vmatprep.mubr.bf16.mxu0 0
  %3140 = vmatmul.mubr.bf16.gmra.mrb[0].mxu0 %v3091
  %v3141 = vpop.f32.mrb[0].mxu0
  %v3142 = vadd.f32 0.0, %v3141
  %v3143 = vpop.f32.mrb[0].mxu0
  %v3144 = vpop.f32.mrb[0].mxu0
  %v3145 = vadd.f32 0.0, %v3144
  %v3146 = vpop.f32.mrb[0].mxu0
  %3147 = vmatprep.mubr.bf16.mxu0 0
  %3148 = vmatmul.mubr.bf16.gmra.mrb[0].mxu0 %v3094
  %v3149 = vpop.f32.mrb[0].mxu0
  %v3150 = vadd.f32 0.0, %v3149
  %v3151 = vpop.f32.mrb[0].mxu0
  %v3152 = vpop.f32.mrb[0].mxu0
  %v3153 = vadd.f32 0.0, %v3152
  %v3154 = vpop.f32.mrb[0].mxu0
  %3155 = vmatprep.mubr.bf16.mxu0 0
  %3156 = vmatmul.mubr.bf16.gmra.mrb[0].mxu0 %v3097
  %v3157 = vpop.f32.mrb[0].mxu0
  %v3158 = vadd.f32 0.0, %v3157
  %v3159 = vpop.f32.mrb[0].mxu0
  %v3160 = vpop.f32.mrb[0].mxu0
  %v3161 = vadd.f32 0.0, %v3160
  %v3162 = vpop.f32.mrb[0].mxu0
  %3163 = vdwg.mxu0
  %v3165 = vsel %vm885, %v3002, 0
  %v3168 = vsel %vm885, %v3003, 0
  %v3171 = vsel %vm885, %v3004, 0
  %v3174 = vsel %vm885, %v3005, 0
  %3176 = vmatprep.subr.bf16.mxu0 0
  %3177 = vmatpush1.bf16.msra.mxu0 %v2534
  %3178 = vmatprep.subr.bf16.mxu0 0
  %3179 = vmatpush1.bf16.msra.mxu0 %v2535
  %3180 = vmatprep.subr.bf16.mxu0 0
  %3181 = vmatpush1.bf16.msra.mxu0 %v2536
  %3182 = vmatprep.subr.bf16.mxu0 0
  %3183 = vmatpush1.bf16.msra.mxu0 %v2537
  %3184 = vmatprep.subr.bf16.mxu0 0
  %3185 = vmatpush1.bf16.msra.mxu0 0
  %3186 = vmatprep.subr.bf16.mxu0 0
  %3187 = vmatpush1.bf16.msra.mxu0 0
  %3188 = vmatprep.subr.bf16.mxu0 0
  %3189 = vmatpush1.bf16.msra.mxu0 0
  %3190 = vmatprep.subr.bf16.mxu0 0
  %3191 = vmatpush1.bf16.msra.mxu0 0
  %3192 = vmatprep.subr.bf16.mxu0 0
  %3193 = vmatpush1.bf16.msra.mxu0 0
  %3194 = vmatprep.subr.bf16.mxu0 0
  %3195 = vmatpush1.bf16.msra.mxu0 0
  %3196 = vmatprep.subr.bf16.mxu0 0
  %3197 = vmatpush1.bf16.msra.mxu0 0
  %3198 = vmatprep.subr.bf16.mxu0 0
  %3199 = vmatpush1.bf16.msra.mxu0 0
  %3200 = vmatprep.subr.bf16.mxu0 0
  %3201 = vmatpush1.bf16.msra.mxu0 0
  %3202 = vmatprep.subr.bf16.mxu0 0
  %3203 = vmatpush1.bf16.msra.mxu0 0
  %3204 = vmatprep.subr.bf16.mxu0 0
  %3205 = vmatpush1.bf16.msra.mxu0 0
  %3206 = vmatprep.subr.bf16.mxu0 0
  %3207 = vmatpush1.bf16.msra.mxu0 0
  %3208 = vmatprep.mubr.bf16.mxu0 0
  %3209 = vmatmul.mubr.bf16.gmra.mrb[0].mxu0 %v3165
  %v3210 = vpop.f32.mrb[0].mxu0
  %v3211 = vadd.f32 0.0, %v3210
  %v3212 = vpop.f32.mrb[0].mxu0
  %v3213 = vpop.f32.mrb[0].mxu0
  %v3214 = vadd.f32 0.0, %v3213
  %v3215 = vpop.f32.mrb[0].mxu0
  %3216 = vmatprep.mubr.bf16.mxu0 0
  %3217 = vmatmul.mubr.bf16.gmra.mrb[0].mxu0 %v3168
  %v3218 = vpop.f32.mrb[0].mxu0
  %v3219 = vadd.f32 0.0, %v3218
  %v3220 = vpop.f32.mrb[0].mxu0
  %v3221 = vpop.f32.mrb[0].mxu0
  %v3222 = vadd.f32 0.0, %v3221
  %v3223 = vpop.f32.mrb[0].mxu0
  %3224 = vmatprep.mubr.bf16.mxu0 0
  %3225 = vmatmul.mubr.bf16.gmra.mrb[0].mxu0 %v3171
  %v3226 = vpop.f32.mrb[0].mxu0
  %v3227 = vadd.f32 0.0, %v3226
  %v3228 = vpop.f32.mrb[0].mxu0
  %v3229 = vpop.f32.mrb[0].mxu0
  %v3230 = vadd.f32 0.0, %v3229
  %v3231 = vpop.f32.mrb[0].mxu0
  %3232 = vmatprep.mubr.bf16.mxu0 0
  %3233 = vmatmul.mubr.bf16.gmra.mrb[0].mxu0 %v3174
  %v3234 = vpop.f32.mrb[0].mxu0
  %v3235 = vadd.f32 0.0, %v3234
  %v3236 = vpop.f32.mrb[0].mxu0
  %v3237 = vpop.f32.mrb[0].mxu0
  %v3238 = vadd.f32 0.0, %v3237
  %v3239 = vpop.f32.mrb[0].mxu0
  %3240 = vdwg.mxu0
  %v3242 = vsel %vm885, %v3006, 0
  %v3245 = vsel %vm885, %v3007, 0
  %v3248 = vsel %vm885, %v3008, 0
  %v3251 = vsel %vm885, %v3009, 0
  %3253 = vmatprep.subr.bf16.mxu0 0
  %3254 = vmatpush1.bf16.msra.mxu0 %v2538
  %3255 = vmatprep.subr.bf16.mxu0 0
  %3256 = vmatpush1.bf16.msra.mxu0 %v2539
  %3257 = vmatprep.subr.bf16.mxu0 0
  %3258 = vmatpush1.bf16.msra.mxu0 %v2540
  %3259 = vmatprep.subr.bf16.mxu0 0
  %3260 = vmatpush1.bf16.msra.mxu0 %v2541
  %3261 = vmatprep.subr.bf16.mxu0 0
  %3262 = vmatpush1.bf16.msra.mxu0 0
  %3263 = vmatprep.subr.bf16.mxu0 0
  %3264 = vmatpush1.bf16.msra.mxu0 0
  %3265 = vmatprep.subr.bf16.mxu0 0
  %3266 = vmatpush1.bf16.msra.mxu0 0
  %3267 = vmatprep.subr.bf16.mxu0 0
  %3268 = vmatpush1.bf16.msra.mxu0 0
  %3269 = vmatprep.subr.bf16.mxu0 0
  %3270 = vmatpush1.bf16.msra.mxu0 0
  %3271 = vmatprep.subr.bf16.mxu0 0
  %3272 = vmatpush1.bf16.msra.mxu0 0
  %3273 = vmatprep.subr.bf16.mxu0 0
  %3274 = vmatpush1.bf16.msra.mxu0 0
  %3275 = vmatprep.subr.bf16.mxu0 0
  %3276 = vmatpush1.bf16.msra.mxu0 0
  %3277 = vmatprep.subr.bf16.mxu0 0
  %3278 = vmatpush1.bf16.msra.mxu0 0
  %3279 = vmatprep.subr.bf16.mxu0 0
  %3280 = vmatpush1.bf16.msra.mxu0 0
  %3281 = vmatprep.subr.bf16.mxu0 0
  %3282 = vmatpush1.bf16.msra.mxu0 0
  %3283 = vmatprep.subr.bf16.mxu0 0
  %3284 = vmatpush1.bf16.msra.mxu0 0
  %3285 = vmatprep.mubr.bf16.mxu0 0
  %3286 = vmatmul.mubr.bf16.gmra.mrb[0].mxu0 %v3242
  %v3287 = vpop.f32.mrb[0].mxu0
  %v3288 = vadd.f32 0.0, %v3287
  %v3289 = vpop.f32.mrb[0].mxu0
  %v3290 = vpop.f32.mrb[0].mxu0
  %v3291 = vadd.f32 0.0, %v3290
  %v3292 = vpop.f32.mrb[0].mxu0
  %3293 = vmatprep.mubr.bf16.mxu0 0
  %3294 = vmatmul.mubr.bf16.gmra.mrb[0].mxu0 %v3245
  %v3295 = vpop.f32.mrb[0].mxu0
  %v3296 = vadd.f32 0.0, %v3295
  %v3297 = vpop.f32.mrb[0].mxu0
  %v3298 = vpop.f32.mrb[0].mxu0
  %v3299 = vadd.f32 0.0, %v3298
  %v3300 = vpop.f32.mrb[0].mxu0
  %3301 = vmatprep.mubr.bf16.mxu0 0
  %3302 = vmatmul.mubr.bf16.gmra.mrb[0].mxu0 %v3248
  %v3303 = vpop.f32.mrb[0].mxu0
  %v3304 = vadd.f32 0.0, %v3303
  %v3305 = vpop.f32.mrb[0].mxu0
  %v3306 = vpop.f32.mrb[0].mxu0
  %v3307 = vadd.f32 0.0, %v3306
  %v3308 = vpop.f32.mrb[0].mxu0
  %3309 = vmatprep.mubr.bf16.mxu0 0
  %3310 = vmatmul.mubr.bf16.gmra.mrb[0].mxu0 %v3251
  %v3311 = vpop.f32.mrb[0].mxu0
  %v3312 = vadd.f32 0.0, %v3311
  %v3313 = vpop.f32.mrb[0].mxu0
  %v3314 = vpop.f32.mrb[0].mxu0
  %v3315 = vadd.f32 0.0, %v3314
  %v3316 = vpop.f32.mrb[0].mxu0
  %3317 = vdwg.mxu0
  %v3318 = vrcp.pop %v3057
  %v3319 = vrcp.pop %v3060
  %v3320 = vrcp.pop %v3065
  %v3321 = vrcp.pop %v3068
  %v3322 = vrcp.pop %v3073
  %v3323 = vrcp.pop %v3076
  %v3324 = vrcp.pop %v3081
  %v3325 = vrcp.pop %v3084
  %v3326 = vrcp.pop %v3134
  %v3327 = vrcp.pop %v3137
  %v3328 = vrcp.pop %v3142
  %v3329 = vrcp.pop %v3145
  %v3330 = vrcp.pop %v3150
  %v3331 = vrcp.pop %v3153
  %v3332 = vrcp.pop %v3158
  %v3333 = vrcp.pop %v3161
  %v3334 = vrcp.pop %v3211
  %v3335 = vrcp.pop %v3214
  %v3336 = vrcp.pop %v3219
  %v3337 = vrcp.pop %v3222
  %v3338 = vrcp.pop %v3227
  %v3339 = vrcp.pop %v3230
  %v3340 = vrcp.pop %v3235
  %v3341 = vrcp.pop %v3238
  %v3342 = vrcp.pop %v3288
  %v3343 = vrcp.pop %v3291
  %v3344 = vrcp.pop %v3296
  %v3345 = vrcp.pop %v3299
  %v3346 = vrcp.pop %v3304
  %v3347 = vrcp.pop %v3307
  %v3348 = vrcp.pop %v3312
  %v3349 = vrcp.pop %v3315
  %3351 = vset.pattern.permute.xlu0 32
  %3352 = vperm.xlu0 %3351, %v3318
  %v3353 = vpop.permute.xlu0 %3352
  %3356 = vset.pattern.permute.xlu0 32
  %3357 = vperm.xlu0 %3356, %v3319
  %v3358 = vpop.permute.xlu0 %3357
  %3361 = vset.pattern.permute.xlu0 32
  %3362 = vperm.xlu0 %3361, %v3320
  %v3363 = vpop.permute.xlu0 %3362
  %3366 = vset.pattern.permute.xlu0 32
  %3367 = vperm.xlu0 %3366, %v3321
  %v3368 = vpop.permute.xlu0 %3367
  %3371 = vset.pattern.permute.xlu0 32
  %3372 = vperm.xlu0 %3371, %v3322
  %v3373 = vpop.permute.xlu0 %3372
  %3376 = vset.pattern.permute.xlu0 32
  %3377 = vperm.xlu0 %3376, %v3323
  %v3378 = vpop.permute.xlu0 %3377
  %3381 = vset.pattern.permute.xlu0 32
  %3382 = vperm.xlu0 %3381, %v3324
  %v3383 = vpop.permute.xlu0 %3382
  %3386 = vset.pattern.permute.xlu0 32
  %3387 = vperm.xlu0 %3386, %v3325
  %v3388 = vpop.permute.xlu0 %3387
  %3391 = vset.pattern.permute.xlu0 32
  %3392 = vperm.xlu0 %3391, %v3326
  %v3393 = vpop.permute.xlu0 %3392
  %3396 = vset.pattern.permute.xlu0 32
  %3397 = vperm.xlu0 %3396, %v3327
  %v3398 = vpop.permute.xlu0 %3397
  %3401 = vset.pattern.permute.xlu0 32
  %3402 = vperm.xlu0 %3401, %v3328
  %v3403 = vpop.permute.xlu0 %3402
  %3406 = vset.pattern.permute.xlu0 32
  %3407 = vperm.xlu0 %3406, %v3329
  %v3408 = vpop.permute.xlu0 %3407
  %3411 = vset.pattern.permute.xlu0 32
  %3412 = vperm.xlu0 %3411, %v3330
  %v3413 = vpop.permute.xlu0 %3412
  %3416 = vset.pattern.permute.xlu0 32
  %3417 = vperm.xlu0 %3416, %v3331
  %v3418 = vpop.permute.xlu0 %3417
  %3421 = vset.pattern.permute.xlu0 32
  %3422 = vperm.xlu0 %3421, %v3332
  %v3423 = vpop.permute.xlu0 %3422
  %3426 = vset.pattern.permute.xlu0 32
  %3427 = vperm.xlu0 %3426, %v3333
  %v3428 = vpop.permute.xlu0 %3427
  %3431 = vset.pattern.permute.xlu0 32
  %3432 = vperm.xlu0 %3431, %v3334
  %v3433 = vpop.permute.xlu0 %3432
  %3436 = vset.pattern.permute.xlu0 32
  %3437 = vperm.xlu0 %3436, %v3335
  %v3438 = vpop.permute.xlu0 %3437
  %3441 = vset.pattern.permute.xlu0 32
  %3442 = vperm.xlu0 %3441, %v3336
  %v3443 = vpop.permute.xlu0 %3442
  %3446 = vset.pattern.permute.xlu0 32
  %3447 = vperm.xlu0 %3446, %v3337
  %v3448 = vpop.permute.xlu0 %3447
  %3451 = vset.pattern.permute.xlu0 32
  %3452 = vperm.xlu0 %3451, %v3338
  %v3453 = vpop.permute.xlu0 %3452
  %3456 = vset.pattern.permute.xlu0 32
  %3457 = vperm.xlu0 %3456, %v3339
  %v3458 = vpop.permute.xlu0 %3457
  %3461 = vset.pattern.permute.xlu0 32
  %3462 = vperm.xlu0 %3461, %v3340
  %v3463 = vpop.permute.xlu0 %3462
  %3466 = vset.pattern.permute.xlu0 32
  %3467 = vperm.xlu0 %3466, %v3341
  %v3468 = vpop.permute.xlu0 %3467
  %3471 = vset.pattern.permute.xlu0 32
  %3472 = vperm.xlu0 %3471, %v3342
  %v3473 = vpop.permute.xlu0 %3472
  %3476 = vset.pattern.permute.xlu0 32
  %3477 = vperm.xlu0 %3476, %v3343
  %v3478 = vpop.permute.xlu0 %3477
  %3481 = vset.pattern.permute.xlu0 32
  %3482 = vperm.xlu0 %3481, %v3344
  %v3483 = vpop.permute.xlu0 %3482
  %3486 = vset.pattern.permute.xlu0 32
  %3487 = vperm.xlu0 %3486, %v3345
  %v3488 = vpop.permute.xlu0 %3487
  %3491 = vset.pattern.permute.xlu0 32
  %3492 = vperm.xlu0 %3491, %v3346
  %v3493 = vpop.permute.xlu0 %3492
  %3496 = vset.pattern.permute.xlu0 32
  %3497 = vperm.xlu0 %3496, %v3347
  %v3498 = vpop.permute.xlu0 %3497
  %3501 = vset.pattern.permute.xlu0 32
  %3502 = vperm.xlu0 %3501, %v3348
  %v3503 = vpop.permute.xlu0 %3502
  %3506 = vset.pattern.permute.xlu0 32
  %3507 = vperm.xlu0 %3506, %v3349
  %v3508 = vpop.permute.xlu0 %3507
  %v3510 = vmul.f32 %v3057, %v3353
  %v3511 = vmul.f32 %v3060, %v3358
  %v3512 = vmul.f32 %v3065, %v3363
  %v3513 = vmul.f32 %v3068, %v3368
  %v3514 = vmul.f32 %v3073, %v3373
  %v3515 = vmul.f32 %v3076, %v3378
  %v3516 = vmul.f32 %v3081, %v3383
  %v3517 = vmul.f32 %v3084, %v3388
  %v3518 = vmul.f32 %v3134, %v3393
  %v3519 = vmul.f32 %v3137, %v3398
  %v3520 = vmul.f32 %v3142, %v3403
  %v3521 = vmul.f32 %v3145, %v3408
  %v3522 = vmul.f32 %v3150, %v3413
  %v3523 = vmul.f32 %v3153, %v3418
  %v3524 = vmul.f32 %v3158, %v3423
  %v3525 = vmul.f32 %v3161, %v3428
  %v3526 = vmul.f32 %v3211, %v3433
  %v3527 = vmul.f32 %v3214, %v3438
  %v3528 = vmul.f32 %v3219, %v3443
  %v3529 = vmul.f32 %v3222, %v3448
  %v3530 = vmul.f32 %v3227, %v3453
  %v3531 = vmul.f32 %v3230, %v3458
  %v3532 = vmul.f32 %v3235, %v3463
  %v3533 = vmul.f32 %v3238, %v3468
  %v3534 = vmul.f32 %v3288, %v3473
  %v3535 = vmul.f32 %v3291, %v3478
  %v3536 = vmul.f32 %v3296, %v3483
  %v3537 = vmul.f32 %v3299, %v3488
  %v3538 = vmul.f32 %v3304, %v3493
  %v3539 = vmul.f32 %v3307, %v3498
  %v3540 = vmul.f32 %v3312, %v3503
  %v3541 = vmul.f32 %v3315, %v3508
  %v3542 = vpack.c.bf16 %v3511, %v3510
  %v3543 = vpack.c.bf16 %v3513, %v3512
  %v3544 = vpack.c.bf16 %v3515, %v3514
  %v3545 = vpack.c.bf16 %v3517, %v3516
  %v3546 = vpack.c.bf16 %v3519, %v3518
  %v3547 = vpack.c.bf16 %v3521, %v3520
  %v3548 = vpack.c.bf16 %v3523, %v3522
  %v3549 = vpack.c.bf16 %v3525, %v3524
  %v3550 = vpack.c.bf16 %v3527, %v3526
  %v3551 = vpack.c.bf16 %v3529, %v3528
  %v3552 = vpack.c.bf16 %v3531, %v3530
  %v3553 = vpack.c.bf16 %v3533, %v3532
  %v3554 = vpack.c.bf16 %v3535, %v3534
  %v3555 = vpack.c.bf16 %v3537, %v3536
  %v3556 = vpack.c.bf16 %v3539, %v3538
  %v3557 = vpack.c.bf16 %v3541, %v3540
  %v3558 = vld [vmem:[%s2] sm:$0xf]
  %v3559 = vld [vmem:[%s2 + $0x4] sm:$0xf]
  %v3560 = vld [vmem:[%s2 + $0x8] sm:$0xf]
  %v3561 = vld [vmem:[%s2 + $0xc] sm:$0xf]
  %v3562 = vld [vmem:[%s2 + $0x10] sm:$0xf]
  %v3563 = vld [vmem:[%s2 + $0x14] sm:$0xf]
  %v3564 = vld [vmem:[%s2 + $0x18] sm:$0xf]
  %v3565 = vld [vmem:[%s2 + $0x1c] sm:$0xf]
  %v3566 = vld [vmem:[%s2 + $0x20] sm:$0xf]
  %v3567 = vld [vmem:[%s2 + $0x24] sm:$0xf]
  %v3568 = vld [vmem:[%s2 + $0x28] sm:$0xf]
  %v3569 = vld [vmem:[%s2 + $0x2c] sm:$0xf]
  %v3570 = vld [vmem:[%s2 + $0x30] sm:$0xf]
  %v3571 = vld [vmem:[%s2 + $0x34] sm:$0xf]
  %v3572 = vld [vmem:[%s2 + $0x38] sm:$0xf]
  %v3573 = vld [vmem:[%s2 + $0x3c] sm:$0xf]
  %v3574 = vld [vmem:[%s1931] sm:$0xff]
  %v3575 = vld [vmem:[%s1931 + $0x10] sm:$0xff]
  %v3576 = vld [vmem:[%s1931 + $0x20] sm:$0xff]
  %v3577 = vld [vmem:[%s1931 + $0x30] sm:$0xff]
  %v3578 = vld [vmem:[%s1931 + $0x40] sm:$0xff]
  %v3579 = vld [vmem:[%s1931 + $0x50] sm:$0xff]
  %v3580 = vld [vmem:[%s1931 + $0x60] sm:$0xff]
  %v3581 = vld [vmem:[%s1931 + $0x70] sm:$0xff]
  %v3582 = vld [vmem:[%s1931 + $0x80] sm:$0xff]
  %v3583 = vld [vmem:[%s1931 + $0x90] sm:$0xff]
  %v3584 = vld [vmem:[%s1931 + $0xa0] sm:$0xff]
  %v3585 = vld [vmem:[%s1931 + $0xb0] sm:$0xff]
  %v3586 = vld [vmem:[%s1931 + $0xc0] sm:$0xff]
  %v3587 = vld [vmem:[%s1931 + $0xd0] sm:$0xff]
  %v3588 = vld [vmem:[%s1931 + $0xe0] sm:$0xff]
  %v3589 = vld [vmem:[%s1931 + $0xf0] sm:$0xff]
  %v3590 = vld [vmem:[%s1931 + $0x100] sm:$0xff]
  %v3591 = vld [vmem:[%s1931 + $0x110] sm:$0xff]
  %v3592 = vld [vmem:[%s1931 + $0x120] sm:$0xff]
  %v3593 = vld [vmem:[%s1931 + $0x130] sm:$0xff]
  %v3594 = vld [vmem:[%s1931 + $0x140] sm:$0xff]
  %v3595 = vld [vmem:[%s1931 + $0x150] sm:$0xff]
  %v3596 = vld [vmem:[%s1931 + $0x160] sm:$0xff]
  %v3597 = vld [vmem:[%s1931 + $0x170] sm:$0xff]
  %v3598 = vld [vmem:[%s1931 + $0x180] sm:$0xff]
  %v3599 = vld [vmem:[%s1931 + $0x190] sm:$0xff]
  %v3600 = vld [vmem:[%s1931 + $0x1a0] sm:$0xff]
  %v3601 = vld [vmem:[%s1931 + $0x1b0] sm:$0xff]
  %v3602 = vld [vmem:[%s1931 + $0x1c0] sm:$0xff]
  %v3603 = vld [vmem:[%s1931 + $0x1d0] sm:$0xff]
  %v3604 = vld [vmem:[%s1931 + $0x1e0] sm:$0xff]
  %v3605 = vld [vmem:[%s1931 + $0x1f0] sm:$0xff]
  %v3622 = vunpack.c.l.b16 %v3558
  %v3623 = vunpack.c.l.b16 %v3559
  %v3624 = vunpack.c.l.b16 %v3560
  %v3625 = vunpack.c.l.b16 %v3561
  %v3626 = vunpack.c.l.b16 %v3562
  %v3627 = vunpack.c.l.b16 %v3563
  %v3628 = vunpack.c.l.b16 %v3564
  %v3629 = vunpack.c.l.b16 %v3565
  %v3630 = vunpack.c.l.b16 %v3566
  %v3631 = vunpack.c.l.b16 %v3567
  %v3632 = vunpack.c.l.b16 %v3568
  %v3633 = vunpack.c.l.b16 %v3569
  %v3634 = vunpack.c.l.b16 %v3570
  %v3635 = vunpack.c.l.b16 %v3571
  %v3636 = vunpack.c.l.b16 %v3572
  %v3637 = vunpack.c.l.b16 %v3573
  %v3638 = vpack.c.b16 %v3623, %v3622
  %v3639 = vpack.c.b16 %v3625, %v3624
  %v3640 = vpack.c.b16 %v3627, %v3626
  %v3641 = vpack.c.b16 %v3629, %v3628
  %v3642 = vpack.c.b16 %v3631, %v3630
  %v3643 = vpack.c.b16 %v3633, %v3632
  %v3644 = vpack.c.b16 %v3635, %v3634
  %v3645 = vpack.c.b16 %v3637, %v3636
  %3654 = vmatprep.subr.bf16.mxu0 0
  %3655 = vmatpush1.bf16.msra.mxu0 %v3638
  %3656 = vmatprep.subr.bf16.mxu0 0
  %3657 = vmatpush1.bf16.msra.mxu0 %v3639
  %3658 = vmatprep.subr.bf16.mxu0 0
  %3659 = vmatpush1.bf16.msra.mxu0 %v3640
  %3660 = vmatprep.subr.bf16.mxu0 0
  %3661 = vmatpush1.bf16.msra.mxu0 %v3641
  %3662 = vmatprep.subr.bf16.mxu0 0
  %3663 = vmatpush1.bf16.msra.mxu0 %v3642
  %3664 = vmatprep.subr.bf16.mxu0 0
  %3665 = vmatpush1.bf16.msra.mxu0 %v3643
  %3666 = vmatprep.subr.bf16.mxu0 0
  %3667 = vmatpush1.bf16.msra.mxu0 %v3644
  %3668 = vmatprep.subr.bf16.mxu0 0
  %3669 = vmatpush1.bf16.msra.mxu0 %v3645
  %3670 = vmatprep.subr.bf16.mxu0 0
  %3671 = vmatpush1.bf16.msra.mxu0 0
  %3672 = vmatprep.subr.bf16.mxu0 0
  %3673 = vmatpush1.bf16.msra.mxu0 0
  %3674 = vmatprep.subr.bf16.mxu0 0
  %3675 = vmatpush1.bf16.msra.mxu0 0
  %3676 = vmatprep.subr.bf16.mxu0 0
  %3677 = vmatpush1.bf16.msra.mxu0 0
  %3678 = vmatprep.subr.bf16.mxu0 0
  %3679 = vmatpush1.bf16.msra.mxu0 0
  %3680 = vmatprep.subr.bf16.mxu0 0
  %3681 = vmatpush1.bf16.msra.mxu0 0
  %3682 = vmatprep.subr.bf16.mxu0 0
  %3683 = vmatpush1.bf16.msra.mxu0 0
  %3684 = vmatprep.subr.bf16.mxu0 0
  %3685 = vmatpush1.bf16.msra.mxu0 0
  %3686 = vmatprep.mubr.bf16.mxu0 0
  %3687 = vmatmul.mubr.bf16.gmra.mrb[0].mxu0 %v3542
  %v3688 = vpop.f32.mrb[0].mxu0
  %v3689 = vadd.f32 %v3574, %v3688
  %v3690 = vpop.f32.mrb[0].mxu0
  %v3691 = vpop.f32.mrb[0].mxu0
  %v3692 = vadd.f32 %v3575, %v3691
  %v3693 = vpop.f32.mrb[0].mxu0
  %3694 = vmatprep.mubr.bf16.mxu0 0
  %3695 = vmatmul.mubr.bf16.gmra.mrb[0].mxu0 %v3543
  %v3696 = vpop.f32.mrb[0].mxu0
  %v3697 = vadd.f32 %v3576, %v3696
  %v3698 = vpop.f32.mrb[0].mxu0
  %v3699 = vpop.f32.mrb[0].mxu0
  %v3700 = vadd.f32 %v3577, %v3699
  %v3701 = vpop.f32.mrb[0].mxu0
  %3702 = vmatprep.mubr.bf16.mxu0 0
  %3703 = vmatmul.mubr.bf16.gmra.mrb[0].mxu0 %v3544
  %v3704 = vpop.f32.mrb[0].mxu0
  %v3705 = vadd.f32 %v3578, %v3704
  %v3706 = vpop.f32.mrb[0].mxu0
  %v3707 = vpop.f32.mrb[0].mxu0
  %v3708 = vadd.f32 %v3579, %v3707
  %v3709 = vpop.f32.mrb[0].mxu0
  %3710 = vmatprep.mubr.bf16.mxu0 0
  %3711 = vmatmul.mubr.bf16.gmra.mrb[0].mxu0 %v3545
  %v3712 = vpop.f32.mrb[0].mxu0
  %v3713 = vadd.f32 %v3580, %v3712
  %v3714 = vpop.f32.mrb[0].mxu0
  %v3715 = vpop.f32.mrb[0].mxu0
  %v3716 = vadd.f32 %v3581, %v3715
  %v3717 = vpop.f32.mrb[0].mxu0
  %3718 = vmatprep.mubr.bf16.mxu0 0
  %3719 = vmatmul.mubr.bf16.gmra.mrb[0].mxu0 %v3546
  %v3720 = vpop.f32.mrb[0].mxu0
  %v3721 = vadd.f32 %v3582, %v3720
  %v3722 = vpop.f32.mrb[0].mxu0
  %v3723 = vpop.f32.mrb[0].mxu0
  %v3724 = vadd.f32 %v3583, %v3723
  %v3725 = vpop.f32.mrb[0].mxu0
  %3726 = vmatprep.mubr.bf16.mxu0 0
  %3727 = vmatmul.mubr.bf16.gmra.mrb[0].mxu0 %v3547
  %v3728 = vpop.f32.mrb[0].mxu0
  %v3729 = vadd.f32 %v3584, %v3728
  %v3730 = vpop.f32.mrb[0].mxu0
  %v3731 = vpop.f32.mrb[0].mxu0
  %v3732 = vadd.f32 %v3585, %v3731
  %v3733 = vpop.f32.mrb[0].mxu0
  %3734 = vmatprep.mubr.bf16.mxu0 0
  %3735 = vmatmul.mubr.bf16.gmra.mrb[0].mxu0 %v3548
  %v3736 = vpop.f32.mrb[0].mxu0
  %v3737 = vadd.f32 %v3586, %v3736
  %v3738 = vpop.f32.mrb[0].mxu0
  %v3739 = vpop.f32.mrb[0].mxu0
  %v3740 = vadd.f32 %v3587, %v3739
  %v3741 = vpop.f32.mrb[0].mxu0
  %3742 = vmatprep.mubr.bf16.mxu0 0
  %3743 = vmatmul.mubr.bf16.gmra.mrb[0].mxu0 %v3549
  %v3744 = vpop.f32.mrb[0].mxu0
  %v3745 = vadd.f32 %v3588, %v3744
  %v3746 = vpop.f32.mrb[0].mxu0
  %v3747 = vpop.f32.mrb[0].mxu0
  %v3748 = vadd.f32 %v3589, %v3747
  %v3749 = vpop.f32.mrb[0].mxu0
  %3750 = vmatprep.mubr.bf16.mxu0 0
  %3751 = vmatmul.mubr.bf16.gmra.mrb[0].mxu0 %v3550
  %v3752 = vpop.f32.mrb[0].mxu0
  %v3753 = vadd.f32 %v3590, %v3752
  %v3754 = vpop.f32.mrb[0].mxu0
  %v3755 = vpop.f32.mrb[0].mxu0
  %v3756 = vadd.f32 %v3591, %v3755
  %v3757 = vpop.f32.mrb[0].mxu0
  %3758 = vmatprep.mubr.bf16.mxu0 0
  %3759 = vmatmul.mubr.bf16.gmra.mrb[0].mxu0 %v3551
  %v3760 = vpop.f32.mrb[0].mxu0
  %v3761 = vadd.f32 %v3592, %v3760
  %v3762 = vpop.f32.mrb[0].mxu0
  %v3763 = vpop.f32.mrb[0].mxu0
  %v3764 = vadd.f32 %v3593, %v3763
  %v3765 = vpop.f32.mrb[0].mxu0
  %3766 = vmatprep.mubr.bf16.mxu0 0
  %3767 = vmatmul.mubr.bf16.gmra.mrb[0].mxu0 %v3552
  %v3768 = vpop.f32.mrb[0].mxu0
  %v3769 = vadd.f32 %v3594, %v3768
  %v3770 = vpop.f32.mrb[0].mxu0
  %v3771 = vpop.f32.mrb[0].mxu0
  %v3772 = vadd.f32 %v3595, %v3771
  %v3773 = vpop.f32.mrb[0].mxu0
  %3774 = vmatprep.mubr.bf16.mxu0 0
  %3775 = vmatmul.mubr.bf16.gmra.mrb[0].mxu0 %v3553
  %v3776 = vpop.f32.mrb[0].mxu0
  %v3777 = vadd.f32 %v3596, %v3776
  %v3778 = vpop.f32.mrb[0].mxu0
  %v3779 = vpop.f32.mrb[0].mxu0
  %v3780 = vadd.f32 %v3597, %v3779
  %v3781 = vpop.f32.mrb[0].mxu0
  %3782 = vmatprep.mubr.bf16.mxu0 0
  %3783 = vmatmul.mubr.bf16.gmra.mrb[0].mxu0 %v3554
  %v3784 = vpop.f32.mrb[0].mxu0
  %v3785 = vadd.f32 %v3598, %v3784
  %v3786 = vpop.f32.mrb[0].mxu0
  %v3787 = vpop.f32.mrb[0].mxu0
  %v3788 = vadd.f32 %v3599, %v3787
  %v3789 = vpop.f32.mrb[0].mxu0
  %3790 = vmatprep.mubr.bf16.mxu0 0
  %3791 = vmatmul.mubr.bf16.gmra.mrb[0].mxu0 %v3555
  %v3792 = vpop.f32.mrb[0].mxu0
  %v3793 = vadd.f32 %v3600, %v3792
  %v3794 = vpop.f32.mrb[0].mxu0
  %v3795 = vpop.f32.mrb[0].mxu0
  %v3796 = vadd.f32 %v3601, %v3795
  %v3797 = vpop.f32.mrb[0].mxu0
  %3798 = vmatprep.mubr.bf16.mxu0 0
  %3799 = vmatmul.mubr.bf16.gmra.mrb[0].mxu0 %v3556
  %v3800 = vpop.f32.mrb[0].mxu0
  %v3801 = vadd.f32 %v3602, %v3800
  %v3802 = vpop.f32.mrb[0].mxu0
  %v3803 = vpop.f32.mrb[0].mxu0
  %v3804 = vadd.f32 %v3603, %v3803
  %v3805 = vpop.f32.mrb[0].mxu0
  %3806 = vmatprep.mubr.bf16.mxu0 0
  %3807 = vmatmul.mubr.bf16.gmra.mrb[0].mxu0 %v3557
  %v3808 = vpop.f32.mrb[0].mxu0
  %v3809 = vadd.f32 %v3604, %v3808
  %v3810 = vpop.f32.mrb[0].mxu0
  %v3811 = vpop.f32.mrb[0].mxu0
  %v3812 = vadd.f32 %v3605, %v3811
  %v3813 = vpop.f32.mrb[0].mxu0
  %3814 = vdwg.mxu0
  %s3815 = scalar_lea.vmem %s3, 8
  %3816 = vst [vmem:[%s3815] sm:$0xff] %v3689
  %3817 = vst [vmem:[%s3815 + $0x10] sm:$0xff] %v3692
  %3818 = vst [vmem:[%s3815 + $0x20] sm:$0xff] %v3697
  %3819 = vst [vmem:[%s3815 + $0x30] sm:$0xff] %v3700
  %3820 = vst [vmem:[%s3815 + $0x40] sm:$0xff] %v3705
  %3821 = vst [vmem:[%s3815 + $0x50] sm:$0xff] %v3708
  %3822 = vst [vmem:[%s3815 + $0x60] sm:$0xff] %v3713
  %3823 = vst [vmem:[%s3815 + $0x70] sm:$0xff] %v3716
  %3824 = vst [vmem:[%s3815 + $0x80] sm:$0xff] %v3721
  %3825 = vst [vmem:[%s3815 + $0x90] sm:$0xff] %v3724
  %3826 = vst [vmem:[%s3815 + $0xa0] sm:$0xff] %v3729
  %3827 = vst [vmem:[%s3815 + $0xb0] sm:$0xff] %v3732
  %3828 = vst [vmem:[%s3815 + $0xc0] sm:$0xff] %v3737
  %3829 = vst [vmem:[%s3815 + $0xd0] sm:$0xff] %v3740
  %3830 = vst [vmem:[%s3815 + $0xe0] sm:$0xff] %v3745
  %3831 = vst [vmem:[%s3815 + $0xf0] sm:$0xff] %v3748
  %3832 = vst [vmem:[%s3815 + $0x100] sm:$0xff] %v3753
  %3833 = vst [vmem:[%s3815 + $0x110] sm:$0xff] %v3756
  %3834 = vst [vmem:[%s3815 + $0x120] sm:$0xff] %v3761
  %3835 = vst [vmem:[%s3815 + $0x130] sm:$0xff] %v3764
  %3836 = vst [vmem:[%s3815 + $0x140] sm:$0xff] %v3769
  %3837 = vst [vmem:[%s3815 + $0x150] sm:$0xff] %v3772
  %3838 = vst [vmem:[%s3815 + $0x160] sm:$0xff] %v3777
  %3839 = vst [vmem:[%s3815 + $0x170] sm:$0xff] %v3780
  %3840 = vst [vmem:[%s3815 + $0x180] sm:$0xff] %v3785
  %3841 = vst [vmem:[%s3815 + $0x190] sm:$0xff] %v3788
  %3842 = vst [vmem:[%s3815 + $0x1a0] sm:$0xff] %v3793
  %3843 = vst [vmem:[%s3815 + $0x1b0] sm:$0xff] %v3796
  %3844 = vst [vmem:[%s3815 + $0x1c0] sm:$0xff] %v3801
  %3845 = vst [vmem:[%s3815 + $0x1d0] sm:$0xff] %v3804
  %3846 = vst [vmem:[%s3815 + $0x1e0] sm:$0xff] %v3809
  %3847 = vst [vmem:[%s3815 + $0x1f0] sm:$0xff] %v3812
  // Predicated region
  $region14: #{nonlocal_rl.1} parent=0 // pred_check
    _
  $region15: #{nonlocal_rl.1} parent=0 // pred_check_branch
    %3849 = sbr.rel (0) target = $region17
  $region16: #{nonlocal_rl.1} parent=0 // pred_region
    _
  $region17: #{nonlocal_rl.1} parent=0 // pred_fallthru
    _
  // Predicated region
  $region18: #{nonlocal_rl.1} parent=0 // pred_check
    _
  $region19: #{nonlocal_rl.1} parent=0 // pred_check_branch
    %3851 = sbr.rel (0) target = $region21
  $region20: #{nonlocal_rl.1} parent=0 // pred_region
    _
  $region21: #{nonlocal_rl.1} parent=0 // pred_fallthru
    _

</llo_original>
